<compile_context>
chip_gen: v7x
topology: tpu7x:2x2x1
jax: 0.10.0
libtpu: 0.0.40
codegen_flags: <defaults>
</compile_context>

<pallas_src>
import jax
import jax.numpy as jnp
from jax.experimental import pallas as pl
from jax.experimental.pallas import tpu as pltpu


def _regressor_kernel(x_ref,
                      w1_ref, b1_ref,
                      w2_ref, b2_ref,
                      w3_ref, b3_ref,
                      w4_ref, b4_ref,
                      w5_ref, b5_ref,
                      w6_ref, b6_ref,
                      o_ref):
    """Fused 6-layer MLP for one batch tile, everything resident in VMEM."""
    cdt = w1_ref.dtype  # MXU input dtype (bf16 by default, f32 allowed)

    h = x_ref[...].astype(cdt)  # (TB, 2E)

    # Hidden layers: MXU matmul (f32 accumulation) + bias (f32) + tanh (EUP, f32).
    for w_ref, b_ref in ((w1_ref, b1_ref), (w2_ref, b2_ref), (w3_ref, b3_ref),
                         (w4_ref, b4_ref), (w5_ref, b5_ref)):
        z = jnp.dot(h, w_ref[...], preferred_element_type=jnp.float32) + b_ref[...]
        h = jnp.tanh(z).astype(cdt)

    # Final (E -> 1) projection: broadcast multiply (VPU) + cross-lane reduce (XLU)
    # instead of an N=1 MXU pass; store lane-dense as a (1, tile_b) row.
    h32 = h.astype(jnp.float32)
    row = jnp.sum(h32 * w6_ref[...], axis=-1)            # (TB,)
    o_ref[...] = (row[None, :] + b6_ref[...]).astype(o_ref.dtype)


def regressor_forward(x, params, *, tile_b=256, matmul_dtype=jnp.bfloat16):
    """x: (B, 2*E) float32. params: list of (W, b) with W stored as (in, out)."""
    B, two_e = x.shape
    E = two_e // 2
    assert two_e == 2 * E

    (w1, b1), (w2, b2), (w3, b3), (w4, b4), (w5, b5), (w6, b6) = params

    # --- batch tile choice ---------------------------------------------------
    LANES = 128
    tile_b = max(LANES, (int(tile_b) // LANES) * LANES)       # lane-dense output rows
    if B >= 2 * LANES:
        # keep >= 2 grid steps when the batch allows (v7x megacore sharding)
        tile_b = min(tile_b, max(LANES, (B // 2 // LANES) * LANES))
    n_tiles = pl.cdiv(B, tile_b)
    B_pad = n_tiles * tile_b
    if B_pad != B:
        x = jnp.pad(x, ((0, B_pad - B), (0, 0)))

    # --- parameter preparation ----------------------------------------------
    # Hidden weights go to the MXU in bf16 (f32 accumulate); biases stay f32.
    w1, w2, w3, w4, w5 = (w.astype(matmul_dtype) for w in (w1, w2, w3, w4, w5))
    # Final projection as a lane-dense (1, E) row for the VPU/XLU reduce.
    w6_row = w6.reshape(1, E).astype(jnp.float32)
    b6 = b6.reshape(1, 1).astype(jnp.float32)

    def full_spec(arr):
        return pl.BlockSpec(arr.shape, lambda i: (0, 0))

    in_specs = [
        pl.BlockSpec((tile_b, 2 * E), lambda i: (i, 0)),   # x tile
        full_spec(w1), full_spec(b1),
        full_spec(w2), full_spec(b2),
        full_spec(w3), full_spec(b3),
        full_spec(w4), full_spec(b4),
        full_spec(w5), full_spec(b5),
        full_spec(w6_row), full_spec(b6),
    ]
    # Lane-dense output: (1, B_pad) with one (1, tile_b) row block per grid step.
    out_specs = pl.BlockSpec((1, tile_b), lambda i: (0, i))

    # --- explicit VMEM budget (default scoped limit is 16/32 MiB) ------------
    weight_bytes = sum(int(a.size) * a.dtype.itemsize
                       for a in (w1, b1, w2, b2, w3, b3, w4, b4, w5, b5, w6_row, b6))
    x_tile_bytes = tile_b * 2 * E * 4
    act_bytes = tile_b * E * 4
    vmem_need = (2 * x_tile_bytes + 2 * weight_bytes + 8 * act_bytes
                 + 2 * tile_b * 4 + (4 << 20))
    vmem_limit = int(min(max(vmem_need, 32 << 20), 64 << 20))

    out = pl.pallas_call(
        _regressor_kernel,
        out_shape=jax.ShapeDtypeStruct((1, B_pad), jnp.float32),
        grid_spec=pltpu.PrefetchScalarGridSpec(
            num_scalar_prefetch=0,
            grid=(n_tiles,),
            in_specs=in_specs,
            out_specs=out_specs,
        ),
        compiler_params=pltpu.CompilerParams(
            dimension_semantics=("parallel",),
            vmem_limit_bytes=vmem_limit,
        ),
    )(x, w1, b1, w2, b2, w3, b3, w4, b4, w5, b5, w6_row, b6)

    # torch .squeeze(): (B, 1) -> (B,)
    return out[0, :B]


def init_params(key, emsize):
    """Deterministic init matching torch: weight ~ U(-0.1, 0.1), bias = 0.
    Weights are stored as (in_features, out_features)."""
    initrange = 0.1
    dims = [(2 * emsize, emsize),
            (emsize, emsize),
            (emsize, emsize),
            (emsize, emsize),
            (emsize, emsize),
            (emsize, 1)]
    params = []
    for (din, dout) in dims:
        key, sub = jax.random.split(key)
        w = jax.random.uniform(sub, (din, dout), dtype=jnp.float32,
                               minval=-initrange, maxval=initrange)
        b = jnp.zeros((1, dout), dtype=jnp.float32)
        params.append((w, b))
    return params


def reference_forward_matched(x, params, matmul_dtype=jnp.bfloat16):
    """Pure-JAX reference using the same dtype strategy as the kernel."""
    w6, b6 = params[-1]
    h = x.astype(matmul_dtype)
    for w, b in params[:-1]:
        z = jnp.dot(h, w.astype(matmul_dtype),
                    preferred_element_type=jnp.float32) + b
        h = jnp.tanh(z).astype(matmul_dtype)
    out = jnp.sum(h.astype(jnp.float32) * w6.reshape(1, -1), axis=-1) + b6.reshape(())
    return out


def reference_forward_f32(x, params):
    """Pure f32 reference (exact PyTorch math, eval mode)."""
    h = x
    for i, (w, b) in enumerate(params):
        h = h @ w + b
        if i < len(params) - 1:
            h = jnp.tanh(h)
    return jnp.squeeze(h, axis=-1)


if __name__ == "__main__":
    emsize = 128       # small, lane-aligned version of the default 512
    batch = 512

    key = jax.random.PRNGKey(0)
    key, xkey = jax.random.split(key)
    x = jax.random.normal(xkey, (batch, 2 * emsize), dtype=jnp.float32)

    params = init_params(key, emsize)

    out = regressor_forward(x, params, tile_b=256)
    out = jax.block_until_ready(out)
    assert out.shape == (batch,)

    ref_m = reference_forward_matched(x, params)
    ref_f = reference_forward_f32(x, params)
    assert jnp.allclose(out, ref_m, atol=5e-3, rtol=5e-3), "mismatch vs matched ref"
    assert jnp.allclose(out, ref_f, atol=5e-2, rtol=5e-2), "mismatch vs f32 ref"

    # Second call exercising the padding path (batch not a multiple of the tile).
    x2 = jax.random.normal(jax.random.PRNGKey(3), (100, 2 * emsize), dtype=jnp.float32)
    out2 = jax.block_until_ready(regressor_forward(x2, params, tile_b=256))
    assert out2.shape == (100,)
    assert jnp.allclose(out2, reference_forward_matched(x2, params), atol=5e-3, rtol=5e-3)

    print("KERNEL_OK")
</pallas_src>

<mosaic_0001>
module attributes {stable_mosaic.version = 11 : i64} {
  func.func @_regressor_kernel(%arg0: i32, %arg1: memref<256x256xf32, #tpu.memory_space<vmem>>, %arg2: memref<256x128xbf16, #tpu.memory_space<vmem>>, %arg3: memref<1x128xf32, #tpu.memory_space<vmem>>, %arg4: memref<128x128xbf16, #tpu.memory_space<vmem>>, %arg5: memref<1x128xf32, #tpu.memory_space<vmem>>, %arg6: memref<128x128xbf16, #tpu.memory_space<vmem>>, %arg7: memref<1x128xf32, #tpu.memory_space<vmem>>, %arg8: memref<128x128xbf16, #tpu.memory_space<vmem>>, %arg9: memref<1x128xf32, #tpu.memory_space<vmem>>, %arg10: memref<128x128xbf16, #tpu.memory_space<vmem>>, %arg11: memref<1x128xf32, #tpu.memory_space<vmem>>, %arg12: memref<1x128xf32, #tpu.memory_space<vmem>>, %arg13: memref<1x1xf32, #tpu.memory_space<vmem>>, %arg14: memref<1x256xf32, #tpu.memory_space<vmem>>) attributes {dimension_semantics = [#tpu.dimension_semantics<parallel>], iteration_bounds = array<i64: 2>, scalar_prefetch = 0 : i64, scratch_operands = 0 : i64, tpu.core_type = #tpu.core_type<tc>, window_params = [{transform_indices = @transform_0, window_bounds = array<i64: 256, 256>}, {pipeline_mode = #tpu.pipeline_mode<synchronous>, transform_indices = @transform_1, window_bounds = array<i64: 256, 128>}, {pipeline_mode = #tpu.pipeline_mode<synchronous>, transform_indices = @transform_2, window_bounds = array<i64: 1, 128>}, {pipeline_mode = #tpu.pipeline_mode<synchronous>, transform_indices = @transform_3, window_bounds = array<i64: 128, 128>}, {pipeline_mode = #tpu.pipeline_mode<synchronous>, transform_indices = @transform_4, window_bounds = array<i64: 1, 128>}, {pipeline_mode = #tpu.pipeline_mode<synchronous>, transform_indices = @transform_5, window_bounds = array<i64: 128, 128>}, {pipeline_mode = #tpu.pipeline_mode<synchronous>, transform_indices = @transform_6, window_bounds = array<i64: 1, 128>}, {pipeline_mode = #tpu.pipeline_mode<synchronous>, transform_indices = @transform_7, window_bounds = array<i64: 128, 128>}, {pipeline_mode = #tpu.pipeline_mode<synchronous>, transform_indices = @transform_8, window_bounds = array<i64: 1, 128>}, {pipeline_mode = #tpu.pipeline_mode<synchronous>, transform_indices = @transform_9, window_bounds = array<i64: 128, 128>}, {pipeline_mode = #tpu.pipeline_mode<synchronous>, transform_indices = @transform_10, window_bounds = array<i64: 1, 128>}, {pipeline_mode = #tpu.pipeline_mode<synchronous>, transform_indices = @transform_11, window_bounds = array<i64: 1, 128>}, {pipeline_mode = #tpu.pipeline_mode<synchronous>, transform_indices = @transform_12, window_bounds = array<i64: 1, 1>}, {transform_indices = @transform_13, window_bounds = array<i64: 1, 256>}]} {
    %c0 = arith.constant 0 : index
    %c0_0 = arith.constant 0 : index
    %0 = vector.load %arg1[%c0, %c0_0] : memref<256x256xf32, #tpu.memory_space<vmem>>, vector<256x256xf32>
    %1 = arith.truncf %0 : vector<256x256xf32> to vector<256x256xbf16>
    %c0_1 = arith.constant 0 : index
    %c0_2 = arith.constant 0 : index
    %2 = vector.load %arg2[%c0_1, %c0_2] : memref<256x128xbf16, #tpu.memory_space<vmem>>, vector<256x128xbf16>
    %cst = arith.constant dense<0.000000e+00> : vector<256x128xf32>
    %3 = tpu.matmul %1, %2, %cst {dimension_numbers = #tpu.dot_dimension_numbers<[1], [0], [0], [1], [0, 0, 1, 1], [], []>} : vector<256x256xbf16>, vector<256x128xbf16>, vector<256x128xf32> -> vector<256x128xf32>
    %c0_3 = arith.constant 0 : index
    %c0_4 = arith.constant 0 : index
    %4 = vector.load %arg3[%c0_3, %c0_4] : memref<1x128xf32, #tpu.memory_space<vmem>>, vector<1x128xf32>
    %5 = vector.broadcast %4 : vector<1x128xf32> to vector<256x128xf32>
    %6 = arith.addf %3, %5 : vector<256x128xf32>
    %7 = math.tanh %6 : vector<256x128xf32>
    %8 = arith.truncf %7 : vector<256x128xf32> to vector<256x128xbf16>
    %c0_5 = arith.constant 0 : index
    %c0_6 = arith.constant 0 : index
    %9 = vector.load %arg4[%c0_5, %c0_6] : memref<128x128xbf16, #tpu.memory_space<vmem>>, vector<128x128xbf16>
    %cst_7 = arith.constant dense<0.000000e+00> : vector<256x128xf32>
    %10 = tpu.matmul %8, %9, %cst_7 {dimension_numbers = #tpu.dot_dimension_numbers<[1], [0], [0], [1], [0, 0, 1, 1], [], []>} : vector<256x128xbf16>, vector<128x128xbf16>, vector<256x128xf32> -> vector<256x128xf32>
    %c0_8 = arith.constant 0 : index
    %c0_9 = arith.constant 0 : index
    %11 = vector.load %arg5[%c0_8, %c0_9] : memref<1x128xf32, #tpu.memory_space<vmem>>, vector<1x128xf32>
    %12 = vector.broadcast %11 : vector<1x128xf32> to vector<256x128xf32>
    %13 = arith.addf %10, %12 : vector<256x128xf32>
    %14 = math.tanh %13 : vector<256x128xf32>
    %15 = arith.truncf %14 : vector<256x128xf32> to vector<256x128xbf16>
    %c0_10 = arith.constant 0 : index
    %c0_11 = arith.constant 0 : index
    %16 = vector.load %arg6[%c0_10, %c0_11] : memref<128x128xbf16, #tpu.memory_space<vmem>>, vector<128x128xbf16>
    %cst_12 = arith.constant dense<0.000000e+00> : vector<256x128xf32>
    %17 = tpu.matmul %15, %16, %cst_12 {dimension_numbers = #tpu.dot_dimension_numbers<[1], [0], [0], [1], [0, 0, 1, 1], [], []>} : vector<256x128xbf16>, vector<128x128xbf16>, vector<256x128xf32> -> vector<256x128xf32>
    %c0_13 = arith.constant 0 : index
    %c0_14 = arith.constant 0 : index
    %18 = vector.load %arg7[%c0_13, %c0_14] : memref<1x128xf32, #tpu.memory_space<vmem>>, vector<1x128xf32>
    %19 = vector.broadcast %18 : vector<1x128xf32> to vector<256x128xf32>
    %20 = arith.addf %17, %19 : vector<256x128xf32>
    %21 = math.tanh %20 : vector<256x128xf32>
    %22 = arith.truncf %21 : vector<256x128xf32> to vector<256x128xbf16>
    %c0_15 = arith.constant 0 : index
    %c0_16 = arith.constant 0 : index
    %23 = vector.load %arg8[%c0_15, %c0_16] : memref<128x128xbf16, #tpu.memory_space<vmem>>, vector<128x128xbf16>
    %cst_17 = arith.constant dense<0.000000e+00> : vector<256x128xf32>
    %24 = tpu.matmul %22, %23, %cst_17 {dimension_numbers = #tpu.dot_dimension_numbers<[1], [0], [0], [1], [0, 0, 1, 1], [], []>} : vector<256x128xbf16>, vector<128x128xbf16>, vector<256x128xf32> -> vector<256x128xf32>
    %c0_18 = arith.constant 0 : index
    %c0_19 = arith.constant 0 : index
    %25 = vector.load %arg9[%c0_18, %c0_19] : memref<1x128xf32, #tpu.memory_space<vmem>>, vector<1x128xf32>
    %26 = vector.broadcast %25 : vector<1x128xf32> to vector<256x128xf32>
    %27 = arith.addf %24, %26 : vector<256x128xf32>
    %28 = math.tanh %27 : vector<256x128xf32>
    %29 = arith.truncf %28 : vector<256x128xf32> to vector<256x128xbf16>
    %c0_20 = arith.constant 0 : index
    %c0_21 = arith.constant 0 : index
    %30 = vector.load %arg10[%c0_20, %c0_21] : memref<128x128xbf16, #tpu.memory_space<vmem>>, vector<128x128xbf16>
    %cst_22 = arith.constant dense<0.000000e+00> : vector<256x128xf32>
    %31 = tpu.matmul %29, %30, %cst_22 {dimension_numbers = #tpu.dot_dimension_numbers<[1], [0], [0], [1], [0, 0, 1, 1], [], []>} : vector<256x128xbf16>, vector<128x128xbf16>, vector<256x128xf32> -> vector<256x128xf32>
    %c0_23 = arith.constant 0 : index
    %c0_24 = arith.constant 0 : index
    %32 = vector.load %arg11[%c0_23, %c0_24] : memref<1x128xf32, #tpu.memory_space<vmem>>, vector<1x128xf32>
    %33 = vector.broadcast %32 : vector<1x128xf32> to vector<256x128xf32>
    %34 = arith.addf %31, %33 : vector<256x128xf32>
    %35 = math.tanh %34 : vector<256x128xf32>
    %36 = arith.truncf %35 : vector<256x128xf32> to vector<256x128xbf16>
    %37 = arith.extf %36 : vector<256x128xbf16> to vector<256x128xf32>
    %c0_25 = arith.constant 0 : index
    %c0_26 = arith.constant 0 : index
    %38 = vector.load %arg12[%c0_25, %c0_26] : memref<1x128xf32, #tpu.memory_space<vmem>>, vector<1x128xf32>
    %39 = vector.broadcast %38 : vector<1x128xf32> to vector<256x128xf32>
    %40 = arith.mulf %37, %39 : vector<256x128xf32>
    %cst_27 = arith.constant dense<0.000000e+00> : vector<256xf32>
    %41 = vector.multi_reduction <add>, %40, %cst_27 [1] : vector<256x128xf32> to vector<256xf32>
    %42 = vector.shape_cast %41 : vector<256xf32> to vector<1x256xf32>
    %c0_28 = arith.constant 0 : index
    %c0_29 = arith.constant 0 : index
    %43 = vector.load %arg13[%c0_28, %c0_29] : memref<1x1xf32, #tpu.memory_space<vmem>>, vector<1x1xf32>
    %44 = vector.broadcast %43 : vector<1x1xf32> to vector<1x256xf32>
    %45 = arith.addf %42, %44 : vector<1x256xf32>
    %c0_30 = arith.constant 0 : index
    %c0_31 = arith.constant 0 : index
    %46 = vector.load %arg14[%c0_30, %c0_31] : memref<1x256xf32, #tpu.memory_space<vmem>>, vector<1x256xf32>
    tpu.vector_store %arg14[%c0_30, %c0_31], %45 {strides = array<i32>} : memref<1x256xf32, #tpu.memory_space<vmem>>, vector<1x256xf32>,
    return
  }
  func.func @transform_0(%arg0: i32) -> (i32, i32) {
    %c0_i32 = arith.constant 0 : i32
    %c0_i32_0 = arith.constant 0 : i32
    return %arg0, %c0_i32 : i32, i32
  }
  func.func @transform_1(%arg0: i32) -> (i32, i32) {
    %c0_i32 = arith.constant 0 : i32
    %c0_i32_0 = arith.constant 0 : i32
    %c0_i32_1 = arith.constant 0 : i32
    return %c0_i32, %c0_i32_0 : i32, i32
  }
  func.func @transform_2(%arg0: i32) -> (i32, i32) {
    %c0_i32 = arith.constant 0 : i32
    %c0_i32_0 = arith.constant 0 : i32
    %c0_i32_1 = arith.constant 0 : i32
    return %c0_i32, %c0_i32_0 : i32, i32
  }
  func.func @transform_3(%arg0: i32) -> (i32, i32) {
    %c0_i32 = arith.constant 0 : i32
    %c0_i32_0 = arith.constant 0 : i32
    %c0_i32_1 = arith.constant 0 : i32
    return %c0_i32, %c0_i32_0 : i32, i32
  }
  func.func @transform_4(%arg0: i32) -> (i32, i32) {
    %c0_i32 = arith.constant 0 : i32
    %c0_i32_0 = arith.constant 0 : i32
    %c0_i32_1 = arith.constant 0 : i32
    return %c0_i32, %c0_i32_0 : i32, i32
  }
  func.func @transform_5(%arg0: i32) -> (i32, i32) {
    %c0_i32 = arith.constant 0 : i32
    %c0_i32_0 = arith.constant 0 : i32
    %c0_i32_1 = arith.constant 0 : i32
    return %c0_i32, %c0_i32_0 : i32, i32
  }
  func.func @transform_6(%arg0: i32) -> (i32, i32) {
    %c0_i32 = arith.constant 0 : i32
    %c0_i32_0 = arith.constant 0 : i32
    %c0_i32_1 = arith.constant 0 : i32
    return %c0_i32, %c0_i32_0 : i32, i32
  }
  func.func @transform_7(%arg0: i32) -> (i32, i32) {
    %c0_i32 = arith.constant 0 : i32
    %c0_i32_0 = arith.constant 0 : i32
    %c0_i32_1 = arith.constant 0 : i32
    return %c0_i32, %c0_i32_0 : i32, i32
  }
  func.func @transform_8(%arg0: i32) -> (i32, i32) {
    %c0_i32 = arith.constant 0 : i32
    %c0_i32_0 = arith.constant 0 : i32
    %c0_i32_1 = arith.constant 0 : i32
    return %c0_i32, %c0_i32_0 : i32, i32
  }
  func.func @transform_9(%arg0: i32) -> (i32, i32) {
    %c0_i32 = arith.constant 0 : i32
    %c0_i32_0 = arith.constant 0 : i32
    %c0_i32_1 = arith.constant 0 : i32
    return %c0_i32, %c0_i32_0 : i32, i32
  }
  func.func @transform_10(%arg0: i32) -> (i32, i32) {
    %c0_i32 = arith.constant 0 : i32
    %c0_i32_0 = arith.constant 0 : i32
    %c0_i32_1 = arith.constant 0 : i32
    return %c0_i32, %c0_i32_0 : i32, i32
  }
  func.func @transform_11(%arg0: i32) -> (i32, i32) {
    %c0_i32 = arith.constant 0 : i32
    %c0_i32_0 = arith.constant 0 : i32
    %c0_i32_1 = arith.constant 0 : i32
    return %c0_i32, %c0_i32_0 : i32, i32
  }
  func.func @transform_12(%arg0: i32) -> (i32, i32) {
    %c0_i32 = arith.constant 0 : i32
    %c0_i32_0 = arith.constant 0 : i32
    %c0_i32_1 = arith.constant 0 : i32
    return %c0_i32, %c0_i32_0 : i32, i32
  }
  func.func @transform_13(%arg0: i32) -> (i32, i32) {
    %c0_i32 = arith.constant 0 : i32
    %c0_i32_0 = arith.constant 0 : i32
    return %c0_i32, %arg0 : i32, i32
  }
}

</mosaic_0001>

<llo_original>
// kernel: tpu_custom_call.1
$region0: #{tpu_custom_call.1}
  #allocation0 [shape = 'u32[]', space=smem, size = 0x4, offset = 0x4, fixed_abs, tag = 'smem constant byte address 0x4 - core index']
  #allocation1 [shape = 'u32[144,128]{1,0:T(1,128)}', space=vmem, size = 0x12000, scoped, tag = 'internal scratch']
  #allocation2 [shape = 'f32[1,1]{1,0:T(1,128)S(1)}', space=vmem, size = 0x200, scoped, tag = 'scoped memory for tpu_custom_call.1']
  %s0 = inlined_call_operand.hbm [shape: f32[512,256], index: 0, kind: input, shape index: {}]
  %s1 = inlined_call_operand.hbm [shape: bf16[256,128], index: 1, kind: input, shape index: {}]
  %s2 = inlined_call_operand.vmem [shape: f32[1,128], index: 2, kind: input, shape index: {}]
  %s3 = inlined_call_operand.hbm [shape: bf16[128,128], index: 3, kind: input, shape index: {}]
  %s4 = inlined_call_operand.vmem [shape: f32[1,128], index: 4, kind: input, shape index: {}]
  %s5 = inlined_call_operand.hbm [shape: bf16[128,128], index: 5, kind: input, shape index: {}]
  %s6 = inlined_call_operand.vmem [shape: f32[1,128], index: 6, kind: input, shape index: {}]
  %s7 = inlined_call_operand.hbm [shape: bf16[128,128], index: 7, kind: input, shape index: {}]
  %s8 = inlined_call_operand.vmem [shape: f32[1,128], index: 8, kind: input, shape index: {}]
  %s9 = inlined_call_operand.hbm [shape: bf16[128,128], index: 9, kind: input, shape index: {}]
  %s10 = inlined_call_operand.vmem [shape: f32[1,128], index: 10, kind: input, shape index: {}]
  %s11 = inlined_call_operand.vmem [shape: f32[1,128], index: 11, kind: input, shape index: {}]
  %s12 = inlined_call_operand.<no memory space> [shape: f32[1,1], index: 12, kind: input, shape index: {}]
  %s13 = inlined_call_operand.hbm [shape: f32[1,512], index: 13, kind: output, shape index: {}]
  %s14 = sld [smem:[#allocation0]]
  $region109: #{tpu_custom_call.1} parent=0
    _
  %s16 = ssub.s32 1, %s14
  %s17 = scalar_select 0, %s16, %s14
  %v18 = vstv %s12
  %19 = vst [vmem:[#allocation2] sm:$0x1] %v18
  $region1: #{tpu_custom_call.1} parent=0
    #allocation3 [shape = 'u8[524288]{0}', space=vmem, size = 0x80000, scoped, tag = 'input window, operand 0']
    #allocation4 [shape = 's32[2]{0}', space=sflag, size = 0x8, scoped, tag = 'scoped memory for tpu_custom_call.1']
    #allocation5 [shape = 's32[2]{0}', space=sflag, size = 0x8, scoped, tag = 'scoped memory for tpu_custom_call.1']
    #allocation6 [shape = 'u8[65536]{0}', space=vmem, size = 0x10000, scoped, tag = 'input window, operand 1, single buffered']
    #allocation7 [shape = 's32[1]{0}', space=sflag, size = 0x4, scoped, tag = 'scoped memory for tpu_custom_call.1']
    #allocation8 [shape = 'u8[32768]{0}', space=vmem, size = 0x8000, scoped, tag = 'input window, operand 3, single buffered']
    #allocation9 [shape = 'u8[32768]{0}', space=vmem, size = 0x8000, scoped, tag = 'input window, operand 5, single buffered']
    #allocation10 [shape = 's32[1]{0}', space=sflag, size = 0x4, scoped, tag = 'scoped memory for tpu_custom_call.1']
    #allocation11 [shape = 'u8[32768]{0}', space=vmem, size = 0x8000, scoped, tag = 'input window, operand 7, single buffered']
    #allocation12 [shape = 'u8[32768]{0}', space=vmem, size = 0x8000, scoped, tag = 'input window, operand 9, single buffered']
    #allocation13 [shape = 's32[1]{0}', space=sflag, size = 0x4, scoped, tag = 'scoped memory for tpu_custom_call.1']
    #allocation14 [shape = 'u8[2048]{0}', space=vmem, size = 0x800, scoped, tag = 'output window, operand 0']
    %20 = vsyncpa [#allocation4], 0
    %s21 = scalar_lea.sflag [#allocation4], 1
    %22 = vsyncpa %s21, 0
    %23 = vsyncpa [#allocation7], 0
    %24 = vsyncpa [#allocation10], 0
    %25 = vsyncpa [#allocation13], 0
    %26 = vsyncpa [#allocation5], 0
    %s27 = scalar_lea.sflag [#allocation5], 1
    %28 = vsyncpa %s27, 0
    loop: start=0, step=1, limit=4
    $region2: #{tpu_custom_call.1} parent=1 // loop_pre_header
      _
    $region3: #{tpu_custom_call.1} parent=1 // loop_header
      %s30 = sphi 0, %s34
      %p31 = scmp.ge.s32.totalorder %s30, 4
      %s40 = sphi 0, %s42
      %s43 = sphi 0, %s40
      %s44 = sphi 0, %s43
      %s60 = sphi 0, %s44
      %s64 = sphi 0, %s64
      %s66 = sphi 0, %s64
      %s67 = sphi 0, %s66
      %s81 = sphi 0, %s67
      %s85 = sphi 0, %s85
      %s87 = sphi 0, %s85
      %s88 = sphi 0, %s87
      %s102 = sphi 0, %s88
      %s106 = sphi 0, %s106
      %s108 = sphi 0, %s106
      %s109 = sphi 0, %s108
      %s123 = sphi 0, %s109
      %s127 = sphi 0, %s127
      %s129 = sphi 0, %s127
      %s130 = sphi 0, %s129
      %s144 = sphi 0, %s130
      %s148 = sphi 0, %s148
      %s150 = sphi 0, %s148
      %s151 = sphi 0, %s150
      %s165 = sphi 0, %s151
      %s169 = sphi 0, %s169
      %s171 = sphi 0, %s169
      %s172 = sphi 0, %s171
      %s186 = sphi 0, %s172
      %s190 = sphi 0, %s190
      %s192 = sphi 0, %s190
      %s193 = sphi 0, %s192
      %s207 = sphi 0, %s193
      %s211 = sphi 0, %s211
      %s213 = sphi 0, %s211
      %s214 = sphi 0, %s213
      %s228 = sphi 0, %s214
      %s232 = sphi 0, %s232
      %s234 = sphi 0, %s232
      %s235 = sphi 0, %s234
      %s249 = sphi 0, %s235
      %s253 = sphi 0, %s253
      %s255 = sphi 0, %s253
      %s256 = sphi 0, %s255
      %s270 = sphi 0, %s256
      %s274 = sphi 0, %s274
      %s276 = sphi 0, %s274
      %s277 = sphi 0, %s276
      %s291 = sphi 0, %s277
      %s295 = sphi 0, %s295
      %s297 = sphi 0, %s295
      %s298 = sphi 0, %s297
      %s312 = sphi 0, %s298
      %s318 = sphi 0, %s320
      %s321 = sphi 0, %s318
      %s322 = sphi 0, %s321
      %s338 = sphi 0, %s322
    $region4: #{tpu_custom_call.1} parent=1 // loop_header_branch
      %33 = sbr.rel (%p31) target = $region8
    $region5: #{tpu_custom_call.1} parent=1 // loop_body
      %s35 = ssub.s32 %s30, 1
      %s36 = ssub.s32 %s30, 2
      %s37 = sadd.s32 %s30, 1
      %s38 = ssub.s32 %s30, %s37
      %p39 = scmp.eq.s32.totalorder %s38, 0
      %s41 = sadd.s32 %s40, 1
      %s42 = scalar_select %p39, %s40, %s41
      %p45 = pneg %p39
      %p46 = scmp.eq.s32.totalorder %s30, 1
      %p47 = por %p45, %p46
      %p48 = scmp.ne.s32.totalorder %s40, %s43
      %p49 = scmp.eq.s32.totalorder %s30, 0
      %p50 = por %p48, %p49
      %p51 = scmp.ne.s32.totalorder %s40, %s43
      %p52 = scmp.eq.s32.totalorder %s35, 1
      %p53 = por %p51, %p52
      %p54 = scmp.ne.s32.totalorder %s43, %s44
      %p55 = scmp.eq.s32.totalorder %s35, 0
      %p56 = por %p54, %p55
      %p57 = scmp.ne.s32.totalorder %s43, %s44
      %p58 = scmp.eq.s32.totalorder %s36, 1
      %p59 = por %p57, %p58
      %p61 = scmp.ne.s32.totalorder %s44, %s60
      %p62 = scmp.eq.s32.totalorder %s36, 0
      %p63 = por %p61, %p62
      %s65 = sadd.s32 %s64, 1
      %p68 = scmp.eq.s32.totalorder %s30, 1
      %p69 = scmp.ne.s32.totalorder %s64, %s66
      %p70 = scmp.eq.s32.totalorder %s30, 0
      %p71 = por %p69, %p70
      %p72 = scmp.ne.s32.totalorder %s64, %s66
      %p73 = scmp.eq.s32.totalorder %s35, 1
      %p74 = por %p72, %p73
      %p75 = scmp.ne.s32.totalorder %s66, %s67
      %p76 = scmp.eq.s32.totalorder %s35, 0
      %p77 = por %p75, %p76
      %p78 = scmp.ne.s32.totalorder %s66, %s67
      %p79 = scmp.eq.s32.totalorder %s36, 1
      %p80 = por %p78, %p79
      %p82 = scmp.ne.s32.totalorder %s67, %s81
      %p83 = scmp.eq.s32.totalorder %s36, 0
      %p84 = por %p82, %p83
      %s86 = sadd.s32 %s85, 1
      %p89 = scmp.eq.s32.totalorder %s30, 1
      %p90 = scmp.ne.s32.totalorder %s85, %s87
      %p91 = scmp.eq.s32.totalorder %s30, 0
      %p92 = por %p90, %p91
      %p93 = scmp.ne.s32.totalorder %s85, %s87
      %p94 = scmp.eq.s32.totalorder %s35, 1
      %p95 = por %p93, %p94
      %p96 = scmp.ne.s32.totalorder %s87, %s88
      %p97 = scmp.eq.s32.totalorder %s35, 0
      %p98 = por %p96, %p97
      %p99 = scmp.ne.s32.totalorder %s87, %s88
      %p100 = scmp.eq.s32.totalorder %s36, 1
      %p101 = por %p99, %p100
      %p103 = scmp.ne.s32.totalorder %s88, %s102
      %p104 = scmp.eq.s32.totalorder %s36, 0
      %p105 = por %p103, %p104
      %s107 = sadd.s32 %s106, 1
      %p110 = scmp.eq.s32.totalorder %s30, 1
      %p111 = scmp.ne.s32.totalorder %s106, %s108
      %p112 = scmp.eq.s32.totalorder %s30, 0
      %p113 = por %p111, %p112
      %p114 = scmp.ne.s32.totalorder %s106, %s108
      %p115 = scmp.eq.s32.totalorder %s35, 1
      %p116 = por %p114, %p115
      %p117 = scmp.ne.s32.totalorder %s108, %s109
      %p118 = scmp.eq.s32.totalorder %s35, 0
      %p119 = por %p117, %p118
      %p120 = scmp.ne.s32.totalorder %s108, %s109
      %p121 = scmp.eq.s32.totalorder %s36, 1
      %p122 = por %p120, %p121
      %p124 = scmp.ne.s32.totalorder %s109, %s123
      %p125 = scmp.eq.s32.totalorder %s36, 0
      %p126 = por %p124, %p125
      %s128 = sadd.s32 %s127, 1
      %p131 = scmp.eq.s32.totalorder %s30, 1
      %p132 = scmp.ne.s32.totalorder %s127, %s129
      %p133 = scmp.eq.s32.totalorder %s30, 0
      %p134 = por %p132, %p133
      %p135 = scmp.ne.s32.totalorder %s127, %s129
      %p136 = scmp.eq.s32.totalorder %s35, 1
      %p137 = por %p135, %p136
      %p138 = scmp.ne.s32.totalorder %s129, %s130
      %p139 = scmp.eq.s32.totalorder %s35, 0
      %p140 = por %p138, %p139
      %p141 = scmp.ne.s32.totalorder %s129, %s130
      %p142 = scmp.eq.s32.totalorder %s36, 1
      %p143 = por %p141, %p142
      %p145 = scmp.ne.s32.totalorder %s130, %s144
      %p146 = scmp.eq.s32.totalorder %s36, 0
      %p147 = por %p145, %p146
      %s149 = sadd.s32 %s148, 1
      %p152 = scmp.eq.s32.totalorder %s30, 1
      %p153 = scmp.ne.s32.totalorder %s148, %s150
      %p154 = scmp.eq.s32.totalorder %s30, 0
      %p155 = por %p153, %p154
      %p156 = scmp.ne.s32.totalorder %s148, %s150
      %p157 = scmp.eq.s32.totalorder %s35, 1
      %p158 = por %p156, %p157
      %p159 = scmp.ne.s32.totalorder %s150, %s151
      %p160 = scmp.eq.s32.totalorder %s35, 0
      %p161 = por %p159, %p160
      %p162 = scmp.ne.s32.totalorder %s150, %s151
      %p163 = scmp.eq.s32.totalorder %s36, 1
      %p164 = por %p162, %p163
      %p166 = scmp.ne.s32.totalorder %s151, %s165
      %p167 = scmp.eq.s32.totalorder %s36, 0
      %p168 = por %p166, %p167
      %s170 = sadd.s32 %s169, 1
      %p173 = scmp.eq.s32.totalorder %s30, 1
      %p174 = scmp.ne.s32.totalorder %s169, %s171
      %p175 = scmp.eq.s32.totalorder %s30, 0
      %p176 = por %p174, %p175
      %p177 = scmp.ne.s32.totalorder %s169, %s171
      %p178 = scmp.eq.s32.totalorder %s35, 1
      %p179 = por %p177, %p178
      %p180 = scmp.ne.s32.totalorder %s171, %s172
      %p181 = scmp.eq.s32.totalorder %s35, 0
      %p182 = por %p180, %p181
      %p183 = scmp.ne.s32.totalorder %s171, %s172
      %p184 = scmp.eq.s32.totalorder %s36, 1
      %p185 = por %p183, %p184
      %p187 = scmp.ne.s32.totalorder %s172, %s186
      %p188 = scmp.eq.s32.totalorder %s36, 0
      %p189 = por %p187, %p188
      %s191 = sadd.s32 %s190, 1
      %p194 = scmp.eq.s32.totalorder %s30, 1
      %p195 = scmp.ne.s32.totalorder %s190, %s192
      %p196 = scmp.eq.s32.totalorder %s30, 0
      %p197 = por %p195, %p196
      %p198 = scmp.ne.s32.totalorder %s190, %s192
      %p199 = scmp.eq.s32.totalorder %s35, 1
      %p200 = por %p198, %p199
      %p201 = scmp.ne.s32.totalorder %s192, %s193
      %p202 = scmp.eq.s32.totalorder %s35, 0
      %p203 = por %p201, %p202
      %p204 = scmp.ne.s32.totalorder %s192, %s193
      %p205 = scmp.eq.s32.totalorder %s36, 1
      %p206 = por %p204, %p205
      %p208 = scmp.ne.s32.totalorder %s193, %s207
      %p209 = scmp.eq.s32.totalorder %s36, 0
      %p210 = por %p208, %p209
      %s212 = sadd.s32 %s211, 1
      %p215 = scmp.eq.s32.totalorder %s30, 1
      %p216 = scmp.ne.s32.totalorder %s211, %s213
      %p217 = scmp.eq.s32.totalorder %s30, 0
      %p218 = por %p216, %p217
      %p219 = scmp.ne.s32.totalorder %s211, %s213
      %p220 = scmp.eq.s32.totalorder %s35, 1
      %p221 = por %p219, %p220
      %p222 = scmp.ne.s32.totalorder %s213, %s214
      %p223 = scmp.eq.s32.totalorder %s35, 0
      %p224 = por %p222, %p223
      %p225 = scmp.ne.s32.totalorder %s213, %s214
      %p226 = scmp.eq.s32.totalorder %s36, 1
      %p227 = por %p225, %p226
      %p229 = scmp.ne.s32.totalorder %s214, %s228
      %p230 = scmp.eq.s32.totalorder %s36, 0
      %p231 = por %p229, %p230
      %s233 = sadd.s32 %s232, 1
      %p236 = scmp.eq.s32.totalorder %s30, 1
      %p237 = scmp.ne.s32.totalorder %s232, %s234
      %p238 = scmp.eq.s32.totalorder %s30, 0
      %p239 = por %p237, %p238
      %p240 = scmp.ne.s32.totalorder %s232, %s234
      %p241 = scmp.eq.s32.totalorder %s35, 1
      %p242 = por %p240, %p241
      %p243 = scmp.ne.s32.totalorder %s234, %s235
      %p244 = scmp.eq.s32.totalorder %s35, 0
      %p245 = por %p243, %p244
      %p246 = scmp.ne.s32.totalorder %s234, %s235
      %p247 = scmp.eq.s32.totalorder %s36, 1
      %p248 = por %p246, %p247
      %p250 = scmp.ne.s32.totalorder %s235, %s249
      %p251 = scmp.eq.s32.totalorder %s36, 0
      %p252 = por %p250, %p251
      %s254 = sadd.s32 %s253, 1
      %p257 = scmp.eq.s32.totalorder %s30, 1
      %p258 = scmp.ne.s32.totalorder %s253, %s255
      %p259 = scmp.eq.s32.totalorder %s30, 0
      %p260 = por %p258, %p259
      %p261 = scmp.ne.s32.totalorder %s253, %s255
      %p262 = scmp.eq.s32.totalorder %s35, 1
      %p263 = por %p261, %p262
      %p264 = scmp.ne.s32.totalorder %s255, %s256
      %p265 = scmp.eq.s32.totalorder %s35, 0
      %p266 = por %p264, %p265
      %p267 = scmp.ne.s32.totalorder %s255, %s256
      %p268 = scmp.eq.s32.totalorder %s36, 1
      %p269 = por %p267, %p268
      %p271 = scmp.ne.s32.totalorder %s256, %s270
      %p272 = scmp.eq.s32.totalorder %s36, 0
      %p273 = por %p271, %p272
      %s275 = sadd.s32 %s274, 1
      %p278 = scmp.eq.s32.totalorder %s30, 1
      %p279 = scmp.ne.s32.totalorder %s274, %s276
      %p280 = scmp.eq.s32.totalorder %s30, 0
      %p281 = por %p279, %p280
      %p282 = scmp.ne.s32.totalorder %s274, %s276
      %p283 = scmp.eq.s32.totalorder %s35, 1
      %p284 = por %p282, %p283
      %p285 = scmp.ne.s32.totalorder %s276, %s277
      %p286 = scmp.eq.s32.totalorder %s35, 0
      %p287 = por %p285, %p286
      %p288 = scmp.ne.s32.totalorder %s276, %s277
      %p289 = scmp.eq.s32.totalorder %s36, 1
      %p290 = por %p288, %p289
      %p292 = scmp.ne.s32.totalorder %s277, %s291
      %p293 = scmp.eq.s32.totalorder %s36, 0
      %p294 = por %p292, %p293
      %s296 = sadd.s32 %s295, 1
      %p299 = scmp.eq.s32.totalorder %s30, 1
      %p300 = scmp.ne.s32.totalorder %s295, %s297
      %p301 = scmp.eq.s32.totalorder %s30, 0
      %p302 = por %p300, %p301
      %p303 = scmp.ne.s32.totalorder %s295, %s297
      %p304 = scmp.eq.s32.totalorder %s35, 1
      %p305 = por %p303, %p304
      %p306 = scmp.ne.s32.totalorder %s297, %s298
      %p307 = scmp.eq.s32.totalorder %s35, 0
      %p308 = por %p306, %p307
      %p309 = scmp.ne.s32.totalorder %s297, %s298
      %p310 = scmp.eq.s32.totalorder %s36, 1
      %p311 = por %p309, %p310
      %p313 = scmp.ne.s32.totalorder %s298, %s312
      %p314 = scmp.eq.s32.totalorder %s36, 0
      %p315 = por %p313, %p314
      %s316 = ssub.s32 %s30, %s37
      %p317 = scmp.eq.s32.totalorder %s316, 0
      %s319 = sadd.s32 %s318, 1
      %s320 = scalar_select %p317, %s318, %s319
      %p323 = pneg %p317
      %p324 = scmp.eq.s32.totalorder %s30, 1
      %p325 = por %p323, %p324
      %p326 = scmp.ne.s32.totalorder %s318, %s321
      %p327 = scmp.eq.s32.totalorder %s30, 0
      %p328 = por %p326, %p327
      %p329 = scmp.ne.s32.totalorder %s318, %s321
      %p330 = scmp.eq.s32.totalorder %s35, 1
      %p331 = por %p329, %p330
      %p332 = scmp.ne.s32.totalorder %s321, %s322
      %p333 = scmp.eq.s32.totalorder %s35, 0
      %p334 = por %p332, %p333
      %p335 = scmp.ne.s32.totalorder %s321, %s322
      %p336 = scmp.eq.s32.totalorder %s36, 1
      %p337 = por %p335, %p336
      %p339 = scmp.ne.s32.totalorder %s322, %s338
      %p340 = scmp.eq.s32.totalorder %s36, 0
      %p341 = por %p339, %p340
      %p342 = scmp.le.s32.totalorder 1, %s30
      %p343 = scmp.lt.s32.totalorder %s30, 3
      %p344 = pnand %p342, %p343
      %p345 = pneg %p344
      // Predicated region
      $region9: #{tpu_custom_call.1} parent=5 // pred_check
        _
      $region10: #{tpu_custom_call.1} parent=5 // pred_check_branch
        %347 = sbr.rel (%p344) target = $region12
      $region11: #{tpu_custom_call.1} parent=5 // pred_region
        %s348 = ssub.s32 %s30, 1
        // Predicated region
        $region13: #{tpu_custom_call.1} parent=11 // pred_check
          %p349 = pneg %p77
        $region14: #{tpu_custom_call.1} parent=11 // pred_check_branch
          %351 = sbr.rel (%p349) target = $region16
        $region15: #{tpu_custom_call.1} parent=11 // pred_region
          %s353 = ssub.s32 2048, 2048
          %354 = vsyncadd [#allocation7], %s353
          %s355 = sshll.u32 [#allocation6], 4
          %s356 = int_to_ptr.vmem [resolvable:$true] %s355
          %361 = dma.hbm_to_vmem [thread:$0]  %s1, 2048, %s356, [#allocation7], 64, 64, 4
        $region16: #{tpu_custom_call.1} parent=11 // pred_fallthru
          _
        // Predicated region
        $region17: #{tpu_custom_call.1} parent=11 // pred_check
          %p362 = pneg %p98
        $region18: #{tpu_custom_call.1} parent=11 // pred_check_branch
          %364 = sbr.rel (%p362) target = $region20
        $region19: #{tpu_custom_call.1} parent=11 // pred_region
          _
        $region20: #{tpu_custom_call.1} parent=11 // pred_fallthru
          _
        // Predicated region
        $region21: #{tpu_custom_call.1} parent=11 // pred_check
          %p365 = pneg %p119
        $region22: #{tpu_custom_call.1} parent=11 // pred_check_branch
          %367 = sbr.rel (%p365) target = $region24
        $region23: #{tpu_custom_call.1} parent=11 // pred_region
          %s369 = ssub.s32 1024, 1024
          %370 = vsyncadd [#allocation7], %s369
          %s371 = sshll.u32 [#allocation8], 4
          %s372 = int_to_ptr.vmem [resolvable:$true] %s371
          %377 = dma.hbm_to_vmem [thread:$0]  %s3, 1024, %s372, [#allocation7], 64, 64, 4
        $region24: #{tpu_custom_call.1} parent=11 // pred_fallthru
          _
        // Predicated region
        $region25: #{tpu_custom_call.1} parent=11 // pred_check
          %p378 = pneg %p140
        $region26: #{tpu_custom_call.1} parent=11 // pred_check_branch
          %380 = sbr.rel (%p378) target = $region28
        $region27: #{tpu_custom_call.1} parent=11 // pred_region
          _
        $region28: #{tpu_custom_call.1} parent=11 // pred_fallthru
          _
        // Predicated region
        $region29: #{tpu_custom_call.1} parent=11 // pred_check
          %p381 = pneg %p161
        $region30: #{tpu_custom_call.1} parent=11 // pred_check_branch
          %383 = sbr.rel (%p381) target = $region32
        $region31: #{tpu_custom_call.1} parent=11 // pred_region
          %s385 = ssub.s32 1024, 1024
          %386 = vsyncadd [#allocation10], %s385
          %s387 = sshll.u32 [#allocation9], 4
          %s388 = int_to_ptr.vmem [resolvable:$true] %s387
          %393 = dma.hbm_to_vmem [thread:$0]  %s5, 1024, %s388, [#allocation10], 64, 64, 4
        $region32: #{tpu_custom_call.1} parent=11 // pred_fallthru
          _
        // Predicated region
        $region33: #{tpu_custom_call.1} parent=11 // pred_check
          %p394 = pneg %p182
        $region34: #{tpu_custom_call.1} parent=11 // pred_check_branch
          %396 = sbr.rel (%p394) target = $region36
        $region35: #{tpu_custom_call.1} parent=11 // pred_region
          _
        $region36: #{tpu_custom_call.1} parent=11 // pred_fallthru
          _
        // Predicated region
        $region37: #{tpu_custom_call.1} parent=11 // pred_check
          %p397 = pneg %p203
        $region38: #{tpu_custom_call.1} parent=11 // pred_check_branch
          %399 = sbr.rel (%p397) target = $region40
        $region39: #{tpu_custom_call.1} parent=11 // pred_region
          %s401 = ssub.s32 1024, 1024
          %402 = vsyncadd [#allocation10], %s401
          %s403 = sshll.u32 [#allocation11], 4
          %s404 = int_to_ptr.vmem [resolvable:$true] %s403
          %409 = dma.hbm_to_vmem [thread:$0]  %s7, 1024, %s404, [#allocation10], 64, 64, 4
        $region40: #{tpu_custom_call.1} parent=11 // pred_fallthru
          _
        // Predicated region
        $region41: #{tpu_custom_call.1} parent=11 // pred_check
          %p410 = pneg %p224
        $region42: #{tpu_custom_call.1} parent=11 // pred_check_branch
          %412 = sbr.rel (%p410) target = $region44
        $region43: #{tpu_custom_call.1} parent=11 // pred_region
          _
        $region44: #{tpu_custom_call.1} parent=11 // pred_fallthru
          _
        // Predicated region
        $region45: #{tpu_custom_call.1} parent=11 // pred_check
          %p413 = pneg %p245
        $region46: #{tpu_custom_call.1} parent=11 // pred_check_branch
          %415 = sbr.rel (%p413) target = $region48
        $region47: #{tpu_custom_call.1} parent=11 // pred_region
          %s417 = ssub.s32 1024, 1024
          %418 = vsyncadd [#allocation13], %s417
          %s419 = sshll.u32 [#allocation12], 4
          %s420 = int_to_ptr.vmem [resolvable:$true] %s419
          %425 = dma.hbm_to_vmem [thread:$0]  %s9, 1024, %s420, [#allocation13], 64, 64, 4
        $region48: #{tpu_custom_call.1} parent=11 // pred_fallthru
          _
        // Predicated region
        $region49: #{tpu_custom_call.1} parent=11 // pred_check
          %p426 = pneg %p266
        $region50: #{tpu_custom_call.1} parent=11 // pred_check_branch
          %428 = sbr.rel (%p426) target = $region52
        $region51: #{tpu_custom_call.1} parent=11 // pred_region
          _
        $region52: #{tpu_custom_call.1} parent=11 // pred_fallthru
          _
        // Predicated region
        $region53: #{tpu_custom_call.1} parent=11 // pred_check
          %p429 = pneg %p287
        $region54: #{tpu_custom_call.1} parent=11 // pred_check_branch
          %431 = sbr.rel (%p429) target = $region56
        $region55: #{tpu_custom_call.1} parent=11 // pred_region
          _
        $region56: #{tpu_custom_call.1} parent=11 // pred_fallthru
          _
        // Predicated region
        $region57: #{tpu_custom_call.1} parent=11 // pred_check
          %p432 = pneg %p308
        $region58: #{tpu_custom_call.1} parent=11 // pred_check_branch
          %434 = sbr.rel (%p432) target = $region60
        $region59: #{tpu_custom_call.1} parent=11 // pred_region
          _
        $region60: #{tpu_custom_call.1} parent=11 // pred_fallthru
          _
      $region12: #{tpu_custom_call.1} parent=5 // pred_fallthru
        _
      %p435 = scmp.lt.s32.totalorder %s30, 2
      // Predicated region
      $region61: #{tpu_custom_call.1} parent=5 // pred_check
        %p436 = pneg %p435
      $region62: #{tpu_custom_call.1} parent=5 // pred_check_branch
        %438 = sbr.rel (%p436) target = $region64
      $region63: #{tpu_custom_call.1} parent=5 // pred_region
        // Predicated region
        $region65: #{tpu_custom_call.1} parent=63 // pred_check
          %p439 = pneg %p50
        $region66: #{tpu_custom_call.1} parent=63 // pred_check_branch
          %441 = sbr.rel (%p439) target = $region68
        $region67: #{tpu_custom_call.1} parent=63 // pred_region
          %s442 = sand.u32 %s40, 1
          %s443 = scalar_lea.sflag [#allocation4], %s442
          %s444 = sand.u32 %s40, 1
          %s445 = smul.addr %s444, 512
          %s446 = scalar_lea.vmem [#allocation3], %s445
          %s447 = smul.u32 32, %s30
          %s449 = ssub.s32 8192, 8192
          %450 = vsyncadd %s443, %s449
          %s451 = smul.addr %s447, 2
          %s452 = smul.addr %s451, 128
          %s453 = scalar_lea.hbm %s0, %s452
          %s454 = sshll.u32 %s446, 4
          %s455 = int_to_ptr.vmem [resolvable:$true] %s454
          %460 = dma.hbm_to_vmem [thread:$0]  %s453, 8192, %s455, %s443, 256, 256, 16
        $region68: #{tpu_custom_call.1} parent=63 // pred_fallthru
          _
      $region64: #{tpu_custom_call.1} parent=5 // pred_fallthru
        _
      %p461 = scmp.le.s32.totalorder 1, %s30
      %p462 = scmp.lt.s32.totalorder %s30, 3
      %p463 = pnand %p461, %p462
      %p464 = pneg %p463
      // Predicated region
      $region69: #{tpu_custom_call.1} parent=5 // pred_check
        _
      $region70: #{tpu_custom_call.1} parent=5 // pred_check_branch
        %466 = sbr.rel (%p463) target = $region72
      $region71: #{tpu_custom_call.1} parent=5 // pred_region
        %s467 = ssub.s32 %s30, 1
        %s468 = sand.u32 %s43, 1
        %s469 = scalar_lea.sflag [#allocation4], %s468
        %s470 = sand.u32 %s43, 1
        %s471 = smul.addr %s470, 512
        %s472 = scalar_lea.vmem [#allocation3], %s471
        // Predicated region
        $region73: #{tpu_custom_call.1} parent=71 // pred_check
          %p473 = pneg %p56
        $region74: #{tpu_custom_call.1} parent=71 // pred_check_branch
          %475 = sbr.rel (%p473) target = $region76
        $region75: #{tpu_custom_call.1} parent=71 // pred_region
          %476 = dma.done %s469, 8192
        $region76: #{tpu_custom_call.1} parent=71 // pred_fallthru
          _
        // Predicated region
        $region77: #{tpu_custom_call.1} parent=71 // pred_check
          %p477 = pneg %p77
        $region78: #{tpu_custom_call.1} parent=71 // pred_check_branch
          %479 = sbr.rel (%p477) target = $region80
        $region79: #{tpu_custom_call.1} parent=71 // pred_region
          %480 = dma.done [#allocation7], 2048
        $region80: #{tpu_custom_call.1} parent=71 // pred_fallthru
          _
        // Predicated region
        $region81: #{tpu_custom_call.1} parent=71 // pred_check
          %p481 = pneg %p119
        $region82: #{tpu_custom_call.1} parent=71 // pred_check_branch
          %483 = sbr.rel (%p481) target = $region84
        $region83: #{tpu_custom_call.1} parent=71 // pred_region
          %484 = dma.done [#allocation7], 1024
        $region84: #{tpu_custom_call.1} parent=71 // pred_fallthru
          _
        // Predicated region
        $region85: #{tpu_custom_call.1} parent=71 // pred_check
          %p485 = pneg %p161
        $region86: #{tpu_custom_call.1} parent=71 // pred_check_branch
          %487 = sbr.rel (%p485) target = $region88
        $region87: #{tpu_custom_call.1} parent=71 // pred_region
          %488 = dma.done [#allocation10], 1024
        $region88: #{tpu_custom_call.1} parent=71 // pred_fallthru
          _
        // Predicated region
        $region89: #{tpu_custom_call.1} parent=71 // pred_check
          %p489 = pneg %p203
        $region90: #{tpu_custom_call.1} parent=71 // pred_check_branch
          %491 = sbr.rel (%p489) target = $region92
        $region91: #{tpu_custom_call.1} parent=71 // pred_region
          %492 = dma.done [#allocation10], 1024
        $region92: #{tpu_custom_call.1} parent=71 // pred_fallthru
          _
        // Predicated region
        $region93: #{tpu_custom_call.1} parent=71 // pred_check
          %p493 = pneg %p245
        $region94: #{tpu_custom_call.1} parent=71 // pred_check_branch
          %495 = sbr.rel (%p493) target = $region96
        $region95: #{tpu_custom_call.1} parent=71 // pred_region
          %496 = dma.done [#allocation13], 1024
        $region96: #{tpu_custom_call.1} parent=71 // pred_fallthru
          _
        %s497 = sand.u32 %s43, 1
        %s498 = scalar_lea.sflag [#allocation4], %s497
        %s499 = sand.u32 %s43, 1
        %s500 = smul.addr %s499, 512
        %s501 = scalar_lea.vmem [#allocation3], %s500
        %p502 = pneg %p56
        %p503 = pneg %p53
        %p504 = pneg %p77
        %p505 = pneg %p74
        %p506 = pneg %p98
        %p507 = pneg %p95
        %p508 = pneg %p119
        %p509 = pneg %p116
        %p510 = pneg %p140
        %p511 = pneg %p137
        %p512 = pneg %p161
        %p513 = pneg %p158
        %p514 = pneg %p182
        %p515 = pneg %p179
        %p516 = pneg %p203
        %p517 = pneg %p200
        %p518 = pneg %p224
        %p519 = pneg %p221
        %p520 = pneg %p245
        %p521 = pneg %p242
        %p522 = pneg %p266
        %p523 = pneg %p263
        %p524 = pneg %p287
        %p525 = pneg %p284
        %p526 = pneg %p308
        %p527 = pneg %p305
        %p528 = pneg %p334
        %p529 = pneg %p331
        %s530 = sand.u32 %s321, 1
        %s531 = scalar_lea.sflag [#allocation5], %s530
        %s532 = sand.u32 %s321, 1
        %s533 = smul.addr %s532, 2
        %s534 = scalar_lea.vmem [#allocation14], %s533
        %s535 = smul.u32 32, %s35
        %s536 = smul.u32 2, %s35
        %v538 = vld [vmem:[%s472] sm:$0xff]
        %v539 = vld [vmem:[%s472 + $0x8] sm:$0xff]
        %v540 = vld [vmem:[%s472 + $0x10] sm:$0xff]
        %v541 = vld [vmem:[%s472 + $0x18] sm:$0xff]
        %v542 = vld [vmem:[%s472 + $0x20] sm:$0xff]
        %v543 = vld [vmem:[%s472 + $0x28] sm:$0xff]
        %v544 = vld [vmem:[%s472 + $0x30] sm:$0xff]
        %v545 = vld [vmem:[%s472 + $0x38] sm:$0xff]
        %v546 = vld [vmem:[%s472 + $0x40] sm:$0xff]
        %v547 = vld [vmem:[%s472 + $0x48] sm:$0xff]
        %v548 = vld [vmem:[%s472 + $0x50] sm:$0xff]
        %v549 = vld [vmem:[%s472 + $0x58] sm:$0xff]
        %v550 = vld [vmem:[%s472 + $0x60] sm:$0xff]
        %v551 = vld [vmem:[%s472 + $0x68] sm:$0xff]
        %v552 = vld [vmem:[%s472 + $0x70] sm:$0xff]
        %v553 = vld [vmem:[%s472 + $0x78] sm:$0xff]
        %v554 = vld [vmem:[%s472 + $0x80] sm:$0xff]
        %v555 = vld [vmem:[%s472 + $0x88] sm:$0xff]
        %v556 = vld [vmem:[%s472 + $0x90] sm:$0xff]
        %v557 = vld [vmem:[%s472 + $0x98] sm:$0xff]
        %v558 = vld [vmem:[%s472 + $0xa0] sm:$0xff]
        %v559 = vld [vmem:[%s472 + $0xa8] sm:$0xff]
        %v560 = vld [vmem:[%s472 + $0xb0] sm:$0xff]
        %v561 = vld [vmem:[%s472 + $0xb8] sm:$0xff]
        %v562 = vld [vmem:[%s472 + $0xc0] sm:$0xff]
        %v563 = vld [vmem:[%s472 + $0xc8] sm:$0xff]
        %v564 = vld [vmem:[%s472 + $0xd0] sm:$0xff]
        %v565 = vld [vmem:[%s472 + $0xd8] sm:$0xff]
        %v566 = vld [vmem:[%s472 + $0xe0] sm:$0xff]
        %v567 = vld [vmem:[%s472 + $0xe8] sm:$0xff]
        %v568 = vld [vmem:[%s472 + $0xf0] sm:$0xff]
        %v569 = vld [vmem:[%s472 + $0xf8] sm:$0xff]
        %v570 = vld [vmem:[%s472 + $0x100] sm:$0xff]
        %v571 = vld [vmem:[%s472 + $0x108] sm:$0xff]
        %v572 = vld [vmem:[%s472 + $0x110] sm:$0xff]
        %v573 = vld [vmem:[%s472 + $0x118] sm:$0xff]
        %v574 = vld [vmem:[%s472 + $0x120] sm:$0xff]
        %v575 = vld [vmem:[%s472 + $0x128] sm:$0xff]
        %v576 = vld [vmem:[%s472 + $0x130] sm:$0xff]
        %v577 = vld [vmem:[%s472 + $0x138] sm:$0xff]
        %v578 = vld [vmem:[%s472 + $0x140] sm:$0xff]
        %v579 = vld [vmem:[%s472 + $0x148] sm:$0xff]
        %v580 = vld [vmem:[%s472 + $0x150] sm:$0xff]
        %v581 = vld [vmem:[%s472 + $0x158] sm:$0xff]
        %v582 = vld [vmem:[%s472 + $0x160] sm:$0xff]
        %v583 = vld [vmem:[%s472 + $0x168] sm:$0xff]
        %v584 = vld [vmem:[%s472 + $0x170] sm:$0xff]
        %v585 = vld [vmem:[%s472 + $0x178] sm:$0xff]
        %v586 = vld [vmem:[%s472 + $0x180] sm:$0xff]
        %v587 = vld [vmem:[%s472 + $0x188] sm:$0xff]
        %v588 = vld [vmem:[%s472 + $0x190] sm:$0xff]
        %v589 = vld [vmem:[%s472 + $0x198] sm:$0xff]
        %v590 = vld [vmem:[%s472 + $0x1a0] sm:$0xff]
        %v591 = vld [vmem:[%s472 + $0x1a8] sm:$0xff]
        %v592 = vld [vmem:[%s472 + $0x1b0] sm:$0xff]
        %v593 = vld [vmem:[%s472 + $0x1b8] sm:$0xff]
        %v594 = vld [vmem:[%s472 + $0x1c0] sm:$0xff]
        %v595 = vld [vmem:[%s472 + $0x1c8] sm:$0xff]
        %v596 = vld [vmem:[%s472 + $0x1d0] sm:$0xff]
        %v597 = vld [vmem:[%s472 + $0x1d8] sm:$0xff]
        %v598 = vld [vmem:[%s472 + $0x1e0] sm:$0xff]
        %v599 = vld [vmem:[%s472 + $0x1e8] sm:$0xff]
        %v600 = vld [vmem:[%s472 + $0x1f0] sm:$0xff]
        %v601 = vld [vmem:[%s472 + $0x1f8] sm:$0xff]
        %v602 = vpack.c.bf16 %v540, %v538
        %v603 = vpack.c.bf16 %v541, %v539
        %v604 = vpack.c.bf16 %v544, %v542
        %v605 = vpack.c.bf16 %v545, %v543
        %v606 = vpack.c.bf16 %v548, %v546
        %v607 = vpack.c.bf16 %v549, %v547
        %v608 = vpack.c.bf16 %v552, %v550
        %v609 = vpack.c.bf16 %v553, %v551
        %v610 = vpack.c.bf16 %v556, %v554
        %v611 = vpack.c.bf16 %v557, %v555
        %v612 = vpack.c.bf16 %v560, %v558
        %v613 = vpack.c.bf16 %v561, %v559
        %v614 = vpack.c.bf16 %v564, %v562
        %v615 = vpack.c.bf16 %v565, %v563
        %v616 = vpack.c.bf16 %v568, %v566
        %v617 = vpack.c.bf16 %v569, %v567
        %v618 = vpack.c.bf16 %v572, %v570
        %v619 = vpack.c.bf16 %v573, %v571
        %v620 = vpack.c.bf16 %v576, %v574
        %v621 = vpack.c.bf16 %v577, %v575
        %v622 = vpack.c.bf16 %v580, %v578
        %v623 = vpack.c.bf16 %v581, %v579
        %v624 = vpack.c.bf16 %v584, %v582
        %v625 = vpack.c.bf16 %v585, %v583
        %v626 = vpack.c.bf16 %v588, %v586
        %v627 = vpack.c.bf16 %v589, %v587
        %v628 = vpack.c.bf16 %v592, %v590
        %v629 = vpack.c.bf16 %v593, %v591
        %v630 = vpack.c.bf16 %v596, %v594
        %v631 = vpack.c.bf16 %v597, %v595
        %v632 = vpack.c.bf16 %v600, %v598
        %v633 = vpack.c.bf16 %v601, %v599
        %v634 = vld [vmem:[#allocation6] sm:$0xf]
        %v635 = vld [vmem:[#allocation6 + $0x4] sm:$0xf]
        %v636 = vld [vmem:[#allocation6 + $0x8] sm:$0xf]
        %v637 = vld [vmem:[#allocation6 + $0xc] sm:$0xf]
        %v638 = vld [vmem:[#allocation6 + $0x10] sm:$0xf]
        %v639 = vld [vmem:[#allocation6 + $0x14] sm:$0xf]
        %v640 = vld [vmem:[#allocation6 + $0x18] sm:$0xf]
        %v641 = vld [vmem:[#allocation6 + $0x1c] sm:$0xf]
        %v642 = vld [vmem:[#allocation6 + $0x20] sm:$0xf]
        %v643 = vld [vmem:[#allocation6 + $0x24] sm:$0xf]
        %v644 = vld [vmem:[#allocation6 + $0x28] sm:$0xf]
        %v645 = vld [vmem:[#allocation6 + $0x2c] sm:$0xf]
        %v646 = vld [vmem:[#allocation6 + $0x30] sm:$0xf]
        %v647 = vld [vmem:[#allocation6 + $0x34] sm:$0xf]
        %v648 = vld [vmem:[#allocation6 + $0x38] sm:$0xf]
        %v649 = vld [vmem:[#allocation6 + $0x3c] sm:$0xf]
        %v650 = vld [vmem:[#allocation6 + $0x40] sm:$0xf]
        %v651 = vld [vmem:[#allocation6 + $0x44] sm:$0xf]
        %v652 = vld [vmem:[#allocation6 + $0x48] sm:$0xf]
        %v653 = vld [vmem:[#allocation6 + $0x4c] sm:$0xf]
        %v654 = vld [vmem:[#allocation6 + $0x50] sm:$0xf]
        %v655 = vld [vmem:[#allocation6 + $0x54] sm:$0xf]
        %v656 = vld [vmem:[#allocation6 + $0x58] sm:$0xf]
        %v657 = vld [vmem:[#allocation6 + $0x5c] sm:$0xf]
        %v658 = vld [vmem:[#allocation6 + $0x60] sm:$0xf]
        %v659 = vld [vmem:[#allocation6 + $0x64] sm:$0xf]
        %v660 = vld [vmem:[#allocation6 + $0x68] sm:$0xf]
        %v661 = vld [vmem:[#allocation6 + $0x6c] sm:$0xf]
        %v662 = vld [vmem:[#allocation6 + $0x70] sm:$0xf]
        %v663 = vld [vmem:[#allocation6 + $0x74] sm:$0xf]
        %v664 = vld [vmem:[#allocation6 + $0x78] sm:$0xf]
        %v665 = vld [vmem:[#allocation6 + $0x7c] sm:$0xf]
        %v666 = vld [vmem:[%s2] sm:$0x1]
        %v668 = vlaneseq
        %v669 = vshrl.u32 %v668, 7
        %v670 = vsub.s32 0, %v669
        %v671 = vrot.slane %v666, %v670
        %v705 = vunpack.c.l.b16 %v634
        %v706 = vunpack.c.l.b16 %v635
        %v707 = vunpack.c.l.b16 %v636
        %v708 = vunpack.c.l.b16 %v637
        %v709 = vunpack.c.l.b16 %v638
        %v710 = vunpack.c.l.b16 %v639
        %v711 = vunpack.c.l.b16 %v640
        %v712 = vunpack.c.l.b16 %v641
        %v713 = vunpack.c.l.b16 %v642
        %v714 = vunpack.c.l.b16 %v643
        %v715 = vunpack.c.l.b16 %v644
        %v716 = vunpack.c.l.b16 %v645
        %v717 = vunpack.c.l.b16 %v646
        %v718 = vunpack.c.l.b16 %v647
        %v719 = vunpack.c.l.b16 %v648
        %v720 = vunpack.c.l.b16 %v649
        %v721 = vunpack.c.l.b16 %v650
        %v722 = vunpack.c.l.b16 %v651
        %v723 = vunpack.c.l.b16 %v652
        %v724 = vunpack.c.l.b16 %v653
        %v725 = vunpack.c.l.b16 %v654
        %v726 = vunpack.c.l.b16 %v655
        %v727 = vunpack.c.l.b16 %v656
        %v728 = vunpack.c.l.b16 %v657
        %v729 = vunpack.c.l.b16 %v658
        %v730 = vunpack.c.l.b16 %v659
        %v731 = vunpack.c.l.b16 %v660
        %v732 = vunpack.c.l.b16 %v661
        %v733 = vunpack.c.l.b16 %v662
        %v734 = vunpack.c.l.b16 %v663
        %v735 = vunpack.c.l.b16 %v664
        %v736 = vunpack.c.l.b16 %v665
        %v737 = vpack.c.b16 %v706, %v705
        %v738 = vpack.c.b16 %v708, %v707
        %v739 = vpack.c.b16 %v710, %v709
        %v740 = vpack.c.b16 %v712, %v711
        %v741 = vpack.c.b16 %v714, %v713
        %v742 = vpack.c.b16 %v716, %v715
        %v743 = vpack.c.b16 %v718, %v717
        %v744 = vpack.c.b16 %v720, %v719
        %v745 = vpack.c.b16 %v722, %v721
        %v746 = vpack.c.b16 %v724, %v723
        %v747 = vpack.c.b16 %v726, %v725
        %v748 = vpack.c.b16 %v728, %v727
        %v749 = vpack.c.b16 %v730, %v729
        %v750 = vpack.c.b16 %v732, %v731
        %v751 = vpack.c.b16 %v734, %v733
        %v752 = vpack.c.b16 %v736, %v735
        %769 = vmatprep.subr.bf16.mxu0 0
        %770 = vmatpush1.bf16.msra.mxu0 %v737
        %771 = vmatprep.subr.bf16.mxu0 0
        %772 = vmatpush1.bf16.msra.mxu0 %v738
        %773 = vmatprep.subr.bf16.mxu0 0
        %774 = vmatpush1.bf16.msra.mxu0 %v739
        %775 = vmatprep.subr.bf16.mxu0 0
        %776 = vmatpush1.bf16.msra.mxu0 %v740
        %777 = vmatprep.subr.bf16.mxu0 0
        %778 = vmatpush1.bf16.msra.mxu0 %v741
        %779 = vmatprep.subr.bf16.mxu0 0
        %780 = vmatpush1.bf16.msra.mxu0 %v742
        %781 = vmatprep.subr.bf16.mxu0 0
        %782 = vmatpush1.bf16.msra.mxu0 %v743
        %783 = vmatprep.subr.bf16.mxu0 0
        %784 = vmatpush1.bf16.msra.mxu0 %v744
        %785 = vmatprep.subr.bf16.mxu0 0
        %786 = vmatpush1.bf16.msra.mxu0 %v745
        %787 = vmatprep.subr.bf16.mxu0 0
        %788 = vmatpush1.bf16.msra.mxu0 %v746
        %789 = vmatprep.subr.bf16.mxu0 0
        %790 = vmatpush1.bf16.msra.mxu0 %v747
        %791 = vmatprep.subr.bf16.mxu0 0
        %792 = vmatpush1.bf16.msra.mxu0 %v748
        %793 = vmatprep.subr.bf16.mxu0 0
        %794 = vmatpush1.bf16.msra.mxu0 %v749
        %795 = vmatprep.subr.bf16.mxu0 0
        %796 = vmatpush1.bf16.msra.mxu0 %v750
        %797 = vmatprep.subr.bf16.mxu0 0
        %798 = vmatpush1.bf16.msra.mxu0 %v751
        %799 = vmatprep.subr.bf16.mxu0 0
        %800 = vmatpush1.bf16.msra.mxu0 %v752
        %801 = vmatprep.mubr.bf16.mxu0 %v603
        %802 = vmatmul.mubr.bf16.gmra.mrb[0].mxu0 %v602
        %v803 = vpop.f32.mrb[0].mxu0
        %v804 = vadd.f32 %v671, %v803
        %v805 = vpop.f32.mrb[0].mxu0
        %v806 = vpop.f32.mrb[0].mxu0
        %v807 = vadd.f32 %v671, %v806
        %v808 = vpop.f32.mrb[0].mxu0
        %809 = vmatprep.mubr.bf16.mxu0 %v605
        %810 = vmatmul.mubr.bf16.gmra.mrb[0].mxu0 %v604
        %v811 = vpop.f32.mrb[0].mxu0
        %v812 = vadd.f32 %v671, %v811
        %v813 = vpop.f32.mrb[0].mxu0
        %v814 = vpop.f32.mrb[0].mxu0
        %v815 = vadd.f32 %v671, %v814
        %v816 = vpop.f32.mrb[0].mxu0
        %817 = vmatprep.mubr.bf16.mxu0 %v607
        %818 = vmatmul.mubr.bf16.gmra.mrb[0].mxu0 %v606
        %v819 = vpop.f32.mrb[0].mxu0
        %v820 = vadd.f32 %v671, %v819
        %v821 = vpop.f32.mrb[0].mxu0
        %v822 = vpop.f32.mrb[0].mxu0
        %v823 = vadd.f32 %v671, %v822
        %v824 = vpop.f32.mrb[0].mxu0
        %825 = vmatprep.mubr.bf16.mxu0 %v609
        %826 = vmatmul.mubr.bf16.gmra.mrb[0].mxu0 %v608
        %v827 = vpop.f32.mrb[0].mxu0
        %v828 = vadd.f32 %v671, %v827
        %v829 = vpop.f32.mrb[0].mxu0
        %v830 = vpop.f32.mrb[0].mxu0
        %v831 = vadd.f32 %v671, %v830
        %v832 = vpop.f32.mrb[0].mxu0
        %833 = vmatprep.mubr.bf16.mxu0 %v611
        %834 = vmatmul.mubr.bf16.gmra.mrb[0].mxu0 %v610
        %v835 = vpop.f32.mrb[0].mxu0
        %v836 = vadd.f32 %v671, %v835
        %v837 = vpop.f32.mrb[0].mxu0
        %v838 = vpop.f32.mrb[0].mxu0
        %v839 = vadd.f32 %v671, %v838
        %v840 = vpop.f32.mrb[0].mxu0
        %841 = vmatprep.mubr.bf16.mxu0 %v613
        %842 = vmatmul.mubr.bf16.gmra.mrb[0].mxu0 %v612
        %v843 = vpop.f32.mrb[0].mxu0
        %v844 = vadd.f32 %v671, %v843
        %v845 = vpop.f32.mrb[0].mxu0
        %v846 = vpop.f32.mrb[0].mxu0
        %v847 = vadd.f32 %v671, %v846
        %v848 = vpop.f32.mrb[0].mxu0
        %849 = vmatprep.mubr.bf16.mxu0 %v615
        %850 = vmatmul.mubr.bf16.gmra.mrb[0].mxu0 %v614
        %v851 = vpop.f32.mrb[0].mxu0
        %v852 = vadd.f32 %v671, %v851
        %v853 = vpop.f32.mrb[0].mxu0
        %v854 = vpop.f32.mrb[0].mxu0
        %v855 = vadd.f32 %v671, %v854
        %v856 = vpop.f32.mrb[0].mxu0
        %857 = vmatprep.mubr.bf16.mxu0 %v617
        %858 = vmatmul.mubr.bf16.gmra.mrb[0].mxu0 %v616
        %v859 = vpop.f32.mrb[0].mxu0
        %v860 = vadd.f32 %v671, %v859
        %v861 = vpop.f32.mrb[0].mxu0
        %v862 = vpop.f32.mrb[0].mxu0
        %v863 = vadd.f32 %v671, %v862
        %v864 = vpop.f32.mrb[0].mxu0
        %865 = vmatprep.mubr.bf16.mxu0 %v619
        %866 = vmatmul.mubr.bf16.gmra.mrb[0].mxu0 %v618
        %v867 = vpop.f32.mrb[0].mxu0
        %v868 = vadd.f32 %v671, %v867
        %v869 = vpop.f32.mrb[0].mxu0
        %v870 = vpop.f32.mrb[0].mxu0
        %v871 = vadd.f32 %v671, %v870
        %v872 = vpop.f32.mrb[0].mxu0
        %873 = vmatprep.mubr.bf16.mxu0 %v621
        %874 = vmatmul.mubr.bf16.gmra.mrb[0].mxu0 %v620
        %v875 = vpop.f32.mrb[0].mxu0
        %v876 = vadd.f32 %v671, %v875
        %v877 = vpop.f32.mrb[0].mxu0
        %v878 = vpop.f32.mrb[0].mxu0
        %v879 = vadd.f32 %v671, %v878
        %v880 = vpop.f32.mrb[0].mxu0
        %881 = vmatprep.mubr.bf16.mxu0 %v623
        %882 = vmatmul.mubr.bf16.gmra.mrb[0].mxu0 %v622
        %v883 = vpop.f32.mrb[0].mxu0
        %v884 = vadd.f32 %v671, %v883
        %v885 = vpop.f32.mrb[0].mxu0
        %v886 = vpop.f32.mrb[0].mxu0
        %v887 = vadd.f32 %v671, %v886
        %v888 = vpop.f32.mrb[0].mxu0
        %889 = vmatprep.mubr.bf16.mxu0 %v625
        %890 = vmatmul.mubr.bf16.gmra.mrb[0].mxu0 %v624
        %v891 = vpop.f32.mrb[0].mxu0
        %v892 = vadd.f32 %v671, %v891
        %v893 = vpop.f32.mrb[0].mxu0
        %v894 = vpop.f32.mrb[0].mxu0
        %v895 = vadd.f32 %v671, %v894
        %v896 = vpop.f32.mrb[0].mxu0
        %897 = vmatprep.mubr.bf16.mxu0 %v627
        %898 = vmatmul.mubr.bf16.gmra.mrb[0].mxu0 %v626
        %v899 = vpop.f32.mrb[0].mxu0
        %v900 = vadd.f32 %v671, %v899
        %v901 = vpop.f32.mrb[0].mxu0
        %v902 = vpop.f32.mrb[0].mxu0
        %v903 = vadd.f32 %v671, %v902
        %v904 = vpop.f32.mrb[0].mxu0
        %905 = vmatprep.mubr.bf16.mxu0 %v629
        %906 = vmatmul.mubr.bf16.gmra.mrb[0].mxu0 %v628
        %v907 = vpop.f32.mrb[0].mxu0
        %v908 = vadd.f32 %v671, %v907
        %v909 = vpop.f32.mrb[0].mxu0
        %v910 = vpop.f32.mrb[0].mxu0
        %v911 = vadd.f32 %v671, %v910
        %v912 = vpop.f32.mrb[0].mxu0
        %913 = vmatprep.mubr.bf16.mxu0 %v631
        %914 = vmatmul.mubr.bf16.gmra.mrb[0].mxu0 %v630
        %v915 = vpop.f32.mrb[0].mxu0
        %v916 = vadd.f32 %v671, %v915
        %v917 = vpop.f32.mrb[0].mxu0
        %v918 = vpop.f32.mrb[0].mxu0
        %v919 = vadd.f32 %v671, %v918
        %v920 = vpop.f32.mrb[0].mxu0
        %921 = vmatprep.mubr.bf16.mxu0 %v633
        %922 = vmatmul.mubr.bf16.gmra.mrb[0].mxu0 %v632
        %v923 = vpop.f32.mrb[0].mxu0
        %v924 = vadd.f32 %v671, %v923
        %v925 = vpop.f32.mrb[0].mxu0
        %v926 = vpop.f32.mrb[0].mxu0
        %v927 = vadd.f32 %v671, %v926
        %v928 = vpop.f32.mrb[0].mxu0
        %929 = vdwg.mxu0
        %v930 = vtanh.pop %v804
        %v931 = vtanh.pop %v807
        %v932 = vtanh.pop %v812
        %v933 = vtanh.pop %v815
        %v934 = vtanh.pop %v820
        %v935 = vtanh.pop %v823
        %v936 = vtanh.pop %v828
        %v937 = vtanh.pop %v831
        %v938 = vtanh.pop %v836
        %v939 = vtanh.pop %v839
        %v940 = vtanh.pop %v844
        %v941 = vtanh.pop %v847
        %v942 = vtanh.pop %v852
        %v943 = vtanh.pop %v855
        %v944 = vtanh.pop %v860
        %v945 = vtanh.pop %v863
        %v946 = vtanh.pop %v868
        %v947 = vtanh.pop %v871
        %v948 = vtanh.pop %v876
        %v949 = vtanh.pop %v879
        %v950 = vtanh.pop %v884
        %v951 = vtanh.pop %v887
        %v952 = vtanh.pop %v892
        %v953 = vtanh.pop %v895
        %v954 = vtanh.pop %v900
        %v955 = vtanh.pop %v903
        %v956 = vtanh.pop %v908
        %v957 = vtanh.pop %v911
        %v958 = vtanh.pop %v916
        %v959 = vtanh.pop %v919
        %v960 = vtanh.pop %v924
        %v961 = vtanh.pop %v927
        %v962 = vpack.c.bf16 %v931, %v930
        %v963 = vpack.c.bf16 %v933, %v932
        %v964 = vpack.c.bf16 %v935, %v934
        %v965 = vpack.c.bf16 %v937, %v936
        %v966 = vpack.c.bf16 %v939, %v938
        %v967 = vpack.c.bf16 %v941, %v940
        %v968 = vpack.c.bf16 %v943, %v942
        %v969 = vpack.c.bf16 %v945, %v944
        %v970 = vpack.c.bf16 %v947, %v946
        %v971 = vpack.c.bf16 %v949, %v948
        %v972 = vpack.c.bf16 %v951, %v950
        %v973 = vpack.c.bf16 %v953, %v952
        %v974 = vpack.c.bf16 %v955, %v954
        %v975 = vpack.c.bf16 %v957, %v956
        %v976 = vpack.c.bf16 %v959, %v958
        %v977 = vpack.c.bf16 %v961, %v960
        %v978 = vld [vmem:[#allocation8] sm:$0xf]
        %v979 = vld [vmem:[#allocation8 + $0x4] sm:$0xf]
        %v980 = vld [vmem:[#allocation8 + $0x8] sm:$0xf]
        %v981 = vld [vmem:[#allocation8 + $0xc] sm:$0xf]
        %v982 = vld [vmem:[#allocation8 + $0x10] sm:$0xf]
        %v983 = vld [vmem:[#allocation8 + $0x14] sm:$0xf]
        %v984 = vld [vmem:[#allocation8 + $0x18] sm:$0xf]
        %v985 = vld [vmem:[#allocation8 + $0x1c] sm:$0xf]
        %v986 = vld [vmem:[#allocation8 + $0x20] sm:$0xf]
        %v987 = vld [vmem:[#allocation8 + $0x24] sm:$0xf]
        %v988 = vld [vmem:[#allocation8 + $0x28] sm:$0xf]
        %v989 = vld [vmem:[#allocation8 + $0x2c] sm:$0xf]
        %v990 = vld [vmem:[#allocation8 + $0x30] sm:$0xf]
        %v991 = vld [vmem:[#allocation8 + $0x34] sm:$0xf]
        %v992 = vld [vmem:[#allocation8 + $0x38] sm:$0xf]
        %v993 = vld [vmem:[#allocation8 + $0x3c] sm:$0xf]
        %v994 = vld [vmem:[%s4] sm:$0x1]
        %v996 = vlaneseq
        %v997 = vshrl.u32 %v996, 7
        %v998 = vsub.s32 0, %v997
        %v999 = vrot.slane %v994, %v998
        %v1017 = vunpack.c.l.b16 %v978
        %v1018 = vunpack.c.l.b16 %v979
        %v1019 = vunpack.c.l.b16 %v980
        %v1020 = vunpack.c.l.b16 %v981
        %v1021 = vunpack.c.l.b16 %v982
        %v1022 = vunpack.c.l.b16 %v983
        %v1023 = vunpack.c.l.b16 %v984
        %v1024 = vunpack.c.l.b16 %v985
        %v1025 = vunpack.c.l.b16 %v986
        %v1026 = vunpack.c.l.b16 %v987
        %v1027 = vunpack.c.l.b16 %v988
        %v1028 = vunpack.c.l.b16 %v989
        %v1029 = vunpack.c.l.b16 %v990
        %v1030 = vunpack.c.l.b16 %v991
        %v1031 = vunpack.c.l.b16 %v992
        %v1032 = vunpack.c.l.b16 %v993
        %v1033 = vpack.c.b16 %v1018, %v1017
        %v1034 = vpack.c.b16 %v1020, %v1019
        %v1035 = vpack.c.b16 %v1022, %v1021
        %v1036 = vpack.c.b16 %v1024, %v1023
        %v1037 = vpack.c.b16 %v1026, %v1025
        %v1038 = vpack.c.b16 %v1028, %v1027
        %v1039 = vpack.c.b16 %v1030, %v1029
        %v1040 = vpack.c.b16 %v1032, %v1031
        %1049 = vmatprep.subr.bf16.mxu0 0
        %1050 = vmatpush1.bf16.msra.mxu0 %v1033
        %1051 = vmatprep.subr.bf16.mxu0 0
        %1052 = vmatpush1.bf16.msra.mxu0 %v1034
        %1053 = vmatprep.subr.bf16.mxu0 0
        %1054 = vmatpush1.bf16.msra.mxu0 %v1035
        %1055 = vmatprep.subr.bf16.mxu0 0
        %1056 = vmatpush1.bf16.msra.mxu0 %v1036
        %1057 = vmatprep.subr.bf16.mxu0 0
        %1058 = vmatpush1.bf16.msra.mxu0 %v1037
        %1059 = vmatprep.subr.bf16.mxu0 0
        %1060 = vmatpush1.bf16.msra.mxu0 %v1038
        %1061 = vmatprep.subr.bf16.mxu0 0
        %1062 = vmatpush1.bf16.msra.mxu0 %v1039
        %1063 = vmatprep.subr.bf16.mxu0 0
        %1064 = vmatpush1.bf16.msra.mxu0 %v1040
        %1065 = vmatprep.subr.bf16.mxu0 0
        %1066 = vmatpush1.bf16.msra.mxu0 0
        %1067 = vmatprep.subr.bf16.mxu0 0
        %1068 = vmatpush1.bf16.msra.mxu0 0
        %1069 = vmatprep.subr.bf16.mxu0 0
        %1070 = vmatpush1.bf16.msra.mxu0 0
        %1071 = vmatprep.subr.bf16.mxu0 0
        %1072 = vmatpush1.bf16.msra.mxu0 0
        %1073 = vmatprep.subr.bf16.mxu0 0
        %1074 = vmatpush1.bf16.msra.mxu0 0
        %1075 = vmatprep.subr.bf16.mxu0 0
        %1076 = vmatpush1.bf16.msra.mxu0 0
        %1077 = vmatprep.subr.bf16.mxu0 0
        %1078 = vmatpush1.bf16.msra.mxu0 0
        %1079 = vmatprep.subr.bf16.mxu0 0
        %1080 = vmatpush1.bf16.msra.mxu0 0
        %1081 = vmatprep.mubr.bf16.mxu0 0
        %1082 = vmatmul.mubr.bf16.gmra.mrb[0].mxu0 %v962
        %v1083 = vpop.f32.mrb[0].mxu0
        %v1084 = vadd.f32 %v999, %v1083
        %v1085 = vpop.f32.mrb[0].mxu0
        %v1086 = vpop.f32.mrb[0].mxu0
        %v1087 = vadd.f32 %v999, %v1086
        %v1088 = vpop.f32.mrb[0].mxu0
        %1089 = vmatprep.mubr.bf16.mxu0 0
        %1090 = vmatmul.mubr.bf16.gmra.mrb[0].mxu0 %v963
        %v1091 = vpop.f32.mrb[0].mxu0
        %v1092 = vadd.f32 %v999, %v1091
        %v1093 = vpop.f32.mrb[0].mxu0
        %v1094 = vpop.f32.mrb[0].mxu0
        %v1095 = vadd.f32 %v999, %v1094
        %v1096 = vpop.f32.mrb[0].mxu0
        %1097 = vmatprep.mubr.bf16.mxu0 0
        %1098 = vmatmul.mubr.bf16.gmra.mrb[0].mxu0 %v964
        %v1099 = vpop.f32.mrb[0].mxu0
        %v1100 = vadd.f32 %v999, %v1099
        %v1101 = vpop.f32.mrb[0].mxu0
        %v1102 = vpop.f32.mrb[0].mxu0
        %v1103 = vadd.f32 %v999, %v1102
        %v1104 = vpop.f32.mrb[0].mxu0
        %1105 = vmatprep.mubr.bf16.mxu0 0
        %1106 = vmatmul.mubr.bf16.gmra.mrb[0].mxu0 %v965
        %v1107 = vpop.f32.mrb[0].mxu0
        %v1108 = vadd.f32 %v999, %v1107
        %v1109 = vpop.f32.mrb[0].mxu0
        %v1110 = vpop.f32.mrb[0].mxu0
        %v1111 = vadd.f32 %v999, %v1110
        %v1112 = vpop.f32.mrb[0].mxu0
        %1113 = vmatprep.mubr.bf16.mxu0 0
        %1114 = vmatmul.mubr.bf16.gmra.mrb[0].mxu0 %v966
        %v1115 = vpop.f32.mrb[0].mxu0
        %v1116 = vadd.f32 %v999, %v1115
        %v1117 = vpop.f32.mrb[0].mxu0
        %v1118 = vpop.f32.mrb[0].mxu0
        %v1119 = vadd.f32 %v999, %v1118
        %v1120 = vpop.f32.mrb[0].mxu0
        %1121 = vmatprep.mubr.bf16.mxu0 0
        %1122 = vmatmul.mubr.bf16.gmra.mrb[0].mxu0 %v967
        %v1123 = vpop.f32.mrb[0].mxu0
        %v1124 = vadd.f32 %v999, %v1123
        %v1125 = vpop.f32.mrb[0].mxu0
        %v1126 = vpop.f32.mrb[0].mxu0
        %v1127 = vadd.f32 %v999, %v1126
        %v1128 = vpop.f32.mrb[0].mxu0
        %1129 = vmatprep.mubr.bf16.mxu0 0
        %1130 = vmatmul.mubr.bf16.gmra.mrb[0].mxu0 %v968
        %v1131 = vpop.f32.mrb[0].mxu0
        %v1132 = vadd.f32 %v999, %v1131
        %v1133 = vpop.f32.mrb[0].mxu0
        %v1134 = vpop.f32.mrb[0].mxu0
        %v1135 = vadd.f32 %v999, %v1134
        %v1136 = vpop.f32.mrb[0].mxu0
        %1137 = vmatprep.mubr.bf16.mxu0 0
        %1138 = vmatmul.mubr.bf16.gmra.mrb[0].mxu0 %v969
        %v1139 = vpop.f32.mrb[0].mxu0
        %v1140 = vadd.f32 %v999, %v1139
        %v1141 = vpop.f32.mrb[0].mxu0
        %v1142 = vpop.f32.mrb[0].mxu0
        %v1143 = vadd.f32 %v999, %v1142
        %v1144 = vpop.f32.mrb[0].mxu0
        %1145 = vmatprep.mubr.bf16.mxu0 0
        %1146 = vmatmul.mubr.bf16.gmra.mrb[0].mxu0 %v970
        %v1147 = vpop.f32.mrb[0].mxu0
        %v1148 = vadd.f32 %v999, %v1147
        %v1149 = vpop.f32.mrb[0].mxu0
        %v1150 = vpop.f32.mrb[0].mxu0
        %v1151 = vadd.f32 %v999, %v1150
        %v1152 = vpop.f32.mrb[0].mxu0
        %1153 = vmatprep.mubr.bf16.mxu0 0
        %1154 = vmatmul.mubr.bf16.gmra.mrb[0].mxu0 %v971
        %v1155 = vpop.f32.mrb[0].mxu0
        %v1156 = vadd.f32 %v999, %v1155
        %v1157 = vpop.f32.mrb[0].mxu0
        %v1158 = vpop.f32.mrb[0].mxu0
        %v1159 = vadd.f32 %v999, %v1158
        %v1160 = vpop.f32.mrb[0].mxu0
        %1161 = vmatprep.mubr.bf16.mxu0 0
        %1162 = vmatmul.mubr.bf16.gmra.mrb[0].mxu0 %v972
        %v1163 = vpop.f32.mrb[0].mxu0
        %v1164 = vadd.f32 %v999, %v1163
        %v1165 = vpop.f32.mrb[0].mxu0
        %v1166 = vpop.f32.mrb[0].mxu0
        %v1167 = vadd.f32 %v999, %v1166
        %v1168 = vpop.f32.mrb[0].mxu0
        %1169 = vmatprep.mubr.bf16.mxu0 0
        %1170 = vmatmul.mubr.bf16.gmra.mrb[0].mxu0 %v973
        %v1171 = vpop.f32.mrb[0].mxu0
        %v1172 = vadd.f32 %v999, %v1171
        %v1173 = vpop.f32.mrb[0].mxu0
        %v1174 = vpop.f32.mrb[0].mxu0
        %v1175 = vadd.f32 %v999, %v1174
        %v1176 = vpop.f32.mrb[0].mxu0
        %1177 = vmatprep.mubr.bf16.mxu0 0
        %1178 = vmatmul.mubr.bf16.gmra.mrb[0].mxu0 %v974
        %v1179 = vpop.f32.mrb[0].mxu0
        %v1180 = vadd.f32 %v999, %v1179
        %v1181 = vpop.f32.mrb[0].mxu0
        %v1182 = vpop.f32.mrb[0].mxu0
        %v1183 = vadd.f32 %v999, %v1182
        %v1184 = vpop.f32.mrb[0].mxu0
        %1185 = vmatprep.mubr.bf16.mxu0 0
        %1186 = vmatmul.mubr.bf16.gmra.mrb[0].mxu0 %v975
        %v1187 = vpop.f32.mrb[0].mxu0
        %v1188 = vadd.f32 %v999, %v1187
        %v1189 = vpop.f32.mrb[0].mxu0
        %v1190 = vpop.f32.mrb[0].mxu0
        %v1191 = vadd.f32 %v999, %v1190
        %v1192 = vpop.f32.mrb[0].mxu0
        %1193 = vmatprep.mubr.bf16.mxu0 0
        %1194 = vmatmul.mubr.bf16.gmra.mrb[0].mxu0 %v976
        %v1195 = vpop.f32.mrb[0].mxu0
        %v1196 = vadd.f32 %v999, %v1195
        %v1197 = vpop.f32.mrb[0].mxu0
        %v1198 = vpop.f32.mrb[0].mxu0
        %v1199 = vadd.f32 %v999, %v1198
        %v1200 = vpop.f32.mrb[0].mxu0
        %1201 = vmatprep.mubr.bf16.mxu0 0
        %1202 = vmatmul.mubr.bf16.gmra.mrb[0].mxu0 %v977
        %v1203 = vpop.f32.mrb[0].mxu0
        %v1204 = vadd.f32 %v999, %v1203
        %v1205 = vpop.f32.mrb[0].mxu0
        %v1206 = vpop.f32.mrb[0].mxu0
        %v1207 = vadd.f32 %v999, %v1206
        %v1208 = vpop.f32.mrb[0].mxu0
        %1209 = vdwg.mxu0
        %v1210 = vtanh.pop %v1084
        %v1211 = vtanh.pop %v1087
        %v1212 = vtanh.pop %v1092
        %v1213 = vtanh.pop %v1095
        %v1214 = vtanh.pop %v1100
        %v1215 = vtanh.pop %v1103
        %v1216 = vtanh.pop %v1108
        %v1217 = vtanh.pop %v1111
        %v1218 = vtanh.pop %v1116
        %v1219 = vtanh.pop %v1119
        %v1220 = vtanh.pop %v1124
        %v1221 = vtanh.pop %v1127
        %v1222 = vtanh.pop %v1132
        %v1223 = vtanh.pop %v1135
        %v1224 = vtanh.pop %v1140
        %v1225 = vtanh.pop %v1143
        %v1226 = vtanh.pop %v1148
        %v1227 = vtanh.pop %v1151
        %v1228 = vtanh.pop %v1156
        %v1229 = vtanh.pop %v1159
        %v1230 = vtanh.pop %v1164
        %v1231 = vtanh.pop %v1167
        %v1232 = vtanh.pop %v1172
        %v1233 = vtanh.pop %v1175
        %v1234 = vtanh.pop %v1180
        %v1235 = vtanh.pop %v1183
        %v1236 = vtanh.pop %v1188
        %v1237 = vtanh.pop %v1191
        %v1238 = vtanh.pop %v1196
        %v1239 = vtanh.pop %v1199
        %v1240 = vtanh.pop %v1204
        %v1241 = vtanh.pop %v1207
        %v1242 = vpack.c.bf16 %v1211, %v1210
        %v1243 = vpack.c.bf16 %v1213, %v1212
        %v1244 = vpack.c.bf16 %v1215, %v1214
        %v1245 = vpack.c.bf16 %v1217, %v1216
        %v1246 = vpack.c.bf16 %v1219, %v1218
        %v1247 = vpack.c.bf16 %v1221, %v1220
        %v1248 = vpack.c.bf16 %v1223, %v1222
        %v1249 = vpack.c.bf16 %v1225, %v1224
        %v1250 = vpack.c.bf16 %v1227, %v1226
        %v1251 = vpack.c.bf16 %v1229, %v1228
        %v1252 = vpack.c.bf16 %v1231, %v1230
        %v1253 = vpack.c.bf16 %v1233, %v1232
        %v1254 = vpack.c.bf16 %v1235, %v1234
        %v1255 = vpack.c.bf16 %v1237, %v1236
        %v1256 = vpack.c.bf16 %v1239, %v1238
        %v1257 = vpack.c.bf16 %v1241, %v1240
        %v1258 = vld [vmem:[#allocation9] sm:$0xf]
        %v1259 = vld [vmem:[#allocation9 + $0x4] sm:$0xf]
        %v1260 = vld [vmem:[#allocation9 + $0x8] sm:$0xf]
        %v1261 = vld [vmem:[#allocation9 + $0xc] sm:$0xf]
        %v1262 = vld [vmem:[#allocation9 + $0x10] sm:$0xf]
        %v1263 = vld [vmem:[#allocation9 + $0x14] sm:$0xf]
        %v1264 = vld [vmem:[#allocation9 + $0x18] sm:$0xf]
        %v1265 = vld [vmem:[#allocation9 + $0x1c] sm:$0xf]
        %v1266 = vld [vmem:[#allocation9 + $0x20] sm:$0xf]
        %v1267 = vld [vmem:[#allocation9 + $0x24] sm:$0xf]
        %v1268 = vld [vmem:[#allocation9 + $0x28] sm:$0xf]
        %v1269 = vld [vmem:[#allocation9 + $0x2c] sm:$0xf]
        %v1270 = vld [vmem:[#allocation9 + $0x30] sm:$0xf]
        %v1271 = vld [vmem:[#allocation9 + $0x34] sm:$0xf]
        %v1272 = vld [vmem:[#allocation9 + $0x38] sm:$0xf]
        %v1273 = vld [vmem:[#allocation9 + $0x3c] sm:$0xf]
        %v1274 = vld [vmem:[%s6] sm:$0x1]
        %v1276 = vlaneseq
        %v1277 = vshrl.u32 %v1276, 7
        %v1278 = vsub.s32 0, %v1277
        %v1279 = vrot.slane %v1274, %v1278
        %v1297 = vunpack.c.l.b16 %v1258
        %v1298 = vunpack.c.l.b16 %v1259
        %v1299 = vunpack.c.l.b16 %v1260
        %v1300 = vunpack.c.l.b16 %v1261
        %v1301 = vunpack.c.l.b16 %v1262
        %v1302 = vunpack.c.l.b16 %v1263
        %v1303 = vunpack.c.l.b16 %v1264
        %v1304 = vunpack.c.l.b16 %v1265
        %v1305 = vunpack.c.l.b16 %v1266
        %v1306 = vunpack.c.l.b16 %v1267
        %v1307 = vunpack.c.l.b16 %v1268
        %v1308 = vunpack.c.l.b16 %v1269
        %v1309 = vunpack.c.l.b16 %v1270
        %v1310 = vunpack.c.l.b16 %v1271
        %v1311 = vunpack.c.l.b16 %v1272
        %v1312 = vunpack.c.l.b16 %v1273
        %v1313 = vpack.c.b16 %v1298, %v1297
        %v1314 = vpack.c.b16 %v1300, %v1299
        %v1315 = vpack.c.b16 %v1302, %v1301
        %v1316 = vpack.c.b16 %v1304, %v1303
        %v1317 = vpack.c.b16 %v1306, %v1305
        %v1318 = vpack.c.b16 %v1308, %v1307
        %v1319 = vpack.c.b16 %v1310, %v1309
        %v1320 = vpack.c.b16 %v1312, %v1311
        %1329 = vmatprep.subr.bf16.mxu0 0
        %1330 = vmatpush1.bf16.msra.mxu0 %v1313
        %1331 = vmatprep.subr.bf16.mxu0 0
        %1332 = vmatpush1.bf16.msra.mxu0 %v1314
        %1333 = vmatprep.subr.bf16.mxu0 0
        %1334 = vmatpush1.bf16.msra.mxu0 %v1315
        %1335 = vmatprep.subr.bf16.mxu0 0
        %1336 = vmatpush1.bf16.msra.mxu0 %v1316
        %1337 = vmatprep.subr.bf16.mxu0 0
        %1338 = vmatpush1.bf16.msra.mxu0 %v1317
        %1339 = vmatprep.subr.bf16.mxu0 0
        %1340 = vmatpush1.bf16.msra.mxu0 %v1318
        %1341 = vmatprep.subr.bf16.mxu0 0
        %1342 = vmatpush1.bf16.msra.mxu0 %v1319
        %1343 = vmatprep.subr.bf16.mxu0 0
        %1344 = vmatpush1.bf16.msra.mxu0 %v1320
        %1345 = vmatprep.subr.bf16.mxu0 0
        %1346 = vmatpush1.bf16.msra.mxu0 0
        %1347 = vmatprep.subr.bf16.mxu0 0
        %1348 = vmatpush1.bf16.msra.mxu0 0
        %1349 = vmatprep.subr.bf16.mxu0 0
        %1350 = vmatpush1.bf16.msra.mxu0 0
        %1351 = vmatprep.subr.bf16.mxu0 0
        %1352 = vmatpush1.bf16.msra.mxu0 0
        %1353 = vmatprep.subr.bf16.mxu0 0
        %1354 = vmatpush1.bf16.msra.mxu0 0
        %1355 = vmatprep.subr.bf16.mxu0 0
        %1356 = vmatpush1.bf16.msra.mxu0 0
        %1357 = vmatprep.subr.bf16.mxu0 0
        %1358 = vmatpush1.bf16.msra.mxu0 0
        %1359 = vmatprep.subr.bf16.mxu0 0
        %1360 = vmatpush1.bf16.msra.mxu0 0
        %1361 = vmatprep.mubr.bf16.mxu0 0
        %1362 = vmatmul.mubr.bf16.gmra.mrb[0].mxu0 %v1242
        %v1363 = vpop.f32.mrb[0].mxu0
        %v1364 = vadd.f32 %v1279, %v1363
        %v1365 = vpop.f32.mrb[0].mxu0
        %v1366 = vpop.f32.mrb[0].mxu0
        %v1367 = vadd.f32 %v1279, %v1366
        %v1368 = vpop.f32.mrb[0].mxu0
        %1369 = vmatprep.mubr.bf16.mxu0 0
        %1370 = vmatmul.mubr.bf16.gmra.mrb[0].mxu0 %v1243
        %v1371 = vpop.f32.mrb[0].mxu0
        %v1372 = vadd.f32 %v1279, %v1371
        %v1373 = vpop.f32.mrb[0].mxu0
        %v1374 = vpop.f32.mrb[0].mxu0
        %v1375 = vadd.f32 %v1279, %v1374
        %v1376 = vpop.f32.mrb[0].mxu0
        %1377 = vmatprep.mubr.bf16.mxu0 0
        %1378 = vmatmul.mubr.bf16.gmra.mrb[0].mxu0 %v1244
        %v1379 = vpop.f32.mrb[0].mxu0
        %v1380 = vadd.f32 %v1279, %v1379
        %v1381 = vpop.f32.mrb[0].mxu0
        %v1382 = vpop.f32.mrb[0].mxu0
        %v1383 = vadd.f32 %v1279, %v1382
        %v1384 = vpop.f32.mrb[0].mxu0
        %1385 = vmatprep.mubr.bf16.mxu0 0
        %1386 = vmatmul.mubr.bf16.gmra.mrb[0].mxu0 %v1245
        %v1387 = vpop.f32.mrb[0].mxu0
        %v1388 = vadd.f32 %v1279, %v1387
        %v1389 = vpop.f32.mrb[0].mxu0
        %v1390 = vpop.f32.mrb[0].mxu0
        %v1391 = vadd.f32 %v1279, %v1390
        %v1392 = vpop.f32.mrb[0].mxu0
        %1393 = vmatprep.mubr.bf16.mxu0 0
        %1394 = vmatmul.mubr.bf16.gmra.mrb[0].mxu0 %v1246
        %v1395 = vpop.f32.mrb[0].mxu0
        %v1396 = vadd.f32 %v1279, %v1395
        %v1397 = vpop.f32.mrb[0].mxu0
        %v1398 = vpop.f32.mrb[0].mxu0
        %v1399 = vadd.f32 %v1279, %v1398
        %v1400 = vpop.f32.mrb[0].mxu0
        %1401 = vmatprep.mubr.bf16.mxu0 0
        %1402 = vmatmul.mubr.bf16.gmra.mrb[0].mxu0 %v1247
        %v1403 = vpop.f32.mrb[0].mxu0
        %v1404 = vadd.f32 %v1279, %v1403
        %v1405 = vpop.f32.mrb[0].mxu0
        %v1406 = vpop.f32.mrb[0].mxu0
        %v1407 = vadd.f32 %v1279, %v1406
        %v1408 = vpop.f32.mrb[0].mxu0
        %1409 = vmatprep.mubr.bf16.mxu0 0
        %1410 = vmatmul.mubr.bf16.gmra.mrb[0].mxu0 %v1248
        %v1411 = vpop.f32.mrb[0].mxu0
        %v1412 = vadd.f32 %v1279, %v1411
        %v1413 = vpop.f32.mrb[0].mxu0
        %v1414 = vpop.f32.mrb[0].mxu0
        %v1415 = vadd.f32 %v1279, %v1414
        %v1416 = vpop.f32.mrb[0].mxu0
        %1417 = vmatprep.mubr.bf16.mxu0 0
        %1418 = vmatmul.mubr.bf16.gmra.mrb[0].mxu0 %v1249
        %v1419 = vpop.f32.mrb[0].mxu0
        %v1420 = vadd.f32 %v1279, %v1419
        %v1421 = vpop.f32.mrb[0].mxu0
        %v1422 = vpop.f32.mrb[0].mxu0
        %v1423 = vadd.f32 %v1279, %v1422
        %v1424 = vpop.f32.mrb[0].mxu0
        %1425 = vmatprep.mubr.bf16.mxu0 0
        %1426 = vmatmul.mubr.bf16.gmra.mrb[0].mxu0 %v1250
        %v1427 = vpop.f32.mrb[0].mxu0
        %v1428 = vadd.f32 %v1279, %v1427
        %v1429 = vpop.f32.mrb[0].mxu0
        %v1430 = vpop.f32.mrb[0].mxu0
        %v1431 = vadd.f32 %v1279, %v1430
        %v1432 = vpop.f32.mrb[0].mxu0
        %1433 = vmatprep.mubr.bf16.mxu0 0
        %1434 = vmatmul.mubr.bf16.gmra.mrb[0].mxu0 %v1251
        %v1435 = vpop.f32.mrb[0].mxu0
        %v1436 = vadd.f32 %v1279, %v1435
        %v1437 = vpop.f32.mrb[0].mxu0
        %v1438 = vpop.f32.mrb[0].mxu0
        %v1439 = vadd.f32 %v1279, %v1438
        %v1440 = vpop.f32.mrb[0].mxu0
        %1441 = vmatprep.mubr.bf16.mxu0 0
        %1442 = vmatmul.mubr.bf16.gmra.mrb[0].mxu0 %v1252
        %v1443 = vpop.f32.mrb[0].mxu0
        %v1444 = vadd.f32 %v1279, %v1443
        %v1445 = vpop.f32.mrb[0].mxu0
        %v1446 = vpop.f32.mrb[0].mxu0
        %v1447 = vadd.f32 %v1279, %v1446
        %v1448 = vpop.f32.mrb[0].mxu0
        %1449 = vmatprep.mubr.bf16.mxu0 0
        %1450 = vmatmul.mubr.bf16.gmra.mrb[0].mxu0 %v1253
        %v1451 = vpop.f32.mrb[0].mxu0
        %v1452 = vadd.f32 %v1279, %v1451
        %v1453 = vpop.f32.mrb[0].mxu0
        %v1454 = vpop.f32.mrb[0].mxu0
        %v1455 = vadd.f32 %v1279, %v1454
        %v1456 = vpop.f32.mrb[0].mxu0
        %1457 = vmatprep.mubr.bf16.mxu0 0
        %1458 = vmatmul.mubr.bf16.gmra.mrb[0].mxu0 %v1254
        %v1459 = vpop.f32.mrb[0].mxu0
        %v1460 = vadd.f32 %v1279, %v1459
        %v1461 = vpop.f32.mrb[0].mxu0
        %v1462 = vpop.f32.mrb[0].mxu0
        %v1463 = vadd.f32 %v1279, %v1462
        %v1464 = vpop.f32.mrb[0].mxu0
        %1465 = vmatprep.mubr.bf16.mxu0 0
        %1466 = vmatmul.mubr.bf16.gmra.mrb[0].mxu0 %v1255
        %v1467 = vpop.f32.mrb[0].mxu0
        %v1468 = vadd.f32 %v1279, %v1467
        %v1469 = vpop.f32.mrb[0].mxu0
        %v1470 = vpop.f32.mrb[0].mxu0
        %v1471 = vadd.f32 %v1279, %v1470
        %v1472 = vpop.f32.mrb[0].mxu0
        %1473 = vmatprep.mubr.bf16.mxu0 0
        %1474 = vmatmul.mubr.bf16.gmra.mrb[0].mxu0 %v1256
        %v1475 = vpop.f32.mrb[0].mxu0
        %v1476 = vadd.f32 %v1279, %v1475
        %v1477 = vpop.f32.mrb[0].mxu0
        %v1478 = vpop.f32.mrb[0].mxu0
        %v1479 = vadd.f32 %v1279, %v1478
        %v1480 = vpop.f32.mrb[0].mxu0
        %1481 = vmatprep.mubr.bf16.mxu0 0
        %1482 = vmatmul.mubr.bf16.gmra.mrb[0].mxu0 %v1257
        %v1483 = vpop.f32.mrb[0].mxu0
        %v1484 = vadd.f32 %v1279, %v1483
        %v1485 = vpop.f32.mrb[0].mxu0
        %v1486 = vpop.f32.mrb[0].mxu0
        %v1487 = vadd.f32 %v1279, %v1486
        %v1488 = vpop.f32.mrb[0].mxu0
        %1489 = vdwg.mxu0
        %v1490 = vtanh.pop %v1364
        %v1491 = vtanh.pop %v1367
        %v1492 = vtanh.pop %v1372
        %v1493 = vtanh.pop %v1375
        %v1494 = vtanh.pop %v1380
        %v1495 = vtanh.pop %v1383
        %v1496 = vtanh.pop %v1388
        %v1497 = vtanh.pop %v1391
        %v1498 = vtanh.pop %v1396
        %v1499 = vtanh.pop %v1399
        %v1500 = vtanh.pop %v1404
        %v1501 = vtanh.pop %v1407
        %v1502 = vtanh.pop %v1412
        %v1503 = vtanh.pop %v1415
        %v1504 = vtanh.pop %v1420
        %v1505 = vtanh.pop %v1423
        %v1506 = vtanh.pop %v1428
        %v1507 = vtanh.pop %v1431
        %v1508 = vtanh.pop %v1436
        %v1509 = vtanh.pop %v1439
        %v1510 = vtanh.pop %v1444
        %v1511 = vtanh.pop %v1447
        %v1512 = vtanh.pop %v1452
        %v1513 = vtanh.pop %v1455
        %v1514 = vtanh.pop %v1460
        %v1515 = vtanh.pop %v1463
        %v1516 = vtanh.pop %v1468
        %v1517 = vtanh.pop %v1471
        %v1518 = vtanh.pop %v1476
        %v1519 = vtanh.pop %v1479
        %v1520 = vtanh.pop %v1484
        %v1521 = vtanh.pop %v1487
        %v1522 = vpack.c.bf16 %v1491, %v1490
        %v1523 = vpack.c.bf16 %v1493, %v1492
        %v1524 = vpack.c.bf16 %v1495, %v1494
        %v1525 = vpack.c.bf16 %v1497, %v1496
        %v1526 = vpack.c.bf16 %v1499, %v1498
        %v1527 = vpack.c.bf16 %v1501, %v1500
        %v1528 = vpack.c.bf16 %v1503, %v1502
        %v1529 = vpack.c.bf16 %v1505, %v1504
        %v1530 = vpack.c.bf16 %v1507, %v1506
        %v1531 = vpack.c.bf16 %v1509, %v1508
        %v1532 = vpack.c.bf16 %v1511, %v1510
        %v1533 = vpack.c.bf16 %v1513, %v1512
        %v1534 = vpack.c.bf16 %v1515, %v1514
        %v1535 = vpack.c.bf16 %v1517, %v1516
        %v1536 = vpack.c.bf16 %v1519, %v1518
        %v1537 = vpack.c.bf16 %v1521, %v1520
        %v1538 = vld [vmem:[#allocation11] sm:$0xf]
        %v1539 = vld [vmem:[#allocation11 + $0x4] sm:$0xf]
        %v1540 = vld [vmem:[#allocation11 + $0x8] sm:$0xf]
        %v1541 = vld [vmem:[#allocation11 + $0xc] sm:$0xf]
        %v1542 = vld [vmem:[#allocation11 + $0x10] sm:$0xf]
        %v1543 = vld [vmem:[#allocation11 + $0x14] sm:$0xf]
        %v1544 = vld [vmem:[#allocation11 + $0x18] sm:$0xf]
        %v1545 = vld [vmem:[#allocation11 + $0x1c] sm:$0xf]
        %v1546 = vld [vmem:[#allocation11 + $0x20] sm:$0xf]
        %v1547 = vld [vmem:[#allocation11 + $0x24] sm:$0xf]
        %v1548 = vld [vmem:[#allocation11 + $0x28] sm:$0xf]
        %v1549 = vld [vmem:[#allocation11 + $0x2c] sm:$0xf]
        %v1550 = vld [vmem:[#allocation11 + $0x30] sm:$0xf]
        %v1551 = vld [vmem:[#allocation11 + $0x34] sm:$0xf]
        %v1552 = vld [vmem:[#allocation11 + $0x38] sm:$0xf]
        %v1553 = vld [vmem:[#allocation11 + $0x3c] sm:$0xf]
        %v1554 = vld [vmem:[%s8] sm:$0x1]
        %v1556 = vlaneseq
        %v1557 = vshrl.u32 %v1556, 7
        %v1558 = vsub.s32 0, %v1557
        %v1559 = vrot.slane %v1554, %v1558
        %v1577 = vunpack.c.l.b16 %v1538
        %v1578 = vunpack.c.l.b16 %v1539
        %v1579 = vunpack.c.l.b16 %v1540
        %v1580 = vunpack.c.l.b16 %v1541
        %v1581 = vunpack.c.l.b16 %v1542
        %v1582 = vunpack.c.l.b16 %v1543
        %v1583 = vunpack.c.l.b16 %v1544
        %v1584 = vunpack.c.l.b16 %v1545
        %v1585 = vunpack.c.l.b16 %v1546
        %v1586 = vunpack.c.l.b16 %v1547
        %v1587 = vunpack.c.l.b16 %v1548
        %v1588 = vunpack.c.l.b16 %v1549
        %v1589 = vunpack.c.l.b16 %v1550
        %v1590 = vunpack.c.l.b16 %v1551
        %v1591 = vunpack.c.l.b16 %v1552
        %v1592 = vunpack.c.l.b16 %v1553
        %v1593 = vpack.c.b16 %v1578, %v1577
        %v1594 = vpack.c.b16 %v1580, %v1579
        %v1595 = vpack.c.b16 %v1582, %v1581
        %v1596 = vpack.c.b16 %v1584, %v1583
        %v1597 = vpack.c.b16 %v1586, %v1585
        %v1598 = vpack.c.b16 %v1588, %v1587
        %v1599 = vpack.c.b16 %v1590, %v1589
        %v1600 = vpack.c.b16 %v1592, %v1591
        %1609 = vmatprep.subr.bf16.mxu0 0
        %1610 = vmatpush1.bf16.msra.mxu0 %v1593
        %1611 = vmatprep.subr.bf16.mxu0 0
        %1612 = vmatpush1.bf16.msra.mxu0 %v1594
        %1613 = vmatprep.subr.bf16.mxu0 0
        %1614 = vmatpush1.bf16.msra.mxu0 %v1595
        %1615 = vmatprep.subr.bf16.mxu0 0
        %1616 = vmatpush1.bf16.msra.mxu0 %v1596
        %1617 = vmatprep.subr.bf16.mxu0 0
        %1618 = vmatpush1.bf16.msra.mxu0 %v1597
        %1619 = vmatprep.subr.bf16.mxu0 0
        %1620 = vmatpush1.bf16.msra.mxu0 %v1598
        %1621 = vmatprep.subr.bf16.mxu0 0
        %1622 = vmatpush1.bf16.msra.mxu0 %v1599
        %1623 = vmatprep.subr.bf16.mxu0 0
        %1624 = vmatpush1.bf16.msra.mxu0 %v1600
        %1625 = vmatprep.subr.bf16.mxu0 0
        %1626 = vmatpush1.bf16.msra.mxu0 0
        %1627 = vmatprep.subr.bf16.mxu0 0
        %1628 = vmatpush1.bf16.msra.mxu0 0
        %1629 = vmatprep.subr.bf16.mxu0 0
        %1630 = vmatpush1.bf16.msra.mxu0 0
        %1631 = vmatprep.subr.bf16.mxu0 0
        %1632 = vmatpush1.bf16.msra.mxu0 0
        %1633 = vmatprep.subr.bf16.mxu0 0
        %1634 = vmatpush1.bf16.msra.mxu0 0
        %1635 = vmatprep.subr.bf16.mxu0 0
        %1636 = vmatpush1.bf16.msra.mxu0 0
        %1637 = vmatprep.subr.bf16.mxu0 0
        %1638 = vmatpush1.bf16.msra.mxu0 0
        %1639 = vmatprep.subr.bf16.mxu0 0
        %1640 = vmatpush1.bf16.msra.mxu0 0
        %1641 = vmatprep.mubr.bf16.mxu0 0
        %1642 = vmatmul.mubr.bf16.gmra.mrb[0].mxu0 %v1522
        %v1643 = vpop.f32.mrb[0].mxu0
        %v1644 = vadd.f32 %v1559, %v1643
        %v1645 = vpop.f32.mrb[0].mxu0
        %v1646 = vpop.f32.mrb[0].mxu0
        %v1647 = vadd.f32 %v1559, %v1646
        %v1648 = vpop.f32.mrb[0].mxu0
        %1649 = vmatprep.mubr.bf16.mxu0 0
        %1650 = vmatmul.mubr.bf16.gmra.mrb[0].mxu0 %v1523
        %v1651 = vpop.f32.mrb[0].mxu0
        %v1652 = vadd.f32 %v1559, %v1651
        %v1653 = vpop.f32.mrb[0].mxu0
        %v1654 = vpop.f32.mrb[0].mxu0
        %v1655 = vadd.f32 %v1559, %v1654
        %v1656 = vpop.f32.mrb[0].mxu0
        %1657 = vmatprep.mubr.bf16.mxu0 0
        %1658 = vmatmul.mubr.bf16.gmra.mrb[0].mxu0 %v1524
        %v1659 = vpop.f32.mrb[0].mxu0
        %v1660 = vadd.f32 %v1559, %v1659
        %v1661 = vpop.f32.mrb[0].mxu0
        %v1662 = vpop.f32.mrb[0].mxu0
        %v1663 = vadd.f32 %v1559, %v1662
        %v1664 = vpop.f32.mrb[0].mxu0
        %1665 = vmatprep.mubr.bf16.mxu0 0
        %1666 = vmatmul.mubr.bf16.gmra.mrb[0].mxu0 %v1525
        %v1667 = vpop.f32.mrb[0].mxu0
        %v1668 = vadd.f32 %v1559, %v1667
        %v1669 = vpop.f32.mrb[0].mxu0
        %v1670 = vpop.f32.mrb[0].mxu0
        %v1671 = vadd.f32 %v1559, %v1670
        %v1672 = vpop.f32.mrb[0].mxu0
        %1673 = vmatprep.mubr.bf16.mxu0 0
        %1674 = vmatmul.mubr.bf16.gmra.mrb[0].mxu0 %v1526
        %v1675 = vpop.f32.mrb[0].mxu0
        %v1676 = vadd.f32 %v1559, %v1675
        %v1677 = vpop.f32.mrb[0].mxu0
        %v1678 = vpop.f32.mrb[0].mxu0
        %v1679 = vadd.f32 %v1559, %v1678
        %v1680 = vpop.f32.mrb[0].mxu0
        %1681 = vmatprep.mubr.bf16.mxu0 0
        %1682 = vmatmul.mubr.bf16.gmra.mrb[0].mxu0 %v1527
        %v1683 = vpop.f32.mrb[0].mxu0
        %v1684 = vadd.f32 %v1559, %v1683
        %v1685 = vpop.f32.mrb[0].mxu0
        %v1686 = vpop.f32.mrb[0].mxu0
        %v1687 = vadd.f32 %v1559, %v1686
        %v1688 = vpop.f32.mrb[0].mxu0
        %1689 = vmatprep.mubr.bf16.mxu0 0
        %1690 = vmatmul.mubr.bf16.gmra.mrb[0].mxu0 %v1528
        %v1691 = vpop.f32.mrb[0].mxu0
        %v1692 = vadd.f32 %v1559, %v1691
        %v1693 = vpop.f32.mrb[0].mxu0
        %v1694 = vpop.f32.mrb[0].mxu0
        %v1695 = vadd.f32 %v1559, %v1694
        %v1696 = vpop.f32.mrb[0].mxu0
        %1697 = vmatprep.mubr.bf16.mxu0 0
        %1698 = vmatmul.mubr.bf16.gmra.mrb[0].mxu0 %v1529
        %v1699 = vpop.f32.mrb[0].mxu0
        %v1700 = vadd.f32 %v1559, %v1699
        %v1701 = vpop.f32.mrb[0].mxu0
        %v1702 = vpop.f32.mrb[0].mxu0
        %v1703 = vadd.f32 %v1559, %v1702
        %v1704 = vpop.f32.mrb[0].mxu0
        %1705 = vmatprep.mubr.bf16.mxu0 0
        %1706 = vmatmul.mubr.bf16.gmra.mrb[0].mxu0 %v1530
        %v1707 = vpop.f32.mrb[0].mxu0
        %v1708 = vadd.f32 %v1559, %v1707
        %v1709 = vpop.f32.mrb[0].mxu0
        %v1710 = vpop.f32.mrb[0].mxu0
        %v1711 = vadd.f32 %v1559, %v1710
        %v1712 = vpop.f32.mrb[0].mxu0
        %1713 = vmatprep.mubr.bf16.mxu0 0
        %1714 = vmatmul.mubr.bf16.gmra.mrb[0].mxu0 %v1531
        %v1715 = vpop.f32.mrb[0].mxu0
        %v1716 = vadd.f32 %v1559, %v1715
        %v1717 = vpop.f32.mrb[0].mxu0
        %v1718 = vpop.f32.mrb[0].mxu0
        %v1719 = vadd.f32 %v1559, %v1718
        %v1720 = vpop.f32.mrb[0].mxu0
        %1721 = vmatprep.mubr.bf16.mxu0 0
        %1722 = vmatmul.mubr.bf16.gmra.mrb[0].mxu0 %v1532
        %v1723 = vpop.f32.mrb[0].mxu0
        %v1724 = vadd.f32 %v1559, %v1723
        %v1725 = vpop.f32.mrb[0].mxu0
        %v1726 = vpop.f32.mrb[0].mxu0
        %v1727 = vadd.f32 %v1559, %v1726
        %v1728 = vpop.f32.mrb[0].mxu0
        %1729 = vmatprep.mubr.bf16.mxu0 0
        %1730 = vmatmul.mubr.bf16.gmra.mrb[0].mxu0 %v1533
        %v1731 = vpop.f32.mrb[0].mxu0
        %v1732 = vadd.f32 %v1559, %v1731
        %v1733 = vpop.f32.mrb[0].mxu0
        %v1734 = vpop.f32.mrb[0].mxu0
        %v1735 = vadd.f32 %v1559, %v1734
        %v1736 = vpop.f32.mrb[0].mxu0
        %1737 = vmatprep.mubr.bf16.mxu0 0
        %1738 = vmatmul.mubr.bf16.gmra.mrb[0].mxu0 %v1534
        %v1739 = vpop.f32.mrb[0].mxu0
        %v1740 = vadd.f32 %v1559, %v1739
        %v1741 = vpop.f32.mrb[0].mxu0
        %v1742 = vpop.f32.mrb[0].mxu0
        %v1743 = vadd.f32 %v1559, %v1742
        %v1744 = vpop.f32.mrb[0].mxu0
        %1745 = vmatprep.mubr.bf16.mxu0 0
        %1746 = vmatmul.mubr.bf16.gmra.mrb[0].mxu0 %v1535
        %v1747 = vpop.f32.mrb[0].mxu0
        %v1748 = vadd.f32 %v1559, %v1747
        %v1749 = vpop.f32.mrb[0].mxu0
        %v1750 = vpop.f32.mrb[0].mxu0
        %v1751 = vadd.f32 %v1559, %v1750
        %v1752 = vpop.f32.mrb[0].mxu0
        %1753 = vmatprep.mubr.bf16.mxu0 0
        %1754 = vmatmul.mubr.bf16.gmra.mrb[0].mxu0 %v1536
        %v1755 = vpop.f32.mrb[0].mxu0
        %v1756 = vadd.f32 %v1559, %v1755
        %v1757 = vpop.f32.mrb[0].mxu0
        %v1758 = vpop.f32.mrb[0].mxu0
        %v1759 = vadd.f32 %v1559, %v1758
        %v1760 = vpop.f32.mrb[0].mxu0
        %1761 = vmatprep.mubr.bf16.mxu0 0
        %1762 = vmatmul.mubr.bf16.gmra.mrb[0].mxu0 %v1537
        %v1763 = vpop.f32.mrb[0].mxu0
        %v1764 = vadd.f32 %v1559, %v1763
        %v1765 = vpop.f32.mrb[0].mxu0
        %v1766 = vpop.f32.mrb[0].mxu0
        %v1767 = vadd.f32 %v1559, %v1766
        %v1768 = vpop.f32.mrb[0].mxu0
        %1769 = vdwg.mxu0
        %v1770 = vtanh.pop %v1644
        %v1771 = vtanh.pop %v1647
        %v1772 = vtanh.pop %v1652
        %v1773 = vtanh.pop %v1655
        %v1774 = vtanh.pop %v1660
        %v1775 = vtanh.pop %v1663
        %v1776 = vtanh.pop %v1668
        %v1777 = vtanh.pop %v1671
        %v1778 = vtanh.pop %v1676
        %v1779 = vtanh.pop %v1679
        %v1780 = vtanh.pop %v1684
        %v1781 = vtanh.pop %v1687
        %v1782 = vtanh.pop %v1692
        %v1783 = vtanh.pop %v1695
        %v1784 = vtanh.pop %v1700
        %v1785 = vtanh.pop %v1703
        %v1786 = vtanh.pop %v1708
        %v1787 = vtanh.pop %v1711
        %v1788 = vtanh.pop %v1716
        %v1789 = vtanh.pop %v1719
        %v1790 = vtanh.pop %v1724
        %v1791 = vtanh.pop %v1727
        %v1792 = vtanh.pop %v1732
        %v1793 = vtanh.pop %v1735
        %v1794 = vtanh.pop %v1740
        %v1795 = vtanh.pop %v1743
        %v1796 = vtanh.pop %v1748
        %v1797 = vtanh.pop %v1751
        %v1798 = vtanh.pop %v1756
        %v1799 = vtanh.pop %v1759
        %v1800 = vtanh.pop %v1764
        %v1801 = vtanh.pop %v1767
        %v1802 = vpack.c.bf16 %v1771, %v1770
        %v1803 = vpack.c.bf16 %v1773, %v1772
        %v1804 = vpack.c.bf16 %v1775, %v1774
        %v1805 = vpack.c.bf16 %v1777, %v1776
        %v1806 = vpack.c.bf16 %v1779, %v1778
        %v1807 = vpack.c.bf16 %v1781, %v1780
        %v1808 = vpack.c.bf16 %v1783, %v1782
        %v1809 = vpack.c.bf16 %v1785, %v1784
        %v1810 = vpack.c.bf16 %v1787, %v1786
        %v1811 = vpack.c.bf16 %v1789, %v1788
        %v1812 = vpack.c.bf16 %v1791, %v1790
        %v1813 = vpack.c.bf16 %v1793, %v1792
        %v1814 = vpack.c.bf16 %v1795, %v1794
        %v1815 = vpack.c.bf16 %v1797, %v1796
        %v1816 = vpack.c.bf16 %v1799, %v1798
        %v1817 = vpack.c.bf16 %v1801, %v1800
        %v1818 = vld [vmem:[#allocation12] sm:$0xf]
        %v1819 = vld [vmem:[#allocation12 + $0x4] sm:$0xf]
        %v1820 = vld [vmem:[#allocation12 + $0x8] sm:$0xf]
        %v1821 = vld [vmem:[#allocation12 + $0xc] sm:$0xf]
        %v1822 = vld [vmem:[#allocation12 + $0x10] sm:$0xf]
        %v1823 = vld [vmem:[#allocation12 + $0x14] sm:$0xf]
        %v1824 = vld [vmem:[#allocation12 + $0x18] sm:$0xf]
        %v1825 = vld [vmem:[#allocation12 + $0x1c] sm:$0xf]
        %v1826 = vld [vmem:[#allocation12 + $0x20] sm:$0xf]
        %v1827 = vld [vmem:[#allocation12 + $0x24] sm:$0xf]
        %v1828 = vld [vmem:[#allocation12 + $0x28] sm:$0xf]
        %v1829 = vld [vmem:[#allocation12 + $0x2c] sm:$0xf]
        %v1830 = vld [vmem:[#allocation12 + $0x30] sm:$0xf]
        %v1831 = vld [vmem:[#allocation12 + $0x34] sm:$0xf]
        %v1832 = vld [vmem:[#allocation12 + $0x38] sm:$0xf]
        %v1833 = vld [vmem:[#allocation12 + $0x3c] sm:$0xf]
        %v1834 = vld [vmem:[%s10] sm:$0x1]
        %v1836 = vlaneseq
        %v1837 = vshrl.u32 %v1836, 7
        %v1838 = vsub.s32 0, %v1837
        %v1839 = vrot.slane %v1834, %v1838
        %v1857 = vunpack.c.l.b16 %v1818
        %v1858 = vunpack.c.l.b16 %v1819
        %v1859 = vunpack.c.l.b16 %v1820
        %v1860 = vunpack.c.l.b16 %v1821
        %v1861 = vunpack.c.l.b16 %v1822
        %v1862 = vunpack.c.l.b16 %v1823
        %v1863 = vunpack.c.l.b16 %v1824
        %v1864 = vunpack.c.l.b16 %v1825
        %v1865 = vunpack.c.l.b16 %v1826
        %v1866 = vunpack.c.l.b16 %v1827
        %v1867 = vunpack.c.l.b16 %v1828
        %v1868 = vunpack.c.l.b16 %v1829
        %v1869 = vunpack.c.l.b16 %v1830
        %v1870 = vunpack.c.l.b16 %v1831
        %v1871 = vunpack.c.l.b16 %v1832
        %v1872 = vunpack.c.l.b16 %v1833
        %v1873 = vpack.c.b16 %v1858, %v1857
        %v1874 = vpack.c.b16 %v1860, %v1859
        %v1875 = vpack.c.b16 %v1862, %v1861
        %v1876 = vpack.c.b16 %v1864, %v1863
        %v1877 = vpack.c.b16 %v1866, %v1865
        %v1878 = vpack.c.b16 %v1868, %v1867
        %v1879 = vpack.c.b16 %v1870, %v1869
        %v1880 = vpack.c.b16 %v1872, %v1871
        %1889 = vmatprep.subr.bf16.mxu0 0
        %1890 = vmatpush1.bf16.msra.mxu0 %v1873
        %1891 = vmatprep.subr.bf16.mxu0 0
        %1892 = vmatpush1.bf16.msra.mxu0 %v1874
        %1893 = vmatprep.subr.bf16.mxu0 0
        %1894 = vmatpush1.bf16.msra.mxu0 %v1875
        %1895 = vmatprep.subr.bf16.mxu0 0
        %1896 = vmatpush1.bf16.msra.mxu0 %v1876
        %1897 = vmatprep.subr.bf16.mxu0 0
        %1898 = vmatpush1.bf16.msra.mxu0 %v1877
        %1899 = vmatprep.subr.bf16.mxu0 0
        %1900 = vmatpush1.bf16.msra.mxu0 %v1878
        %1901 = vmatprep.subr.bf16.mxu0 0
        %1902 = vmatpush1.bf16.msra.mxu0 %v1879
        %1903 = vmatprep.subr.bf16.mxu0 0
        %1904 = vmatpush1.bf16.msra.mxu0 %v1880
        %1905 = vmatprep.subr.bf16.mxu0 0
        %1906 = vmatpush1.bf16.msra.mxu0 0
        %1907 = vmatprep.subr.bf16.mxu0 0
        %1908 = vmatpush1.bf16.msra.mxu0 0
        %1909 = vmatprep.subr.bf16.mxu0 0
        %1910 = vmatpush1.bf16.msra.mxu0 0
        %1911 = vmatprep.subr.bf16.mxu0 0
        %1912 = vmatpush1.bf16.msra.mxu0 0
        %1913 = vmatprep.subr.bf16.mxu0 0
        %1914 = vmatpush1.bf16.msra.mxu0 0
        %1915 = vmatprep.subr.bf16.mxu0 0
        %1916 = vmatpush1.bf16.msra.mxu0 0
        %1917 = vmatprep.subr.bf16.mxu0 0
        %1918 = vmatpush1.bf16.msra.mxu0 0
        %1919 = vmatprep.subr.bf16.mxu0 0
        %1920 = vmatpush1.bf16.msra.mxu0 0
        %1921 = vmatprep.mubr.bf16.mxu0 0
        %1922 = vmatmul.mubr.bf16.gmra.mrb[0].mxu0 %v1802
        %v1923 = vpop.f32.mrb[0].mxu0
        %v1924 = vadd.f32 %v1839, %v1923
        %v1925 = vpop.f32.mrb[0].mxu0
        %v1926 = vpop.f32.mrb[0].mxu0
        %v1927 = vadd.f32 %v1839, %v1926
        %v1928 = vpop.f32.mrb[0].mxu0
        %1929 = vmatprep.mubr.bf16.mxu0 0
        %1930 = vmatmul.mubr.bf16.gmra.mrb[0].mxu0 %v1803
        %v1931 = vpop.f32.mrb[0].mxu0
        %v1932 = vadd.f32 %v1839, %v1931
        %v1933 = vpop.f32.mrb[0].mxu0
        %v1934 = vpop.f32.mrb[0].mxu0
        %v1935 = vadd.f32 %v1839, %v1934
        %v1936 = vpop.f32.mrb[0].mxu0
        %1937 = vmatprep.mubr.bf16.mxu0 0
        %1938 = vmatmul.mubr.bf16.gmra.mrb[0].mxu0 %v1804
        %v1939 = vpop.f32.mrb[0].mxu0
        %v1940 = vadd.f32 %v1839, %v1939
        %v1941 = vpop.f32.mrb[0].mxu0
        %v1942 = vpop.f32.mrb[0].mxu0
        %v1943 = vadd.f32 %v1839, %v1942
        %v1944 = vpop.f32.mrb[0].mxu0
        %1945 = vmatprep.mubr.bf16.mxu0 0
        %1946 = vmatmul.mubr.bf16.gmra.mrb[0].mxu0 %v1805
        %v1947 = vpop.f32.mrb[0].mxu0
        %v1948 = vadd.f32 %v1839, %v1947
        %v1949 = vpop.f32.mrb[0].mxu0
        %v1950 = vpop.f32.mrb[0].mxu0
        %v1951 = vadd.f32 %v1839, %v1950
        %v1952 = vpop.f32.mrb[0].mxu0
        %1953 = vmatprep.mubr.bf16.mxu0 0
        %1954 = vmatmul.mubr.bf16.gmra.mrb[0].mxu0 %v1806
        %v1955 = vpop.f32.mrb[0].mxu0
        %v1956 = vadd.f32 %v1839, %v1955
        %v1957 = vpop.f32.mrb[0].mxu0
        %v1958 = vpop.f32.mrb[0].mxu0
        %v1959 = vadd.f32 %v1839, %v1958
        %v1960 = vpop.f32.mrb[0].mxu0
        %1961 = vmatprep.mubr.bf16.mxu0 0
        %1962 = vmatmul.mubr.bf16.gmra.mrb[0].mxu0 %v1807
        %v1963 = vpop.f32.mrb[0].mxu0
        %v1964 = vadd.f32 %v1839, %v1963
        %v1965 = vpop.f32.mrb[0].mxu0
        %v1966 = vpop.f32.mrb[0].mxu0
        %v1967 = vadd.f32 %v1839, %v1966
        %v1968 = vpop.f32.mrb[0].mxu0
        %1969 = vmatprep.mubr.bf16.mxu0 0
        %1970 = vmatmul.mubr.bf16.gmra.mrb[0].mxu0 %v1808
        %v1971 = vpop.f32.mrb[0].mxu0
        %v1972 = vadd.f32 %v1839, %v1971
        %v1973 = vpop.f32.mrb[0].mxu0
        %v1974 = vpop.f32.mrb[0].mxu0
        %v1975 = vadd.f32 %v1839, %v1974
        %v1976 = vpop.f32.mrb[0].mxu0
        %1977 = vmatprep.mubr.bf16.mxu0 0
        %1978 = vmatmul.mubr.bf16.gmra.mrb[0].mxu0 %v1809
        %v1979 = vpop.f32.mrb[0].mxu0
        %v1980 = vadd.f32 %v1839, %v1979
        %v1981 = vpop.f32.mrb[0].mxu0
        %v1982 = vpop.f32.mrb[0].mxu0
        %v1983 = vadd.f32 %v1839, %v1982
        %v1984 = vpop.f32.mrb[0].mxu0
        %1985 = vmatprep.mubr.bf16.mxu0 0
        %1986 = vmatmul.mubr.bf16.gmra.mrb[0].mxu0 %v1810
        %v1987 = vpop.f32.mrb[0].mxu0
        %v1988 = vadd.f32 %v1839, %v1987
        %v1989 = vpop.f32.mrb[0].mxu0
        %v1990 = vpop.f32.mrb[0].mxu0
        %v1991 = vadd.f32 %v1839, %v1990
        %v1992 = vpop.f32.mrb[0].mxu0
        %1993 = vmatprep.mubr.bf16.mxu0 0
        %1994 = vmatmul.mubr.bf16.gmra.mrb[0].mxu0 %v1811
        %v1995 = vpop.f32.mrb[0].mxu0
        %v1996 = vadd.f32 %v1839, %v1995
        %v1997 = vpop.f32.mrb[0].mxu0
        %v1998 = vpop.f32.mrb[0].mxu0
        %v1999 = vadd.f32 %v1839, %v1998
        %v2000 = vpop.f32.mrb[0].mxu0
        %2001 = vmatprep.mubr.bf16.mxu0 0
        %2002 = vmatmul.mubr.bf16.gmra.mrb[0].mxu0 %v1812
        %v2003 = vpop.f32.mrb[0].mxu0
        %v2004 = vadd.f32 %v1839, %v2003
        %v2005 = vpop.f32.mrb[0].mxu0
        %v2006 = vpop.f32.mrb[0].mxu0
        %v2007 = vadd.f32 %v1839, %v2006
        %v2008 = vpop.f32.mrb[0].mxu0
        %2009 = vmatprep.mubr.bf16.mxu0 0
        %2010 = vmatmul.mubr.bf16.gmra.mrb[0].mxu0 %v1813
        %v2011 = vpop.f32.mrb[0].mxu0
        %v2012 = vadd.f32 %v1839, %v2011
        %v2013 = vpop.f32.mrb[0].mxu0
        %v2014 = vpop.f32.mrb[0].mxu0
        %v2015 = vadd.f32 %v1839, %v2014
        %v2016 = vpop.f32.mrb[0].mxu0
        %2017 = vmatprep.mubr.bf16.mxu0 0
        %2018 = vmatmul.mubr.bf16.gmra.mrb[0].mxu0 %v1814
        %v2019 = vpop.f32.mrb[0].mxu0
        %v2020 = vadd.f32 %v1839, %v2019
        %v2021 = vpop.f32.mrb[0].mxu0
        %v2022 = vpop.f32.mrb[0].mxu0
        %v2023 = vadd.f32 %v1839, %v2022
        %v2024 = vpop.f32.mrb[0].mxu0
        %2025 = vmatprep.mubr.bf16.mxu0 0
        %2026 = vmatmul.mubr.bf16.gmra.mrb[0].mxu0 %v1815
        %v2027 = vpop.f32.mrb[0].mxu0
        %v2028 = vadd.f32 %v1839, %v2027
        %v2029 = vpop.f32.mrb[0].mxu0
        %v2030 = vpop.f32.mrb[0].mxu0
        %v2031 = vadd.f32 %v1839, %v2030
        %v2032 = vpop.f32.mrb[0].mxu0
        %2033 = vmatprep.mubr.bf16.mxu0 0
        %2034 = vmatmul.mubr.bf16.gmra.mrb[0].mxu0 %v1816
        %v2035 = vpop.f32.mrb[0].mxu0
        %v2036 = vadd.f32 %v1839, %v2035
        %v2037 = vpop.f32.mrb[0].mxu0
        %v2038 = vpop.f32.mrb[0].mxu0
        %v2039 = vadd.f32 %v1839, %v2038
        %v2040 = vpop.f32.mrb[0].mxu0
        %2041 = vmatprep.mubr.bf16.mxu0 0
        %2042 = vmatmul.mubr.bf16.gmra.mrb[0].mxu0 %v1817
        %v2043 = vpop.f32.mrb[0].mxu0
        %v2044 = vadd.f32 %v1839, %v2043
        %v2045 = vpop.f32.mrb[0].mxu0
        %v2046 = vpop.f32.mrb[0].mxu0
        %v2047 = vadd.f32 %v1839, %v2046
        %v2048 = vpop.f32.mrb[0].mxu0
        %2049 = vdwg.mxu0
        %v2050 = vtanh.pop %v1924
        %v2051 = vtanh.pop %v1927
        %v2052 = vtanh.pop %v1932
        %v2053 = vtanh.pop %v1935
        %v2054 = vtanh.pop %v1940
        %v2055 = vtanh.pop %v1943
        %v2056 = vtanh.pop %v1948
        %v2057 = vtanh.pop %v1951
        %v2058 = vtanh.pop %v1956
        %v2059 = vtanh.pop %v1959
        %v2060 = vtanh.pop %v1964
        %v2061 = vtanh.pop %v1967
        %v2062 = vtanh.pop %v1972
        %v2063 = vtanh.pop %v1975
        %v2064 = vtanh.pop %v1980
        %v2065 = vtanh.pop %v1983
        %v2066 = vtanh.pop %v1988
        %v2067 = vtanh.pop %v1991
        %v2068 = vtanh.pop %v1996
        %v2069 = vtanh.pop %v1999
        %v2070 = vtanh.pop %v2004
        %v2071 = vtanh.pop %v2007
        %v2072 = vtanh.pop %v2012
        %v2073 = vtanh.pop %v2015
        %v2074 = vtanh.pop %v2020
        %v2075 = vtanh.pop %v2023
        %v2076 = vtanh.pop %v2028
        %v2077 = vtanh.pop %v2031
        %v2078 = vtanh.pop %v2036
        %v2079 = vtanh.pop %v2039
        %v2080 = vtanh.pop %v2044
        %v2081 = vtanh.pop %v2047
        %v2082 = vpack.c.bf16 %v2051, %v2050
        %v2083 = vpack.c.bf16 %v2053, %v2052
        %v2084 = vpack.c.bf16 %v2055, %v2054
        %v2085 = vpack.c.bf16 %v2057, %v2056
        %v2086 = vpack.c.bf16 %v2059, %v2058
        %v2087 = vpack.c.bf16 %v2061, %v2060
        %v2088 = vpack.c.bf16 %v2063, %v2062
        %v2089 = vpack.c.bf16 %v2065, %v2064
        %v2090 = vpack.c.bf16 %v2067, %v2066
        %v2091 = vpack.c.bf16 %v2069, %v2068
        %v2092 = vpack.c.bf16 %v2071, %v2070
        %v2093 = vpack.c.bf16 %v2073, %v2072
        %v2094 = vpack.c.bf16 %v2075, %v2074
        %v2095 = vpack.c.bf16 %v2077, %v2076
        %v2096 = vpack.c.bf16 %v2079, %v2078
        %v2097 = vpack.c.bf16 %v2081, %v2080
        %v2098 = vunpack.c.l.bf16 %v2082
        %v2099 = vunpack.c.h.bf16 %v2082
        %v2100 = vunpack.c.l.bf16 %v2083
        %v2101 = vunpack.c.h.bf16 %v2083
        %v2102 = vunpack.c.l.bf16 %v2084
        %v2103 = vunpack.c.h.bf16 %v2084
        %v2104 = vunpack.c.l.bf16 %v2085
        %v2105 = vunpack.c.h.bf16 %v2085
        %v2106 = vunpack.c.l.bf16 %v2086
        %v2107 = vunpack.c.h.bf16 %v2086
        %v2108 = vunpack.c.l.bf16 %v2087
        %v2109 = vunpack.c.h.bf16 %v2087
        %v2110 = vunpack.c.l.bf16 %v2088
        %v2111 = vunpack.c.h.bf16 %v2088
        %v2112 = vunpack.c.l.bf16 %v2089
        %v2113 = vunpack.c.h.bf16 %v2089
        %v2114 = vunpack.c.l.bf16 %v2090
        %v2115 = vunpack.c.h.bf16 %v2090
        %v2116 = vunpack.c.l.bf16 %v2091
        %v2117 = vunpack.c.h.bf16 %v2091
        %v2118 = vunpack.c.l.bf16 %v2092
        %v2119 = vunpack.c.h.bf16 %v2092
        %v2120 = vunpack.c.l.bf16 %v2093
        %v2121 = vunpack.c.h.bf16 %v2093
        %v2122 = vunpack.c.l.bf16 %v2094
        %v2123 = vunpack.c.h.bf16 %v2094
        %v2124 = vunpack.c.l.bf16 %v2095
        %v2125 = vunpack.c.h.bf16 %v2095
        %v2126 = vunpack.c.l.bf16 %v2096
        %v2127 = vunpack.c.h.bf16 %v2096
        %v2128 = vunpack.c.l.bf16 %v2097
        %v2129 = vunpack.c.h.bf16 %v2097
        %v2130 = vld [vmem:[%s11] sm:$0x1]
        %v2132 = vlaneseq
        %v2133 = vshrl.u32 %v2132, 7
        %v2134 = vsub.s32 0, %v2133
        %v2135 = vrot.slane %v2130, %v2134
        %v2137 = vmul.f32 %v2098, %v2135
        %v2138 = vmul.f32 %v2099, %v2135
        %v2139 = vmul.f32 %v2100, %v2135
        %v2140 = vmul.f32 %v2101, %v2135
        %v2141 = vmul.f32 %v2102, %v2135
        %v2142 = vmul.f32 %v2103, %v2135
        %v2143 = vmul.f32 %v2104, %v2135
        %v2144 = vmul.f32 %v2105, %v2135
        %v2145 = vmul.f32 %v2106, %v2135
        %v2146 = vmul.f32 %v2107, %v2135
        %v2147 = vmul.f32 %v2108, %v2135
        %v2148 = vmul.f32 %v2109, %v2135
        %v2149 = vmul.f32 %v2110, %v2135
        %v2150 = vmul.f32 %v2111, %v2135
        %v2151 = vmul.f32 %v2112, %v2135
        %v2152 = vmul.f32 %v2113, %v2135
        %v2153 = vmul.f32 %v2114, %v2135
        %v2154 = vmul.f32 %v2115, %v2135
        %v2155 = vmul.f32 %v2116, %v2135
        %v2156 = vmul.f32 %v2117, %v2135
        %v2157 = vmul.f32 %v2118, %v2135
        %v2158 = vmul.f32 %v2119, %v2135
        %v2159 = vmul.f32 %v2120, %v2135
        %v2160 = vmul.f32 %v2121, %v2135
        %v2161 = vmul.f32 %v2122, %v2135
        %v2162 = vmul.f32 %v2123, %v2135
        %v2163 = vmul.f32 %v2124, %v2135
        %v2164 = vmul.f32 %v2125, %v2135
        %v2165 = vmul.f32 %v2126, %v2135
        %v2166 = vmul.f32 %v2127, %v2135
        %v2167 = vmul.f32 %v2128, %v2135
        %v2168 = vmul.f32 %v2129, %v2135
        %2169 = vadd.xlane.f32.xlu0 %v2137
        %v2170 = vpop.xlane.xlu0 %2169
        %2171 = vadd.xlane.f32.xlu0 %v2138
        %v2172 = vpop.xlane.xlu0 %2171
        %2173 = vadd.xlane.f32.xlu0 %v2139
        %v2174 = vpop.xlane.xlu0 %2173
        %2175 = vadd.xlane.f32.xlu0 %v2140
        %v2176 = vpop.xlane.xlu0 %2175
        %2177 = vadd.xlane.f32.xlu0 %v2141
        %v2178 = vpop.xlane.xlu0 %2177
        %2179 = vadd.xlane.f32.xlu0 %v2142
        %v2180 = vpop.xlane.xlu0 %2179
        %2181 = vadd.xlane.f32.xlu0 %v2143
        %v2182 = vpop.xlane.xlu0 %2181
        %2183 = vadd.xlane.f32.xlu0 %v2144
        %v2184 = vpop.xlane.xlu0 %2183
        %2185 = vadd.xlane.f32.xlu0 %v2145
        %v2186 = vpop.xlane.xlu0 %2185
        %2187 = vadd.xlane.f32.xlu0 %v2146
        %v2188 = vpop.xlane.xlu0 %2187
        %2189 = vadd.xlane.f32.xlu0 %v2147
        %v2190 = vpop.xlane.xlu0 %2189
        %2191 = vadd.xlane.f32.xlu0 %v2148
        %v2192 = vpop.xlane.xlu0 %2191
        %2193 = vadd.xlane.f32.xlu0 %v2149
        %v2194 = vpop.xlane.xlu0 %2193
        %2195 = vadd.xlane.f32.xlu0 %v2150
        %v2196 = vpop.xlane.xlu0 %2195
        %2197 = vadd.xlane.f32.xlu0 %v2151
        %v2198 = vpop.xlane.xlu0 %2197
        %2199 = vadd.xlane.f32.xlu0 %v2152
        %v2200 = vpop.xlane.xlu0 %2199
        %2201 = vadd.xlane.f32.xlu0 %v2153
        %v2202 = vpop.xlane.xlu0 %2201
        %2203 = vadd.xlane.f32.xlu0 %v2154
        %v2204 = vpop.xlane.xlu0 %2203
        %2205 = vadd.xlane.f32.xlu0 %v2155
        %v2206 = vpop.xlane.xlu0 %2205
        %2207 = vadd.xlane.f32.xlu0 %v2156
        %v2208 = vpop.xlane.xlu0 %2207
        %2209 = vadd.xlane.f32.xlu0 %v2157
        %v2210 = vpop.xlane.xlu0 %2209
        %2211 = vadd.xlane.f32.xlu0 %v2158
        %v2212 = vpop.xlane.xlu0 %2211
        %2213 = vadd.xlane.f32.xlu0 %v2159
        %v2214 = vpop.xlane.xlu0 %2213
        %2215 = vadd.xlane.f32.xlu0 %v2160
        %v2216 = vpop.xlane.xlu0 %2215
        %2217 = vadd.xlane.f32.xlu0 %v2161
        %v2218 = vpop.xlane.xlu0 %2217
        %2219 = vadd.xlane.f32.xlu0 %v2162
        %v2220 = vpop.xlane.xlu0 %2219
        %2221 = vadd.xlane.f32.xlu0 %v2163
        %v2222 = vpop.xlane.xlu0 %2221
        %2223 = vadd.xlane.f32.xlu0 %v2164
        %v2224 = vpop.xlane.xlu0 %2223
        %2225 = vadd.xlane.f32.xlu0 %v2165
        %v2226 = vpop.xlane.xlu0 %2225
        %2227 = vadd.xlane.f32.xlu0 %v2166
        %v2228 = vpop.xlane.xlu0 %2227
        %2229 = vadd.xlane.f32.xlu0 %v2167
        %v2230 = vpop.xlane.xlu0 %2229
        %2231 = vadd.xlane.f32.xlu0 %v2168
        %v2232 = vpop.xlane.xlu0 %2231
        %v2233 = vld [vmem:[#allocation2] sm:$0x1]
        %2235 = vset.pattern.permute.xlu0 0
        %2236 = vperm.xlu0 %2235, %v2233
        %v2237 = vpop.permute.xlu0 %2236
        %v2239 = vlaneseq
        %v2240 = vshrl.u32 %v2239, 7
        %v2241 = vsub.s32 0, %v2240
        %v2242 = vrot.slane %v2237, %v2241
        %v2243 = vadd.f32 %v2170, %v2242
        %v2244 = vadd.f32 %v2172, %v2242
        %v2245 = vadd.f32 %v2174, %v2242
        %v2246 = vadd.f32 %v2176, %v2242
        %v2247 = vadd.f32 %v2178, %v2242
        %v2248 = vadd.f32 %v2180, %v2242
        %v2249 = vadd.f32 %v2182, %v2242
        %v2250 = vadd.f32 %v2184, %v2242
        %v2251 = vadd.f32 %v2186, %v2242
        %v2252 = vadd.f32 %v2188, %v2242
        %v2253 = vadd.f32 %v2190, %v2242
        %v2254 = vadd.f32 %v2192, %v2242
        %v2255 = vadd.f32 %v2194, %v2242
        %v2256 = vadd.f32 %v2196, %v2242
        %v2257 = vadd.f32 %v2198, %v2242
        %v2258 = vadd.f32 %v2200, %v2242
        %v2259 = vadd.f32 %v2202, %v2242
        %v2260 = vadd.f32 %v2204, %v2242
        %v2261 = vadd.f32 %v2206, %v2242
        %v2262 = vadd.f32 %v2208, %v2242
        %v2263 = vadd.f32 %v2210, %v2242
        %v2264 = vadd.f32 %v2212, %v2242
        %v2265 = vadd.f32 %v2214, %v2242
        %v2266 = vadd.f32 %v2216, %v2242
        %v2267 = vadd.f32 %v2218, %v2242
        %v2268 = vadd.f32 %v2220, %v2242
        %v2269 = vadd.f32 %v2222, %v2242
        %v2270 = vadd.f32 %v2224, %v2242
        %v2271 = vadd.f32 %v2226, %v2242
        %v2272 = vadd.f32 %v2228, %v2242
        %v2273 = vadd.f32 %v2230, %v2242
        %v2274 = vadd.f32 %v2232, %v2242
        %v2307 = vlaneseq
        %v2308 = vshrl.u32 %v2307, 7
        %v2309 = vsub.s32 0, %v2308
        %v2310 = vrot.slane %v2243, %v2309
        %v2311 = vlaneseq
        %v2312 = vshrl.u32 %v2311, 7
        %v2313 = vsub.s32 1, %v2312
        %v2314 = vrot.slane %v2243, %v2313
        %v2315 = vlaneseq
        %v2316 = vshrl.u32 %v2315, 7
        %v2317 = vsub.s32 2, %v2316
        %v2318 = vrot.slane %v2243, %v2317
        %v2319 = vlaneseq
        %v2320 = vshrl.u32 %v2319, 7
        %v2321 = vsub.s32 3, %v2320
        %v2322 = vrot.slane %v2243, %v2321
        %v2323 = vlaneseq
        %v2324 = vshrl.u32 %v2323, 7
        %v2325 = vsub.s32 4, %v2324
        %v2326 = vrot.slane %v2243, %v2325
        %v2327 = vlaneseq
        %v2328 = vshrl.u32 %v2327, 7
        %v2329 = vsub.s32 5, %v2328
        %v2330 = vrot.slane %v2243, %v2329
        %v2331 = vlaneseq
        %v2332 = vshrl.u32 %v2331, 7
        %v2333 = vsub.s32 6, %v2332
        %v2334 = vrot.slane %v2243, %v2333
        %v2335 = vlaneseq
        %v2336 = vshrl.u32 %v2335, 7
        %v2337 = vsub.s32 7, %v2336
        %v2338 = vrot.slane %v2243, %v2337
        %v2339 = vlaneseq
        %v2340 = vshrl.u32 %v2339, 7
        %v2341 = vsub.s32 0, %v2340
        %v2342 = vrot.slane %v2244, %v2341
        %v2343 = vlaneseq
        %v2344 = vshrl.u32 %v2343, 7
        %v2345 = vsub.s32 1, %v2344
        %v2346 = vrot.slane %v2244, %v2345
        %v2347 = vlaneseq
        %v2348 = vshrl.u32 %v2347, 7
        %v2349 = vsub.s32 2, %v2348
        %v2350 = vrot.slane %v2244, %v2349
        %v2351 = vlaneseq
        %v2352 = vshrl.u32 %v2351, 7
        %v2353 = vsub.s32 3, %v2352
        %v2354 = vrot.slane %v2244, %v2353
        %v2355 = vlaneseq
        %v2356 = vshrl.u32 %v2355, 7
        %v2357 = vsub.s32 4, %v2356
        %v2358 = vrot.slane %v2244, %v2357
        %v2359 = vlaneseq
        %v2360 = vshrl.u32 %v2359, 7
        %v2361 = vsub.s32 5, %v2360
        %v2362 = vrot.slane %v2244, %v2361
        %v2363 = vlaneseq
        %v2364 = vshrl.u32 %v2363, 7
        %v2365 = vsub.s32 6, %v2364
        %v2366 = vrot.slane %v2244, %v2365
        %v2367 = vlaneseq
        %v2368 = vshrl.u32 %v2367, 7
        %v2369 = vsub.s32 7, %v2368
        %v2370 = vrot.slane %v2244, %v2369
        %v2371 = vlaneseq
        %v2372 = vshrl.u32 %v2371, 7
        %v2373 = vsub.s32 0, %v2372
        %v2374 = vrot.slane %v2245, %v2373
        %v2375 = vlaneseq
        %v2376 = vshrl.u32 %v2375, 7
        %v2377 = vsub.s32 1, %v2376
        %v2378 = vrot.slane %v2245, %v2377
        %v2379 = vlaneseq
        %v2380 = vshrl.u32 %v2379, 7
        %v2381 = vsub.s32 2, %v2380
        %v2382 = vrot.slane %v2245, %v2381
        %v2383 = vlaneseq
        %v2384 = vshrl.u32 %v2383, 7
        %v2385 = vsub.s32 3, %v2384
        %v2386 = vrot.slane %v2245, %v2385
        %v2387 = vlaneseq
        %v2388 = vshrl.u32 %v2387, 7
        %v2389 = vsub.s32 4, %v2388
        %v2390 = vrot.slane %v2245, %v2389
        %v2391 = vlaneseq
        %v2392 = vshrl.u32 %v2391, 7
        %v2393 = vsub.s32 5, %v2392
        %v2394 = vrot.slane %v2245, %v2393
        %v2395 = vlaneseq
        %v2396 = vshrl.u32 %v2395, 7
        %v2397 = vsub.s32 6, %v2396
        %v2398 = vrot.slane %v2245, %v2397
        %v2399 = vlaneseq
        %v2400 = vshrl.u32 %v2399, 7
        %v2401 = vsub.s32 7, %v2400
        %v2402 = vrot.slane %v2245, %v2401
        %v2403 = vlaneseq
        %v2404 = vshrl.u32 %v2403, 7
        %v2405 = vsub.s32 0, %v2404
        %v2406 = vrot.slane %v2246, %v2405
        %v2407 = vlaneseq
        %v2408 = vshrl.u32 %v2407, 7
        %v2409 = vsub.s32 1, %v2408
        %v2410 = vrot.slane %v2246, %v2409
        %v2411 = vlaneseq
        %v2412 = vshrl.u32 %v2411, 7
        %v2413 = vsub.s32 2, %v2412
        %v2414 = vrot.slane %v2246, %v2413
        %v2415 = vlaneseq
        %v2416 = vshrl.u32 %v2415, 7
        %v2417 = vsub.s32 3, %v2416
        %v2418 = vrot.slane %v2246, %v2417
        %v2419 = vlaneseq
        %v2420 = vshrl.u32 %v2419, 7
        %v2421 = vsub.s32 4, %v2420
        %v2422 = vrot.slane %v2246, %v2421
        %v2423 = vlaneseq
        %v2424 = vshrl.u32 %v2423, 7
        %v2425 = vsub.s32 5, %v2424
        %v2426 = vrot.slane %v2246, %v2425
        %v2427 = vlaneseq
        %v2428 = vshrl.u32 %v2427, 7
        %v2429 = vsub.s32 6, %v2428
        %v2430 = vrot.slane %v2246, %v2429
        %v2431 = vlaneseq
        %v2432 = vshrl.u32 %v2431, 7
        %v2433 = vsub.s32 7, %v2432
        %v2434 = vrot.slane %v2246, %v2433
        %v2435 = vlaneseq
        %v2436 = vshrl.u32 %v2435, 7
        %v2437 = vsub.s32 0, %v2436
        %v2438 = vrot.slane %v2247, %v2437
        %v2439 = vlaneseq
        %v2440 = vshrl.u32 %v2439, 7
        %v2441 = vsub.s32 1, %v2440
        %v2442 = vrot.slane %v2247, %v2441
        %v2443 = vlaneseq
        %v2444 = vshrl.u32 %v2443, 7
        %v2445 = vsub.s32 2, %v2444
        %v2446 = vrot.slane %v2247, %v2445
        %v2447 = vlaneseq
        %v2448 = vshrl.u32 %v2447, 7
        %v2449 = vsub.s32 3, %v2448
        %v2450 = vrot.slane %v2247, %v2449
        %v2451 = vlaneseq
        %v2452 = vshrl.u32 %v2451, 7
        %v2453 = vsub.s32 4, %v2452
        %v2454 = vrot.slane %v2247, %v2453
        %v2455 = vlaneseq
        %v2456 = vshrl.u32 %v2455, 7
        %v2457 = vsub.s32 5, %v2456
        %v2458 = vrot.slane %v2247, %v2457
        %v2459 = vlaneseq
        %v2460 = vshrl.u32 %v2459, 7
        %v2461 = vsub.s32 6, %v2460
        %v2462 = vrot.slane %v2247, %v2461
        %v2463 = vlaneseq
        %v2464 = vshrl.u32 %v2463, 7
        %v2465 = vsub.s32 7, %v2464
        %v2466 = vrot.slane %v2247, %v2465
        %v2467 = vlaneseq
        %v2468 = vshrl.u32 %v2467, 7
        %v2469 = vsub.s32 0, %v2468
        %v2470 = vrot.slane %v2248, %v2469
        %v2471 = vlaneseq
        %v2472 = vshrl.u32 %v2471, 7
        %v2473 = vsub.s32 1, %v2472
        %v2474 = vrot.slane %v2248, %v2473
        %v2475 = vlaneseq
        %v2476 = vshrl.u32 %v2475, 7
        %v2477 = vsub.s32 2, %v2476
        %v2478 = vrot.slane %v2248, %v2477
        %v2479 = vlaneseq
        %v2480 = vshrl.u32 %v2479, 7
        %v2481 = vsub.s32 3, %v2480
        %v2482 = vrot.slane %v2248, %v2481
        %v2483 = vlaneseq
        %v2484 = vshrl.u32 %v2483, 7
        %v2485 = vsub.s32 4, %v2484
        %v2486 = vrot.slane %v2248, %v2485
        %v2487 = vlaneseq
        %v2488 = vshrl.u32 %v2487, 7
        %v2489 = vsub.s32 5, %v2488
        %v2490 = vrot.slane %v2248, %v2489
        %v2491 = vlaneseq
        %v2492 = vshrl.u32 %v2491, 7
        %v2493 = vsub.s32 6, %v2492
        %v2494 = vrot.slane %v2248, %v2493
        %v2495 = vlaneseq
        %v2496 = vshrl.u32 %v2495, 7
        %v2497 = vsub.s32 7, %v2496
        %v2498 = vrot.slane %v2248, %v2497
        %v2499 = vlaneseq
        %v2500 = vshrl.u32 %v2499, 7
        %v2501 = vsub.s32 0, %v2500
        %v2502 = vrot.slane %v2249, %v2501
        %v2503 = vlaneseq
        %v2504 = vshrl.u32 %v2503, 7
        %v2505 = vsub.s32 1, %v2504
        %v2506 = vrot.slane %v2249, %v2505
        %v2507 = vlaneseq
        %v2508 = vshrl.u32 %v2507, 7
        %v2509 = vsub.s32 2, %v2508
        %v2510 = vrot.slane %v2249, %v2509
        %v2511 = vlaneseq
        %v2512 = vshrl.u32 %v2511, 7
        %v2513 = vsub.s32 3, %v2512
        %v2514 = vrot.slane %v2249, %v2513
        %v2515 = vlaneseq
        %v2516 = vshrl.u32 %v2515, 7
        %v2517 = vsub.s32 4, %v2516
        %v2518 = vrot.slane %v2249, %v2517
        %v2519 = vlaneseq
        %v2520 = vshrl.u32 %v2519, 7
        %v2521 = vsub.s32 5, %v2520
        %v2522 = vrot.slane %v2249, %v2521
        %v2523 = vlaneseq
        %v2524 = vshrl.u32 %v2523, 7
        %v2525 = vsub.s32 6, %v2524
        %v2526 = vrot.slane %v2249, %v2525
        %v2527 = vlaneseq
        %v2528 = vshrl.u32 %v2527, 7
        %v2529 = vsub.s32 7, %v2528
        %v2530 = vrot.slane %v2249, %v2529
        %v2531 = vlaneseq
        %v2532 = vshrl.u32 %v2531, 7
        %v2533 = vsub.s32 0, %v2532
        %v2534 = vrot.slane %v2250, %v2533
        %v2535 = vlaneseq
        %v2536 = vshrl.u32 %v2535, 7
        %v2537 = vsub.s32 1, %v2536
        %v2538 = vrot.slane %v2250, %v2537
        %v2539 = vlaneseq
        %v2540 = vshrl.u32 %v2539, 7
        %v2541 = vsub.s32 2, %v2540
        %v2542 = vrot.slane %v2250, %v2541
        %v2543 = vlaneseq
        %v2544 = vshrl.u32 %v2543, 7
        %v2545 = vsub.s32 3, %v2544
        %v2546 = vrot.slane %v2250, %v2545
        %v2547 = vlaneseq
        %v2548 = vshrl.u32 %v2547, 7
        %v2549 = vsub.s32 4, %v2548
        %v2550 = vrot.slane %v2250, %v2549
        %v2551 = vlaneseq
        %v2552 = vshrl.u32 %v2551, 7
        %v2553 = vsub.s32 5, %v2552
        %v2554 = vrot.slane %v2250, %v2553
        %v2555 = vlaneseq
        %v2556 = vshrl.u32 %v2555, 7
        %v2557 = vsub.s32 6, %v2556
        %v2558 = vrot.slane %v2250, %v2557
        %v2559 = vlaneseq
        %v2560 = vshrl.u32 %v2559, 7
        %v2561 = vsub.s32 7, %v2560
        %v2562 = vrot.slane %v2250, %v2561
        %v2563 = vlaneseq
        %v2564 = vshrl.u32 %v2563, 7
        %v2565 = vsub.s32 0, %v2564
        %v2566 = vrot.slane %v2251, %v2565
        %v2567 = vlaneseq
        %v2568 = vshrl.u32 %v2567, 7
        %v2569 = vsub.s32 1, %v2568
        %v2570 = vrot.slane %v2251, %v2569
        %v2571 = vlaneseq
        %v2572 = vshrl.u32 %v2571, 7
        %v2573 = vsub.s32 2, %v2572
        %v2574 = vrot.slane %v2251, %v2573
        %v2575 = vlaneseq
        %v2576 = vshrl.u32 %v2575, 7
        %v2577 = vsub.s32 3, %v2576
        %v2578 = vrot.slane %v2251, %v2577
        %v2579 = vlaneseq
        %v2580 = vshrl.u32 %v2579, 7
        %v2581 = vsub.s32 4, %v2580
        %v2582 = vrot.slane %v2251, %v2581
        %v2583 = vlaneseq
        %v2584 = vshrl.u32 %v2583, 7
        %v2585 = vsub.s32 5, %v2584
        %v2586 = vrot.slane %v2251, %v2585
        %v2587 = vlaneseq
        %v2588 = vshrl.u32 %v2587, 7
        %v2589 = vsub.s32 6, %v2588
        %v2590 = vrot.slane %v2251, %v2589
        %v2591 = vlaneseq
        %v2592 = vshrl.u32 %v2591, 7
        %v2593 = vsub.s32 7, %v2592
        %v2594 = vrot.slane %v2251, %v2593
        %v2595 = vlaneseq
        %v2596 = vshrl.u32 %v2595, 7
        %v2597 = vsub.s32 0, %v2596
        %v2598 = vrot.slane %v2252, %v2597
        %v2599 = vlaneseq
        %v2600 = vshrl.u32 %v2599, 7
        %v2601 = vsub.s32 1, %v2600
        %v2602 = vrot.slane %v2252, %v2601
        %v2603 = vlaneseq
        %v2604 = vshrl.u32 %v2603, 7
        %v2605 = vsub.s32 2, %v2604
        %v2606 = vrot.slane %v2252, %v2605
        %v2607 = vlaneseq
        %v2608 = vshrl.u32 %v2607, 7
        %v2609 = vsub.s32 3, %v2608
        %v2610 = vrot.slane %v2252, %v2609
        %v2611 = vlaneseq
        %v2612 = vshrl.u32 %v2611, 7
        %v2613 = vsub.s32 4, %v2612
        %v2614 = vrot.slane %v2252, %v2613
        %v2615 = vlaneseq
        %v2616 = vshrl.u32 %v2615, 7
        %v2617 = vsub.s32 5, %v2616
        %v2618 = vrot.slane %v2252, %v2617
        %v2619 = vlaneseq
        %v2620 = vshrl.u32 %v2619, 7
        %v2621 = vsub.s32 6, %v2620
        %v2622 = vrot.slane %v2252, %v2621
        %v2623 = vlaneseq
        %v2624 = vshrl.u32 %v2623, 7
        %v2625 = vsub.s32 7, %v2624
        %v2626 = vrot.slane %v2252, %v2625
        %v2627 = vlaneseq
        %v2628 = vshrl.u32 %v2627, 7
        %v2629 = vsub.s32 0, %v2628
        %v2630 = vrot.slane %v2253, %v2629
        %v2631 = vlaneseq
        %v2632 = vshrl.u32 %v2631, 7
        %v2633 = vsub.s32 1, %v2632
        %v2634 = vrot.slane %v2253, %v2633
        %v2635 = vlaneseq
        %v2636 = vshrl.u32 %v2635, 7
        %v2637 = vsub.s32 2, %v2636
        %v2638 = vrot.slane %v2253, %v2637
        %v2639 = vlaneseq
        %v2640 = vshrl.u32 %v2639, 7
        %v2641 = vsub.s32 3, %v2640
        %v2642 = vrot.slane %v2253, %v2641
        %v2643 = vlaneseq
        %v2644 = vshrl.u32 %v2643, 7
        %v2645 = vsub.s32 4, %v2644
        %v2646 = vrot.slane %v2253, %v2645
        %v2647 = vlaneseq
        %v2648 = vshrl.u32 %v2647, 7
        %v2649 = vsub.s32 5, %v2648
        %v2650 = vrot.slane %v2253, %v2649
        %v2651 = vlaneseq
        %v2652 = vshrl.u32 %v2651, 7
        %v2653 = vsub.s32 6, %v2652
        %v2654 = vrot.slane %v2253, %v2653
        %v2655 = vlaneseq
        %v2656 = vshrl.u32 %v2655, 7
        %v2657 = vsub.s32 7, %v2656
        %v2658 = vrot.slane %v2253, %v2657
        %v2659 = vlaneseq
        %v2660 = vshrl.u32 %v2659, 7
        %v2661 = vsub.s32 0, %v2660
        %v2662 = vrot.slane %v2254, %v2661
        %v2663 = vlaneseq
        %v2664 = vshrl.u32 %v2663, 7
        %v2665 = vsub.s32 1, %v2664
        %v2666 = vrot.slane %v2254, %v2665
        %v2667 = vlaneseq
        %v2668 = vshrl.u32 %v2667, 7
        %v2669 = vsub.s32 2, %v2668
        %v2670 = vrot.slane %v2254, %v2669
        %v2671 = vlaneseq
        %v2672 = vshrl.u32 %v2671, 7
        %v2673 = vsub.s32 3, %v2672
        %v2674 = vrot.slane %v2254, %v2673
        %v2675 = vlaneseq
        %v2676 = vshrl.u32 %v2675, 7
        %v2677 = vsub.s32 4, %v2676
        %v2678 = vrot.slane %v2254, %v2677
        %v2679 = vlaneseq
        %v2680 = vshrl.u32 %v2679, 7
        %v2681 = vsub.s32 5, %v2680
        %v2682 = vrot.slane %v2254, %v2681
        %v2683 = vlaneseq
        %v2684 = vshrl.u32 %v2683, 7
        %v2685 = vsub.s32 6, %v2684
        %v2686 = vrot.slane %v2254, %v2685
        %v2687 = vlaneseq
        %v2688 = vshrl.u32 %v2687, 7
        %v2689 = vsub.s32 7, %v2688
        %v2690 = vrot.slane %v2254, %v2689
        %v2691 = vlaneseq
        %v2692 = vshrl.u32 %v2691, 7
        %v2693 = vsub.s32 0, %v2692
        %v2694 = vrot.slane %v2255, %v2693
        %v2695 = vlaneseq
        %v2696 = vshrl.u32 %v2695, 7
        %v2697 = vsub.s32 1, %v2696
        %v2698 = vrot.slane %v2255, %v2697
        %v2699 = vlaneseq
        %v2700 = vshrl.u32 %v2699, 7
        %v2701 = vsub.s32 2, %v2700
        %v2702 = vrot.slane %v2255, %v2701
        %v2703 = vlaneseq
        %v2704 = vshrl.u32 %v2703, 7
        %v2705 = vsub.s32 3, %v2704
        %v2706 = vrot.slane %v2255, %v2705
        %v2707 = vlaneseq
        %v2708 = vshrl.u32 %v2707, 7
        %v2709 = vsub.s32 4, %v2708
        %v2710 = vrot.slane %v2255, %v2709
        %v2711 = vlaneseq
        %v2712 = vshrl.u32 %v2711, 7
        %v2713 = vsub.s32 5, %v2712
        %v2714 = vrot.slane %v2255, %v2713
        %v2715 = vlaneseq
        %v2716 = vshrl.u32 %v2715, 7
        %v2717 = vsub.s32 6, %v2716
        %v2718 = vrot.slane %v2255, %v2717
        %v2719 = vlaneseq
        %v2720 = vshrl.u32 %v2719, 7
        %v2721 = vsub.s32 7, %v2720
        %v2722 = vrot.slane %v2255, %v2721
        %v2723 = vlaneseq
        %v2724 = vshrl.u32 %v2723, 7
        %v2725 = vsub.s32 0, %v2724
        %v2726 = vrot.slane %v2256, %v2725
        %v2727 = vlaneseq
        %v2728 = vshrl.u32 %v2727, 7
        %v2729 = vsub.s32 1, %v2728
        %v2730 = vrot.slane %v2256, %v2729
        %v2731 = vlaneseq
        %v2732 = vshrl.u32 %v2731, 7
        %v2733 = vsub.s32 2, %v2732
        %v2734 = vrot.slane %v2256, %v2733
        %v2735 = vlaneseq
        %v2736 = vshrl.u32 %v2735, 7
        %v2737 = vsub.s32 3, %v2736
        %v2738 = vrot.slane %v2256, %v2737
        %v2739 = vlaneseq
        %v2740 = vshrl.u32 %v2739, 7
        %v2741 = vsub.s32 4, %v2740
        %v2742 = vrot.slane %v2256, %v2741
        %v2743 = vlaneseq
        %v2744 = vshrl.u32 %v2743, 7
        %v2745 = vsub.s32 5, %v2744
        %v2746 = vrot.slane %v2256, %v2745
        %v2747 = vlaneseq
        %v2748 = vshrl.u32 %v2747, 7
        %v2749 = vsub.s32 6, %v2748
        %v2750 = vrot.slane %v2256, %v2749
        %v2751 = vlaneseq
        %v2752 = vshrl.u32 %v2751, 7
        %v2753 = vsub.s32 7, %v2752
        %v2754 = vrot.slane %v2256, %v2753
        %v2755 = vlaneseq
        %v2756 = vshrl.u32 %v2755, 7
        %v2757 = vsub.s32 0, %v2756
        %v2758 = vrot.slane %v2257, %v2757
        %v2759 = vlaneseq
        %v2760 = vshrl.u32 %v2759, 7
        %v2761 = vsub.s32 1, %v2760
        %v2762 = vrot.slane %v2257, %v2761
        %v2763 = vlaneseq
        %v2764 = vshrl.u32 %v2763, 7
        %v2765 = vsub.s32 2, %v2764
        %v2766 = vrot.slane %v2257, %v2765
        %v2767 = vlaneseq
        %v2768 = vshrl.u32 %v2767, 7
        %v2769 = vsub.s32 3, %v2768
        %v2770 = vrot.slane %v2257, %v2769
        %v2771 = vlaneseq
        %v2772 = vshrl.u32 %v2771, 7
        %v2773 = vsub.s32 4, %v2772
        %v2774 = vrot.slane %v2257, %v2773
        %v2775 = vlaneseq
        %v2776 = vshrl.u32 %v2775, 7
        %v2777 = vsub.s32 5, %v2776
        %v2778 = vrot.slane %v2257, %v2777
        %v2779 = vlaneseq
        %v2780 = vshrl.u32 %v2779, 7
        %v2781 = vsub.s32 6, %v2780
        %v2782 = vrot.slane %v2257, %v2781
        %v2783 = vlaneseq
        %v2784 = vshrl.u32 %v2783, 7
        %v2785 = vsub.s32 7, %v2784
        %v2786 = vrot.slane %v2257, %v2785
        %v2787 = vlaneseq
        %v2788 = vshrl.u32 %v2787, 7
        %v2789 = vsub.s32 0, %v2788
        %v2790 = vrot.slane %v2258, %v2789
        %v2791 = vlaneseq
        %v2792 = vshrl.u32 %v2791, 7
        %v2793 = vsub.s32 1, %v2792
        %v2794 = vrot.slane %v2258, %v2793
        %v2795 = vlaneseq
        %v2796 = vshrl.u32 %v2795, 7
        %v2797 = vsub.s32 2, %v2796
        %v2798 = vrot.slane %v2258, %v2797
        %v2799 = vlaneseq
        %v2800 = vshrl.u32 %v2799, 7
        %v2801 = vsub.s32 3, %v2800
        %v2802 = vrot.slane %v2258, %v2801
        %v2803 = vlaneseq
        %v2804 = vshrl.u32 %v2803, 7
        %v2805 = vsub.s32 4, %v2804
        %v2806 = vrot.slane %v2258, %v2805
        %v2807 = vlaneseq
        %v2808 = vshrl.u32 %v2807, 7
        %v2809 = vsub.s32 5, %v2808
        %v2810 = vrot.slane %v2258, %v2809
        %v2811 = vlaneseq
        %v2812 = vshrl.u32 %v2811, 7
        %v2813 = vsub.s32 6, %v2812
        %v2814 = vrot.slane %v2258, %v2813
        %v2815 = vlaneseq
        %v2816 = vshrl.u32 %v2815, 7
        %v2817 = vsub.s32 7, %v2816
        %v2818 = vrot.slane %v2258, %v2817
        %v2819 = vlaneseq
        %v2820 = vshrl.u32 %v2819, 7
        %v2821 = vsub.s32 0, %v2820
        %v2822 = vrot.slane %v2259, %v2821
        %v2823 = vlaneseq
        %v2824 = vshrl.u32 %v2823, 7
        %v2825 = vsub.s32 1, %v2824
        %v2826 = vrot.slane %v2259, %v2825
        %v2827 = vlaneseq
        %v2828 = vshrl.u32 %v2827, 7
        %v2829 = vsub.s32 2, %v2828
        %v2830 = vrot.slane %v2259, %v2829
        %v2831 = vlaneseq
        %v2832 = vshrl.u32 %v2831, 7
        %v2833 = vsub.s32 3, %v2832
        %v2834 = vrot.slane %v2259, %v2833
        %v2835 = vlaneseq
        %v2836 = vshrl.u32 %v2835, 7
        %v2837 = vsub.s32 4, %v2836
        %v2838 = vrot.slane %v2259, %v2837
        %v2839 = vlaneseq
        %v2840 = vshrl.u32 %v2839, 7
        %v2841 = vsub.s32 5, %v2840
        %v2842 = vrot.slane %v2259, %v2841
        %v2843 = vlaneseq
        %v2844 = vshrl.u32 %v2843, 7
        %v2845 = vsub.s32 6, %v2844
        %v2846 = vrot.slane %v2259, %v2845
        %v2847 = vlaneseq
        %v2848 = vshrl.u32 %v2847, 7
        %v2849 = vsub.s32 7, %v2848
        %v2850 = vrot.slane %v2259, %v2849
        %v2851 = vlaneseq
        %v2852 = vshrl.u32 %v2851, 7
        %v2853 = vsub.s32 0, %v2852
        %v2854 = vrot.slane %v2260, %v2853
        %v2855 = vlaneseq
        %v2856 = vshrl.u32 %v2855, 7
        %v2857 = vsub.s32 1, %v2856
        %v2858 = vrot.slane %v2260, %v2857
        %v2859 = vlaneseq
        %v2860 = vshrl.u32 %v2859, 7
        %v2861 = vsub.s32 2, %v2860
        %v2862 = vrot.slane %v2260, %v2861
        %v2863 = vlaneseq
        %v2864 = vshrl.u32 %v2863, 7
        %v2865 = vsub.s32 3, %v2864
        %v2866 = vrot.slane %v2260, %v2865
        %v2867 = vlaneseq
        %v2868 = vshrl.u32 %v2867, 7
        %v2869 = vsub.s32 4, %v2868
        %v2870 = vrot.slane %v2260, %v2869
        %v2871 = vlaneseq
        %v2872 = vshrl.u32 %v2871, 7
        %v2873 = vsub.s32 5, %v2872
        %v2874 = vrot.slane %v2260, %v2873
        %v2875 = vlaneseq
        %v2876 = vshrl.u32 %v2875, 7
        %v2877 = vsub.s32 6, %v2876
        %v2878 = vrot.slane %v2260, %v2877
        %v2879 = vlaneseq
        %v2880 = vshrl.u32 %v2879, 7
        %v2881 = vsub.s32 7, %v2880
        %v2882 = vrot.slane %v2260, %v2881
        %v2883 = vlaneseq
        %v2884 = vshrl.u32 %v2883, 7
        %v2885 = vsub.s32 0, %v2884
        %v2886 = vrot.slane %v2261, %v2885
        %v2887 = vlaneseq
        %v2888 = vshrl.u32 %v2887, 7
        %v2889 = vsub.s32 1, %v2888
        %v2890 = vrot.slane %v2261, %v2889
        %v2891 = vlaneseq
        %v2892 = vshrl.u32 %v2891, 7
        %v2893 = vsub.s32 2, %v2892
        %v2894 = vrot.slane %v2261, %v2893
        %v2895 = vlaneseq
        %v2896 = vshrl.u32 %v2895, 7
        %v2897 = vsub.s32 3, %v2896
        %v2898 = vrot.slane %v2261, %v2897
        %v2899 = vlaneseq
        %v2900 = vshrl.u32 %v2899, 7
        %v2901 = vsub.s32 4, %v2900
        %v2902 = vrot.slane %v2261, %v2901
        %v2903 = vlaneseq
        %v2904 = vshrl.u32 %v2903, 7
        %v2905 = vsub.s32 5, %v2904
        %v2906 = vrot.slane %v2261, %v2905
        %v2907 = vlaneseq
        %v2908 = vshrl.u32 %v2907, 7
        %v2909 = vsub.s32 6, %v2908
        %v2910 = vrot.slane %v2261, %v2909
        %v2911 = vlaneseq
        %v2912 = vshrl.u32 %v2911, 7
        %v2913 = vsub.s32 7, %v2912
        %v2914 = vrot.slane %v2261, %v2913
        %v2915 = vlaneseq
        %v2916 = vshrl.u32 %v2915, 7
        %v2917 = vsub.s32 0, %v2916
        %v2918 = vrot.slane %v2262, %v2917
        %v2919 = vlaneseq
        %v2920 = vshrl.u32 %v2919, 7
        %v2921 = vsub.s32 1, %v2920
        %v2922 = vrot.slane %v2262, %v2921
        %v2923 = vlaneseq
        %v2924 = vshrl.u32 %v2923, 7
        %v2925 = vsub.s32 2, %v2924
        %v2926 = vrot.slane %v2262, %v2925
        %v2927 = vlaneseq
        %v2928 = vshrl.u32 %v2927, 7
        %v2929 = vsub.s32 3, %v2928
        %v2930 = vrot.slane %v2262, %v2929
        %v2931 = vlaneseq
        %v2932 = vshrl.u32 %v2931, 7
        %v2933 = vsub.s32 4, %v2932
        %v2934 = vrot.slane %v2262, %v2933
        %v2935 = vlaneseq
        %v2936 = vshrl.u32 %v2935, 7
        %v2937 = vsub.s32 5, %v2936
        %v2938 = vrot.slane %v2262, %v2937
        %v2939 = vlaneseq
        %v2940 = vshrl.u32 %v2939, 7
        %v2941 = vsub.s32 6, %v2940
        %v2942 = vrot.slane %v2262, %v2941
        %v2943 = vlaneseq
        %v2944 = vshrl.u32 %v2943, 7
        %v2945 = vsub.s32 7, %v2944
        %v2946 = vrot.slane %v2262, %v2945
        %v2947 = vlaneseq
        %v2948 = vshrl.u32 %v2947, 7
        %v2949 = vsub.s32 0, %v2948
        %v2950 = vrot.slane %v2263, %v2949
        %v2951 = vlaneseq
        %v2952 = vshrl.u32 %v2951, 7
        %v2953 = vsub.s32 1, %v2952
        %v2954 = vrot.slane %v2263, %v2953
        %v2955 = vlaneseq
        %v2956 = vshrl.u32 %v2955, 7
        %v2957 = vsub.s32 2, %v2956
        %v2958 = vrot.slane %v2263, %v2957
        %v2959 = vlaneseq
        %v2960 = vshrl.u32 %v2959, 7
        %v2961 = vsub.s32 3, %v2960
        %v2962 = vrot.slane %v2263, %v2961
        %v2963 = vlaneseq
        %v2964 = vshrl.u32 %v2963, 7
        %v2965 = vsub.s32 4, %v2964
        %v2966 = vrot.slane %v2263, %v2965
        %v2967 = vlaneseq
        %v2968 = vshrl.u32 %v2967, 7
        %v2969 = vsub.s32 5, %v2968
        %v2970 = vrot.slane %v2263, %v2969
        %v2971 = vlaneseq
        %v2972 = vshrl.u32 %v2971, 7
        %v2973 = vsub.s32 6, %v2972
        %v2974 = vrot.slane %v2263, %v2973
        %v2975 = vlaneseq
        %v2976 = vshrl.u32 %v2975, 7
        %v2977 = vsub.s32 7, %v2976
        %v2978 = vrot.slane %v2263, %v2977
        %v2979 = vlaneseq
        %v2980 = vshrl.u32 %v2979, 7
        %v2981 = vsub.s32 0, %v2980
        %v2982 = vrot.slane %v2264, %v2981
        %v2983 = vlaneseq
        %v2984 = vshrl.u32 %v2983, 7
        %v2985 = vsub.s32 1, %v2984
        %v2986 = vrot.slane %v2264, %v2985
        %v2987 = vlaneseq
        %v2988 = vshrl.u32 %v2987, 7
        %v2989 = vsub.s32 2, %v2988
        %v2990 = vrot.slane %v2264, %v2989
        %v2991 = vlaneseq
        %v2992 = vshrl.u32 %v2991, 7
        %v2993 = vsub.s32 3, %v2992
        %v2994 = vrot.slane %v2264, %v2993
        %v2995 = vlaneseq
        %v2996 = vshrl.u32 %v2995, 7
        %v2997 = vsub.s32 4, %v2996
        %v2998 = vrot.slane %v2264, %v2997
        %v2999 = vlaneseq
        %v3000 = vshrl.u32 %v2999, 7
        %v3001 = vsub.s32 5, %v3000
        %v3002 = vrot.slane %v2264, %v3001
        %v3003 = vlaneseq
        %v3004 = vshrl.u32 %v3003, 7
        %v3005 = vsub.s32 6, %v3004
        %v3006 = vrot.slane %v2264, %v3005
        %v3007 = vlaneseq
        %v3008 = vshrl.u32 %v3007, 7
        %v3009 = vsub.s32 7, %v3008
        %v3010 = vrot.slane %v2264, %v3009
        %v3011 = vlaneseq
        %v3012 = vshrl.u32 %v3011, 7
        %v3013 = vsub.s32 0, %v3012
        %v3014 = vrot.slane %v2265, %v3013
        %v3015 = vlaneseq
        %v3016 = vshrl.u32 %v3015, 7
        %v3017 = vsub.s32 1, %v3016
        %v3018 = vrot.slane %v2265, %v3017
        %v3019 = vlaneseq
        %v3020 = vshrl.u32 %v3019, 7
        %v3021 = vsub.s32 2, %v3020
        %v3022 = vrot.slane %v2265, %v3021
        %v3023 = vlaneseq
        %v3024 = vshrl.u32 %v3023, 7
        %v3025 = vsub.s32 3, %v3024
        %v3026 = vrot.slane %v2265, %v3025
        %v3027 = vlaneseq
        %v3028 = vshrl.u32 %v3027, 7
        %v3029 = vsub.s32 4, %v3028
        %v3030 = vrot.slane %v2265, %v3029
        %v3031 = vlaneseq
        %v3032 = vshrl.u32 %v3031, 7
        %v3033 = vsub.s32 5, %v3032
        %v3034 = vrot.slane %v2265, %v3033
        %v3035 = vlaneseq
        %v3036 = vshrl.u32 %v3035, 7
        %v3037 = vsub.s32 6, %v3036
        %v3038 = vrot.slane %v2265, %v3037
        %v3039 = vlaneseq
        %v3040 = vshrl.u32 %v3039, 7
        %v3041 = vsub.s32 7, %v3040
        %v3042 = vrot.slane %v2265, %v3041
        %v3043 = vlaneseq
        %v3044 = vshrl.u32 %v3043, 7
        %v3045 = vsub.s32 0, %v3044
        %v3046 = vrot.slane %v2266, %v3045
        %v3047 = vlaneseq
        %v3048 = vshrl.u32 %v3047, 7
        %v3049 = vsub.s32 1, %v3048
        %v3050 = vrot.slane %v2266, %v3049
        %v3051 = vlaneseq
        %v3052 = vshrl.u32 %v3051, 7
        %v3053 = vsub.s32 2, %v3052
        %v3054 = vrot.slane %v2266, %v3053
        %v3055 = vlaneseq
        %v3056 = vshrl.u32 %v3055, 7
        %v3057 = vsub.s32 3, %v3056
        %v3058 = vrot.slane %v2266, %v3057
        %v3059 = vlaneseq
        %v3060 = vshrl.u32 %v3059, 7
        %v3061 = vsub.s32 4, %v3060
        %v3062 = vrot.slane %v2266, %v3061
        %v3063 = vlaneseq
        %v3064 = vshrl.u32 %v3063, 7
        %v3065 = vsub.s32 5, %v3064
        %v3066 = vrot.slane %v2266, %v3065
        %v3067 = vlaneseq
        %v3068 = vshrl.u32 %v3067, 7
        %v3069 = vsub.s32 6, %v3068
        %v3070 = vrot.slane %v2266, %v3069
        %v3071 = vlaneseq
        %v3072 = vshrl.u32 %v3071, 7
        %v3073 = vsub.s32 7, %v3072
        %v3074 = vrot.slane %v2266, %v3073
        %v3075 = vlaneseq
        %v3076 = vshrl.u32 %v3075, 7
        %v3077 = vsub.s32 0, %v3076
        %v3078 = vrot.slane %v2267, %v3077
        %v3079 = vlaneseq
        %v3080 = vshrl.u32 %v3079, 7
        %v3081 = vsub.s32 1, %v3080
        %v3082 = vrot.slane %v2267, %v3081
        %v3083 = vlaneseq
        %v3084 = vshrl.u32 %v3083, 7
        %v3085 = vsub.s32 2, %v3084
        %v3086 = vrot.slane %v2267, %v3085
        %v3087 = vlaneseq
        %v3088 = vshrl.u32 %v3087, 7
        %v3089 = vsub.s32 3, %v3088
        %v3090 = vrot.slane %v2267, %v3089
        %v3091 = vlaneseq
        %v3092 = vshrl.u32 %v3091, 7
        %v3093 = vsub.s32 4, %v3092
        %v3094 = vrot.slane %v2267, %v3093
        %v3095 = vlaneseq
        %v3096 = vshrl.u32 %v3095, 7
        %v3097 = vsub.s32 5, %v3096
        %v3098 = vrot.slane %v2267, %v3097
        %v3099 = vlaneseq
        %v3100 = vshrl.u32 %v3099, 7
        %v3101 = vsub.s32 6, %v3100
        %v3102 = vrot.slane %v2267, %v3101
        %v3103 = vlaneseq
        %v3104 = vshrl.u32 %v3103, 7
        %v3105 = vsub.s32 7, %v3104
        %v3106 = vrot.slane %v2267, %v3105
        %v3107 = vlaneseq
        %v3108 = vshrl.u32 %v3107, 7
        %v3109 = vsub.s32 0, %v3108
        %v3110 = vrot.slane %v2268, %v3109
        %v3111 = vlaneseq
        %v3112 = vshrl.u32 %v3111, 7
        %v3113 = vsub.s32 1, %v3112
        %v3114 = vrot.slane %v2268, %v3113
        %v3115 = vlaneseq
        %v3116 = vshrl.u32 %v3115, 7
        %v3117 = vsub.s32 2, %v3116
        %v3118 = vrot.slane %v2268, %v3117
        %v3119 = vlaneseq
        %v3120 = vshrl.u32 %v3119, 7
        %v3121 = vsub.s32 3, %v3120
        %v3122 = vrot.slane %v2268, %v3121
        %v3123 = vlaneseq
        %v3124 = vshrl.u32 %v3123, 7
        %v3125 = vsub.s32 4, %v3124
        %v3126 = vrot.slane %v2268, %v3125
        %v3127 = vlaneseq
        %v3128 = vshrl.u32 %v3127, 7
        %v3129 = vsub.s32 5, %v3128
        %v3130 = vrot.slane %v2268, %v3129
        %v3131 = vlaneseq
        %v3132 = vshrl.u32 %v3131, 7
        %v3133 = vsub.s32 6, %v3132
        %v3134 = vrot.slane %v2268, %v3133
        %v3135 = vlaneseq
        %v3136 = vshrl.u32 %v3135, 7
        %v3137 = vsub.s32 7, %v3136
        %v3138 = vrot.slane %v2268, %v3137
        %v3139 = vlaneseq
        %v3140 = vshrl.u32 %v3139, 7
        %v3141 = vsub.s32 0, %v3140
        %v3142 = vrot.slane %v2269, %v3141
        %v3143 = vlaneseq
        %v3144 = vshrl.u32 %v3143, 7
        %v3145 = vsub.s32 1, %v3144
        %v3146 = vrot.slane %v2269, %v3145
        %v3147 = vlaneseq
        %v3148 = vshrl.u32 %v3147, 7
        %v3149 = vsub.s32 2, %v3148
        %v3150 = vrot.slane %v2269, %v3149
        %v3151 = vlaneseq
        %v3152 = vshrl.u32 %v3151, 7
        %v3153 = vsub.s32 3, %v3152
        %v3154 = vrot.slane %v2269, %v3153
        %v3155 = vlaneseq
        %v3156 = vshrl.u32 %v3155, 7
        %v3157 = vsub.s32 4, %v3156
        %v3158 = vrot.slane %v2269, %v3157
        %v3159 = vlaneseq
        %v3160 = vshrl.u32 %v3159, 7
        %v3161 = vsub.s32 5, %v3160
        %v3162 = vrot.slane %v2269, %v3161
        %v3163 = vlaneseq
        %v3164 = vshrl.u32 %v3163, 7
        %v3165 = vsub.s32 6, %v3164
        %v3166 = vrot.slane %v2269, %v3165
        %v3167 = vlaneseq
        %v3168 = vshrl.u32 %v3167, 7
        %v3169 = vsub.s32 7, %v3168
        %v3170 = vrot.slane %v2269, %v3169
        %v3171 = vlaneseq
        %v3172 = vshrl.u32 %v3171, 7
        %v3173 = vsub.s32 0, %v3172
        %v3174 = vrot.slane %v2270, %v3173
        %v3175 = vlaneseq
        %v3176 = vshrl.u32 %v3175, 7
        %v3177 = vsub.s32 1, %v3176
        %v3178 = vrot.slane %v2270, %v3177
        %v3179 = vlaneseq
        %v3180 = vshrl.u32 %v3179, 7
        %v3181 = vsub.s32 2, %v3180
        %v3182 = vrot.slane %v2270, %v3181
        %v3183 = vlaneseq
        %v3184 = vshrl.u32 %v3183, 7
        %v3185 = vsub.s32 3, %v3184
        %v3186 = vrot.slane %v2270, %v3185
        %v3187 = vlaneseq
        %v3188 = vshrl.u32 %v3187, 7
        %v3189 = vsub.s32 4, %v3188
        %v3190 = vrot.slane %v2270, %v3189
        %v3191 = vlaneseq
        %v3192 = vshrl.u32 %v3191, 7
        %v3193 = vsub.s32 5, %v3192
        %v3194 = vrot.slane %v2270, %v3193
        %v3195 = vlaneseq
        %v3196 = vshrl.u32 %v3195, 7
        %v3197 = vsub.s32 6, %v3196
        %v3198 = vrot.slane %v2270, %v3197
        %v3199 = vlaneseq
        %v3200 = vshrl.u32 %v3199, 7
        %v3201 = vsub.s32 7, %v3200
        %v3202 = vrot.slane %v2270, %v3201
        %v3203 = vlaneseq
        %v3204 = vshrl.u32 %v3203, 7
        %v3205 = vsub.s32 0, %v3204
        %v3206 = vrot.slane %v2271, %v3205
        %v3207 = vlaneseq
        %v3208 = vshrl.u32 %v3207, 7
        %v3209 = vsub.s32 1, %v3208
        %v3210 = vrot.slane %v2271, %v3209
        %v3211 = vlaneseq
        %v3212 = vshrl.u32 %v3211, 7
        %v3213 = vsub.s32 2, %v3212
        %v3214 = vrot.slane %v2271, %v3213
        %v3215 = vlaneseq
        %v3216 = vshrl.u32 %v3215, 7
        %v3217 = vsub.s32 3, %v3216
        %v3218 = vrot.slane %v2271, %v3217
        %v3219 = vlaneseq
        %v3220 = vshrl.u32 %v3219, 7
        %v3221 = vsub.s32 4, %v3220
        %v3222 = vrot.slane %v2271, %v3221
        %v3223 = vlaneseq
        %v3224 = vshrl.u32 %v3223, 7
        %v3225 = vsub.s32 5, %v3224
        %v3226 = vrot.slane %v2271, %v3225
        %v3227 = vlaneseq
        %v3228 = vshrl.u32 %v3227, 7
        %v3229 = vsub.s32 6, %v3228
        %v3230 = vrot.slane %v2271, %v3229
        %v3231 = vlaneseq
        %v3232 = vshrl.u32 %v3231, 7
        %v3233 = vsub.s32 7, %v3232
        %v3234 = vrot.slane %v2271, %v3233
        %v3235 = vlaneseq
        %v3236 = vshrl.u32 %v3235, 7
        %v3237 = vsub.s32 0, %v3236
        %v3238 = vrot.slane %v2272, %v3237
        %v3239 = vlaneseq
        %v3240 = vshrl.u32 %v3239, 7
        %v3241 = vsub.s32 1, %v3240
        %v3242 = vrot.slane %v2272, %v3241
        %v3243 = vlaneseq
        %v3244 = vshrl.u32 %v3243, 7
        %v3245 = vsub.s32 2, %v3244
        %v3246 = vrot.slane %v2272, %v3245
        %v3247 = vlaneseq
        %v3248 = vshrl.u32 %v3247, 7
        %v3249 = vsub.s32 3, %v3248
        %v3250 = vrot.slane %v2272, %v3249
        %v3251 = vlaneseq
        %v3252 = vshrl.u32 %v3251, 7
        %v3253 = vsub.s32 4, %v3252
        %v3254 = vrot.slane %v2272, %v3253
        %v3255 = vlaneseq
        %v3256 = vshrl.u32 %v3255, 7
        %v3257 = vsub.s32 5, %v3256
        %v3258 = vrot.slane %v2272, %v3257
        %v3259 = vlaneseq
        %v3260 = vshrl.u32 %v3259, 7
        %v3261 = vsub.s32 6, %v3260
        %v3262 = vrot.slane %v2272, %v3261
        %v3263 = vlaneseq
        %v3264 = vshrl.u32 %v3263, 7
        %v3265 = vsub.s32 7, %v3264
        %v3266 = vrot.slane %v2272, %v3265
        %v3267 = vlaneseq
        %v3268 = vshrl.u32 %v3267, 7
        %v3269 = vsub.s32 0, %v3268
        %v3270 = vrot.slane %v2273, %v3269
        %v3271 = vlaneseq
        %v3272 = vshrl.u32 %v3271, 7
        %v3273 = vsub.s32 1, %v3272
        %v3274 = vrot.slane %v2273, %v3273
        %v3275 = vlaneseq
        %v3276 = vshrl.u32 %v3275, 7
        %v3277 = vsub.s32 2, %v3276
        %v3278 = vrot.slane %v2273, %v3277
        %v3279 = vlaneseq
        %v3280 = vshrl.u32 %v3279, 7
        %v3281 = vsub.s32 3, %v3280
        %v3282 = vrot.slane %v2273, %v3281
        %v3283 = vlaneseq
        %v3284 = vshrl.u32 %v3283, 7
        %v3285 = vsub.s32 4, %v3284
        %v3286 = vrot.slane %v2273, %v3285
        %v3287 = vlaneseq
        %v3288 = vshrl.u32 %v3287, 7
        %v3289 = vsub.s32 5, %v3288
        %v3290 = vrot.slane %v2273, %v3289
        %v3291 = vlaneseq
        %v3292 = vshrl.u32 %v3291, 7
        %v3293 = vsub.s32 6, %v3292
        %v3294 = vrot.slane %v2273, %v3293
        %v3295 = vlaneseq
        %v3296 = vshrl.u32 %v3295, 7
        %v3297 = vsub.s32 7, %v3296
        %v3298 = vrot.slane %v2273, %v3297
        %v3299 = vlaneseq
        %v3300 = vshrl.u32 %v3299, 7
        %v3301 = vsub.s32 0, %v3300
        %v3302 = vrot.slane %v2274, %v3301
        %v3303 = vlaneseq
        %v3304 = vshrl.u32 %v3303, 7
        %v3305 = vsub.s32 1, %v3304
        %v3306 = vrot.slane %v2274, %v3305
        %v3307 = vlaneseq
        %v3308 = vshrl.u32 %v3307, 7
        %v3309 = vsub.s32 2, %v3308
        %v3310 = vrot.slane %v2274, %v3309
        %v3311 = vlaneseq
        %v3312 = vshrl.u32 %v3311, 7
        %v3313 = vsub.s32 3, %v3312
        %v3314 = vrot.slane %v2274, %v3313
        %v3315 = vlaneseq
        %v3316 = vshrl.u32 %v3315, 7
        %v3317 = vsub.s32 4, %v3316
        %v3318 = vrot.slane %v2274, %v3317
        %v3319 = vlaneseq
        %v3320 = vshrl.u32 %v3319, 7
        %v3321 = vsub.s32 5, %v3320
        %v3322 = vrot.slane %v2274, %v3321
        %v3323 = vlaneseq
        %v3324 = vshrl.u32 %v3323, 7
        %v3325 = vsub.s32 6, %v3324
        %v3326 = vrot.slane %v2274, %v3325
        %v3327 = vlaneseq
        %v3328 = vshrl.u32 %v3327, 7
        %v3329 = vsub.s32 7, %v3328
        %v3330 = vrot.slane %v2274, %v3329
        %v3331 = vcombine.low %v2310, %v2314
        %v3332 = vcombine.low %v2318, %v2322
        %v3333 = vcombine.low %v2326, %v2330
        %v3334 = vcombine.low %v2334, %v2338
        %v3336 = vunpack.c.l.s4 1966171168
        %v3337 = vunpack.c.0.s8 %v3336
        %v3338 = vlaneseq
        %v3339 = vshrl.u32 %v3338, 7
        %v3340 = vsub.s32 %v3337, %v3339
        %v3341 = vrot.slane %v3331, %v3340
        %v3343 = vunpack.c.l.s4 1966171168
        %v3344 = vunpack.c.0.s8 %v3343
        %v3345 = vlaneseq
        %v3346 = vshrl.u32 %v3345, 7
        %v3347 = vsub.s32 %v3344, %v3346
        %v3348 = vrot.slane %v3332, %v3347
        %v3350 = vunpack.c.l.s4 1966171168
        %v3351 = vunpack.c.0.s8 %v3350
        %v3352 = vlaneseq
        %v3353 = vshrl.u32 %v3352, 7
        %v3354 = vsub.s32 %v3351, %v3353
        %v3355 = vrot.slane %v3333, %v3354
        %v3357 = vunpack.c.l.s4 1966171168
        %v3358 = vunpack.c.0.s8 %v3357
        %v3359 = vlaneseq
        %v3360 = vshrl.u32 %v3359, 7
        %v3361 = vsub.s32 %v3358, %v3360
        %v3362 = vrot.slane %v3334, %v3361
        %v3363 = vcombine.low %v3341, %v3348
        %v3364 = vcombine.low %v3355, %v3362
        %v3366 = vunpack.c.l.s4 1966171168
        %v3367 = vunpack.c.0.s8 %v3366
        %v3368 = vlaneseq
        %v3369 = vshrl.u32 %v3368, 7
        %v3370 = vsub.s32 %v3367, %v3369
        %v3371 = vrot.slane %v3363, %v3370
        %v3373 = vunpack.c.l.s4 1966171168
        %v3374 = vunpack.c.0.s8 %v3373
        %v3375 = vlaneseq
        %v3376 = vshrl.u32 %v3375, 7
        %v3377 = vsub.s32 %v3374, %v3376
        %v3378 = vrot.slane %v3364, %v3377
        %v3379 = vcombine.low %v3371, %v3378
        %v3380 = vcombine.low %v2342, %v2346
        %v3381 = vcombine.low %v2350, %v2354
        %v3382 = vcombine.low %v2358, %v2362
        %v3383 = vcombine.low %v2366, %v2370
        %v3385 = vunpack.c.l.s4 1966171168
        %v3386 = vunpack.c.0.s8 %v3385
        %v3387 = vlaneseq
        %v3388 = vshrl.u32 %v3387, 7
        %v3389 = vsub.s32 %v3386, %v3388
        %v3390 = vrot.slane %v3380, %v3389
        %v3392 = vunpack.c.l.s4 1966171168
        %v3393 = vunpack.c.0.s8 %v3392
        %v3394 = vlaneseq
        %v3395 = vshrl.u32 %v3394, 7
        %v3396 = vsub.s32 %v3393, %v3395
        %v3397 = vrot.slane %v3381, %v3396
        %v3399 = vunpack.c.l.s4 1966171168
        %v3400 = vunpack.c.0.s8 %v3399
        %v3401 = vlaneseq
        %v3402 = vshrl.u32 %v3401, 7
        %v3403 = vsub.s32 %v3400, %v3402
        %v3404 = vrot.slane %v3382, %v3403
        %v3406 = vunpack.c.l.s4 1966171168
        %v3407 = vunpack.c.0.s8 %v3406
        %v3408 = vlaneseq
        %v3409 = vshrl.u32 %v3408, 7
        %v3410 = vsub.s32 %v3407, %v3409
        %v3411 = vrot.slane %v3383, %v3410
        %v3412 = vcombine.low %v3390, %v3397
        %v3413 = vcombine.low %v3404, %v3411
        %v3415 = vunpack.c.l.s4 1966171168
        %v3416 = vunpack.c.0.s8 %v3415
        %v3417 = vlaneseq
        %v3418 = vshrl.u32 %v3417, 7
        %v3419 = vsub.s32 %v3416, %v3418
        %v3420 = vrot.slane %v3412, %v3419
        %v3422 = vunpack.c.l.s4 1966171168
        %v3423 = vunpack.c.0.s8 %v3422
        %v3424 = vlaneseq
        %v3425 = vshrl.u32 %v3424, 7
        %v3426 = vsub.s32 %v3423, %v3425
        %v3427 = vrot.slane %v3413, %v3426
        %v3428 = vcombine.low %v3420, %v3427
        %v3429 = vcombine.low %v2374, %v2378
        %v3430 = vcombine.low %v2382, %v2386
        %v3431 = vcombine.low %v2390, %v2394
        %v3432 = vcombine.low %v2398, %v2402
        %v3434 = vunpack.c.l.s4 1966171168
        %v3435 = vunpack.c.0.s8 %v3434
        %v3436 = vlaneseq
        %v3437 = vshrl.u32 %v3436, 7
        %v3438 = vsub.s32 %v3435, %v3437
        %v3439 = vrot.slane %v3429, %v3438
        %v3441 = vunpack.c.l.s4 1966171168
        %v3442 = vunpack.c.0.s8 %v3441
        %v3443 = vlaneseq
        %v3444 = vshrl.u32 %v3443, 7
        %v3445 = vsub.s32 %v3442, %v3444
        %v3446 = vrot.slane %v3430, %v3445
        %v3448 = vunpack.c.l.s4 1966171168
        %v3449 = vunpack.c.0.s8 %v3448
        %v3450 = vlaneseq
        %v3451 = vshrl.u32 %v3450, 7
        %v3452 = vsub.s32 %v3449, %v3451
        %v3453 = vrot.slane %v3431, %v3452
        %v3455 = vunpack.c.l.s4 1966171168
        %v3456 = vunpack.c.0.s8 %v3455
        %v3457 = vlaneseq
        %v3458 = vshrl.u32 %v3457, 7
        %v3459 = vsub.s32 %v3456, %v3458
        %v3460 = vrot.slane %v3432, %v3459
        %v3461 = vcombine.low %v3439, %v3446
        %v3462 = vcombine.low %v3453, %v3460
        %v3464 = vunpack.c.l.s4 1966171168
        %v3465 = vunpack.c.0.s8 %v3464
        %v3466 = vlaneseq
        %v3467 = vshrl.u32 %v3466, 7
        %v3468 = vsub.s32 %v3465, %v3467
        %v3469 = vrot.slane %v3461, %v3468
        %v3471 = vunpack.c.l.s4 1966171168
        %v3472 = vunpack.c.0.s8 %v3471
        %v3473 = vlaneseq
        %v3474 = vshrl.u32 %v3473, 7
        %v3475 = vsub.s32 %v3472, %v3474
        %v3476 = vrot.slane %v3462, %v3475
        %v3477 = vcombine.low %v3469, %v3476
        %v3478 = vcombine.low %v2406, %v2410
        %v3479 = vcombine.low %v2414, %v2418
        %v3480 = vcombine.low %v2422, %v2426
        %v3481 = vcombine.low %v2430, %v2434
        %v3483 = vunpack.c.l.s4 1966171168
        %v3484 = vunpack.c.0.s8 %v3483
        %v3485 = vlaneseq
        %v3486 = vshrl.u32 %v3485, 7
        %v3487 = vsub.s32 %v3484, %v3486
        %v3488 = vrot.slane %v3478, %v3487
        %v3490 = vunpack.c.l.s4 1966171168
        %v3491 = vunpack.c.0.s8 %v3490
        %v3492 = vlaneseq
        %v3493 = vshrl.u32 %v3492, 7
        %v3494 = vsub.s32 %v3491, %v3493
        %v3495 = vrot.slane %v3479, %v3494
        %v3497 = vunpack.c.l.s4 1966171168
        %v3498 = vunpack.c.0.s8 %v3497
        %v3499 = vlaneseq
        %v3500 = vshrl.u32 %v3499, 7
        %v3501 = vsub.s32 %v3498, %v3500
        %v3502 = vrot.slane %v3480, %v3501
        %v3504 = vunpack.c.l.s4 1966171168
        %v3505 = vunpack.c.0.s8 %v3504
        %v3506 = vlaneseq
        %v3507 = vshrl.u32 %v3506, 7
        %v3508 = vsub.s32 %v3505, %v3507
        %v3509 = vrot.slane %v3481, %v3508
        %v3510 = vcombine.low %v3488, %v3495
        %v3511 = vcombine.low %v3502, %v3509
        %v3513 = vunpack.c.l.s4 1966171168
        %v3514 = vunpack.c.0.s8 %v3513
        %v3515 = vlaneseq
        %v3516 = vshrl.u32 %v3515, 7
        %v3517 = vsub.s32 %v3514, %v3516
        %v3518 = vrot.slane %v3510, %v3517
        %v3520 = vunpack.c.l.s4 1966171168
        %v3521 = vunpack.c.0.s8 %v3520
        %v3522 = vlaneseq
        %v3523 = vshrl.u32 %v3522, 7
        %v3524 = vsub.s32 %v3521, %v3523
        %v3525 = vrot.slane %v3511, %v3524
        %v3526 = vcombine.low %v3518, %v3525
        %v3527 = vcombine.low %v2438, %v2442
        %v3528 = vcombine.low %v2446, %v2450
        %v3529 = vcombine.low %v2454, %v2458
        %v3530 = vcombine.low %v2462, %v2466
        %v3532 = vunpack.c.l.s4 1966171168
        %v3533 = vunpack.c.0.s8 %v3532
        %v3534 = vlaneseq
        %v3535 = vshrl.u32 %v3534, 7
        %v3536 = vsub.s32 %v3533, %v3535
        %v3537 = vrot.slane %v3527, %v3536
        %v3539 = vunpack.c.l.s4 1966171168
        %v3540 = vunpack.c.0.s8 %v3539
        %v3541 = vlaneseq
        %v3542 = vshrl.u32 %v3541, 7
        %v3543 = vsub.s32 %v3540, %v3542
        %v3544 = vrot.slane %v3528, %v3543
        %v3546 = vunpack.c.l.s4 1966171168
        %v3547 = vunpack.c.0.s8 %v3546
        %v3548 = vlaneseq
        %v3549 = vshrl.u32 %v3548, 7
        %v3550 = vsub.s32 %v3547, %v3549
        %v3551 = vrot.slane %v3529, %v3550
        %v3553 = vunpack.c.l.s4 1966171168
        %v3554 = vunpack.c.0.s8 %v3553
        %v3555 = vlaneseq
        %v3556 = vshrl.u32 %v3555, 7
        %v3557 = vsub.s32 %v3554, %v3556
        %v3558 = vrot.slane %v3530, %v3557
        %v3559 = vcombine.low %v3537, %v3544
        %v3560 = vcombine.low %v3551, %v3558
        %v3562 = vunpack.c.l.s4 1966171168
        %v3563 = vunpack.c.0.s8 %v3562
        %v3564 = vlaneseq
        %v3565 = vshrl.u32 %v3564, 7
        %v3566 = vsub.s32 %v3563, %v3565
        %v3567 = vrot.slane %v3559, %v3566
        %v3569 = vunpack.c.l.s4 1966171168
        %v3570 = vunpack.c.0.s8 %v3569
        %v3571 = vlaneseq
        %v3572 = vshrl.u32 %v3571, 7
        %v3573 = vsub.s32 %v3570, %v3572
        %v3574 = vrot.slane %v3560, %v3573
        %v3575 = vcombine.low %v3567, %v3574
        %v3576 = vcombine.low %v2470, %v2474
        %v3577 = vcombine.low %v2478, %v2482
        %v3578 = vcombine.low %v2486, %v2490
        %v3579 = vcombine.low %v2494, %v2498
        %v3581 = vunpack.c.l.s4 1966171168
        %v3582 = vunpack.c.0.s8 %v3581
        %v3583 = vlaneseq
        %v3584 = vshrl.u32 %v3583, 7
        %v3585 = vsub.s32 %v3582, %v3584
        %v3586 = vrot.slane %v3576, %v3585
        %v3588 = vunpack.c.l.s4 1966171168
        %v3589 = vunpack.c.0.s8 %v3588
        %v3590 = vlaneseq
        %v3591 = vshrl.u32 %v3590, 7
        %v3592 = vsub.s32 %v3589, %v3591
        %v3593 = vrot.slane %v3577, %v3592
        %v3595 = vunpack.c.l.s4 1966171168
        %v3596 = vunpack.c.0.s8 %v3595
        %v3597 = vlaneseq
        %v3598 = vshrl.u32 %v3597, 7
        %v3599 = vsub.s32 %v3596, %v3598
        %v3600 = vrot.slane %v3578, %v3599
        %v3602 = vunpack.c.l.s4 1966171168
        %v3603 = vunpack.c.0.s8 %v3602
        %v3604 = vlaneseq
        %v3605 = vshrl.u32 %v3604, 7
        %v3606 = vsub.s32 %v3603, %v3605
        %v3607 = vrot.slane %v3579, %v3606
        %v3608 = vcombine.low %v3586, %v3593
        %v3609 = vcombine.low %v3600, %v3607
        %v3611 = vunpack.c.l.s4 1966171168
        %v3612 = vunpack.c.0.s8 %v3611
        %v3613 = vlaneseq
        %v3614 = vshrl.u32 %v3613, 7
        %v3615 = vsub.s32 %v3612, %v3614
        %v3616 = vrot.slane %v3608, %v3615
        %v3618 = vunpack.c.l.s4 1966171168
        %v3619 = vunpack.c.0.s8 %v3618
        %v3620 = vlaneseq
        %v3621 = vshrl.u32 %v3620, 7
        %v3622 = vsub.s32 %v3619, %v3621
        %v3623 = vrot.slane %v3609, %v3622
        %v3624 = vcombine.low %v3616, %v3623
        %v3625 = vcombine.low %v2502, %v2506
        %v3626 = vcombine.low %v2510, %v2514
        %v3627 = vcombine.low %v2518, %v2522
        %v3628 = vcombine.low %v2526, %v2530
        %v3630 = vunpack.c.l.s4 1966171168
        %v3631 = vunpack.c.0.s8 %v3630
        %v3632 = vlaneseq
        %v3633 = vshrl.u32 %v3632, 7
        %v3634 = vsub.s32 %v3631, %v3633
        %v3635 = vrot.slane %v3625, %v3634
        %v3637 = vunpack.c.l.s4 1966171168
        %v3638 = vunpack.c.0.s8 %v3637
        %v3639 = vlaneseq
        %v3640 = vshrl.u32 %v3639, 7
        %v3641 = vsub.s32 %v3638, %v3640
        %v3642 = vrot.slane %v3626, %v3641
        %v3644 = vunpack.c.l.s4 1966171168
        %v3645 = vunpack.c.0.s8 %v3644
        %v3646 = vlaneseq
        %v3647 = vshrl.u32 %v3646, 7
        %v3648 = vsub.s32 %v3645, %v3647
        %v3649 = vrot.slane %v3627, %v3648
        %v3651 = vunpack.c.l.s4 1966171168
        %v3652 = vunpack.c.0.s8 %v3651
        %v3653 = vlaneseq
        %v3654 = vshrl.u32 %v3653, 7
        %v3655 = vsub.s32 %v3652, %v3654
        %v3656 = vrot.slane %v3628, %v3655
        %v3657 = vcombine.low %v3635, %v3642
        %v3658 = vcombine.low %v3649, %v3656
        %v3660 = vunpack.c.l.s4 1966171168
        %v3661 = vunpack.c.0.s8 %v3660
        %v3662 = vlaneseq
        %v3663 = vshrl.u32 %v3662, 7
        %v3664 = vsub.s32 %v3661, %v3663
        %v3665 = vrot.slane %v3657, %v3664
        %v3667 = vunpack.c.l.s4 1966171168
        %v3668 = vunpack.c.0.s8 %v3667
        %v3669 = vlaneseq
        %v3670 = vshrl.u32 %v3669, 7
        %v3671 = vsub.s32 %v3668, %v3670
        %v3672 = vrot.slane %v3658, %v3671
        %v3673 = vcombine.low %v3665, %v3672
        %v3674 = vcombine.low %v2534, %v2538
        %v3675 = vcombine.low %v2542, %v2546
        %v3676 = vcombine.low %v2550, %v2554
        %v3677 = vcombine.low %v2558, %v2562
        %v3679 = vunpack.c.l.s4 1966171168
        %v3680 = vunpack.c.0.s8 %v3679
        %v3681 = vlaneseq
        %v3682 = vshrl.u32 %v3681, 7
        %v3683 = vsub.s32 %v3680, %v3682
        %v3684 = vrot.slane %v3674, %v3683
        %v3686 = vunpack.c.l.s4 1966171168
        %v3687 = vunpack.c.0.s8 %v3686
        %v3688 = vlaneseq
        %v3689 = vshrl.u32 %v3688, 7
        %v3690 = vsub.s32 %v3687, %v3689
        %v3691 = vrot.slane %v3675, %v3690
        %v3693 = vunpack.c.l.s4 1966171168
        %v3694 = vunpack.c.0.s8 %v3693
        %v3695 = vlaneseq
        %v3696 = vshrl.u32 %v3695, 7
        %v3697 = vsub.s32 %v3694, %v3696
        %v3698 = vrot.slane %v3676, %v3697
        %v3700 = vunpack.c.l.s4 1966171168
        %v3701 = vunpack.c.0.s8 %v3700
        %v3702 = vlaneseq
        %v3703 = vshrl.u32 %v3702, 7
        %v3704 = vsub.s32 %v3701, %v3703
        %v3705 = vrot.slane %v3677, %v3704
        %v3706 = vcombine.low %v3684, %v3691
        %v3707 = vcombine.low %v3698, %v3705
        %v3709 = vunpack.c.l.s4 1966171168
        %v3710 = vunpack.c.0.s8 %v3709
        %v3711 = vlaneseq
        %v3712 = vshrl.u32 %v3711, 7
        %v3713 = vsub.s32 %v3710, %v3712
        %v3714 = vrot.slane %v3706, %v3713
        %v3716 = vunpack.c.l.s4 1966171168
        %v3717 = vunpack.c.0.s8 %v3716
        %v3718 = vlaneseq
        %v3719 = vshrl.u32 %v3718, 7
        %v3720 = vsub.s32 %v3717, %v3719
        %v3721 = vrot.slane %v3707, %v3720
        %v3722 = vcombine.low %v3714, %v3721
        %v3723 = vcombine.low %v2566, %v2570
        %v3724 = vcombine.low %v2574, %v2578
        %v3725 = vcombine.low %v2582, %v2586
        %v3726 = vcombine.low %v2590, %v2594
        %v3728 = vunpack.c.l.s4 1966171168
        %v3729 = vunpack.c.0.s8 %v3728
        %v3730 = vlaneseq
        %v3731 = vshrl.u32 %v3730, 7
        %v3732 = vsub.s32 %v3729, %v3731
        %v3733 = vrot.slane %v3723, %v3732
        %v3735 = vunpack.c.l.s4 1966171168
        %v3736 = vunpack.c.0.s8 %v3735
        %v3737 = vlaneseq
        %v3738 = vshrl.u32 %v3737, 7
        %v3739 = vsub.s32 %v3736, %v3738
        %v3740 = vrot.slane %v3724, %v3739
        %v3742 = vunpack.c.l.s4 1966171168
        %v3743 = vunpack.c.0.s8 %v3742
        %v3744 = vlaneseq
        %v3745 = vshrl.u32 %v3744, 7
        %v3746 = vsub.s32 %v3743, %v3745
        %v3747 = vrot.slane %v3725, %v3746
        %v3749 = vunpack.c.l.s4 1966171168
        %v3750 = vunpack.c.0.s8 %v3749
        %v3751 = vlaneseq
        %v3752 = vshrl.u32 %v3751, 7
        %v3753 = vsub.s32 %v3750, %v3752
        %v3754 = vrot.slane %v3726, %v3753
        %v3755 = vcombine.low %v3733, %v3740
        %v3756 = vcombine.low %v3747, %v3754
        %v3758 = vunpack.c.l.s4 1966171168
        %v3759 = vunpack.c.0.s8 %v3758
        %v3760 = vlaneseq
        %v3761 = vshrl.u32 %v3760, 7
        %v3762 = vsub.s32 %v3759, %v3761
        %v3763 = vrot.slane %v3755, %v3762
        %v3765 = vunpack.c.l.s4 1966171168
        %v3766 = vunpack.c.0.s8 %v3765
        %v3767 = vlaneseq
        %v3768 = vshrl.u32 %v3767, 7
        %v3769 = vsub.s32 %v3766, %v3768
        %v3770 = vrot.slane %v3756, %v3769
        %v3771 = vcombine.low %v3763, %v3770
        %v3772 = vcombine.low %v2598, %v2602
        %v3773 = vcombine.low %v2606, %v2610
        %v3774 = vcombine.low %v2614, %v2618
        %v3775 = vcombine.low %v2622, %v2626
        %v3777 = vunpack.c.l.s4 1966171168
        %v3778 = vunpack.c.0.s8 %v3777
        %v3779 = vlaneseq
        %v3780 = vshrl.u32 %v3779, 7
        %v3781 = vsub.s32 %v3778, %v3780
        %v3782 = vrot.slane %v3772, %v3781
        %v3784 = vunpack.c.l.s4 1966171168
        %v3785 = vunpack.c.0.s8 %v3784
        %v3786 = vlaneseq
        %v3787 = vshrl.u32 %v3786, 7
        %v3788 = vsub.s32 %v3785, %v3787
        %v3789 = vrot.slane %v3773, %v3788
        %v3791 = vunpack.c.l.s4 1966171168
        %v3792 = vunpack.c.0.s8 %v3791
        %v3793 = vlaneseq
        %v3794 = vshrl.u32 %v3793, 7
        %v3795 = vsub.s32 %v3792, %v3794
        %v3796 = vrot.slane %v3774, %v3795
        %v3798 = vunpack.c.l.s4 1966171168
        %v3799 = vunpack.c.0.s8 %v3798
        %v3800 = vlaneseq
        %v3801 = vshrl.u32 %v3800, 7
        %v3802 = vsub.s32 %v3799, %v3801
        %v3803 = vrot.slane %v3775, %v3802
        %v3804 = vcombine.low %v3782, %v3789
        %v3805 = vcombine.low %v3796, %v3803
        %v3807 = vunpack.c.l.s4 1966171168
        %v3808 = vunpack.c.0.s8 %v3807
        %v3809 = vlaneseq
        %v3810 = vshrl.u32 %v3809, 7
        %v3811 = vsub.s32 %v3808, %v3810
        %v3812 = vrot.slane %v3804, %v3811
        %v3814 = vunpack.c.l.s4 1966171168
        %v3815 = vunpack.c.0.s8 %v3814
        %v3816 = vlaneseq
        %v3817 = vshrl.u32 %v3816, 7
        %v3818 = vsub.s32 %v3815, %v3817
        %v3819 = vrot.slane %v3805, %v3818
        %v3820 = vcombine.low %v3812, %v3819
        %v3821 = vcombine.low %v2630, %v2634
        %v3822 = vcombine.low %v2638, %v2642
        %v3823 = vcombine.low %v2646, %v2650
        %v3824 = vcombine.low %v2654, %v2658
        %v3826 = vunpack.c.l.s4 1966171168
        %v3827 = vunpack.c.0.s8 %v3826
        %v3828 = vlaneseq
        %v3829 = vshrl.u32 %v3828, 7
        %v3830 = vsub.s32 %v3827, %v3829
        %v3831 = vrot.slane %v3821, %v3830
        %v3833 = vunpack.c.l.s4 1966171168
        %v3834 = vunpack.c.0.s8 %v3833
        %v3835 = vlaneseq
        %v3836 = vshrl.u32 %v3835, 7
        %v3837 = vsub.s32 %v3834, %v3836
        %v3838 = vrot.slane %v3822, %v3837
        %v3840 = vunpack.c.l.s4 1966171168
        %v3841 = vunpack.c.0.s8 %v3840
        %v3842 = vlaneseq
        %v3843 = vshrl.u32 %v3842, 7
        %v3844 = vsub.s32 %v3841, %v3843
        %v3845 = vrot.slane %v3823, %v3844
        %v3847 = vunpack.c.l.s4 1966171168
        %v3848 = vunpack.c.0.s8 %v3847
        %v3849 = vlaneseq
        %v3850 = vshrl.u32 %v3849, 7
        %v3851 = vsub.s32 %v3848, %v3850
        %v3852 = vrot.slane %v3824, %v3851
        %v3853 = vcombine.low %v3831, %v3838
        %v3854 = vcombine.low %v3845, %v3852
        %v3856 = vunpack.c.l.s4 1966171168
        %v3857 = vunpack.c.0.s8 %v3856
        %v3858 = vlaneseq
        %v3859 = vshrl.u32 %v3858, 7
        %v3860 = vsub.s32 %v3857, %v3859
        %v3861 = vrot.slane %v3853, %v3860
        %v3863 = vunpack.c.l.s4 1966171168
        %v3864 = vunpack.c.0.s8 %v3863
        %v3865 = vlaneseq
        %v3866 = vshrl.u32 %v3865, 7
        %v3867 = vsub.s32 %v3864, %v3866
        %v3868 = vrot.slane %v3854, %v3867
        %v3869 = vcombine.low %v3861, %v3868
        %v3870 = vcombine.low %v2662, %v2666
        %v3871 = vcombine.low %v2670, %v2674
        %v3872 = vcombine.low %v2678, %v2682
        %v3873 = vcombine.low %v2686, %v2690
        %v3875 = vunpack.c.l.s4 1966171168
        %v3876 = vunpack.c.0.s8 %v3875
        %v3877 = vlaneseq
        %v3878 = vshrl.u32 %v3877, 7
        %v3879 = vsub.s32 %v3876, %v3878
        %v3880 = vrot.slane %v3870, %v3879
        %v3882 = vunpack.c.l.s4 1966171168
        %v3883 = vunpack.c.0.s8 %v3882
        %v3884 = vlaneseq
        %v3885 = vshrl.u32 %v3884, 7
        %v3886 = vsub.s32 %v3883, %v3885
        %v3887 = vrot.slane %v3871, %v3886
        %v3889 = vunpack.c.l.s4 1966171168
        %v3890 = vunpack.c.0.s8 %v3889
        %v3891 = vlaneseq
        %v3892 = vshrl.u32 %v3891, 7
        %v3893 = vsub.s32 %v3890, %v3892
        %v3894 = vrot.slane %v3872, %v3893
        %v3896 = vunpack.c.l.s4 1966171168
        %v3897 = vunpack.c.0.s8 %v3896
        %v3898 = vlaneseq
        %v3899 = vshrl.u32 %v3898, 7
        %v3900 = vsub.s32 %v3897, %v3899
        %v3901 = vrot.slane %v3873, %v3900
        %v3902 = vcombine.low %v3880, %v3887
        %v3903 = vcombine.low %v3894, %v3901
        %v3905 = vunpack.c.l.s4 1966171168
        %v3906 = vunpack.c.0.s8 %v3905
        %v3907 = vlaneseq
        %v3908 = vshrl.u32 %v3907, 7
        %v3909 = vsub.s32 %v3906, %v3908
        %v3910 = vrot.slane %v3902, %v3909
        %v3912 = vunpack.c.l.s4 1966171168
        %v3913 = vunpack.c.0.s8 %v3912
        %v3914 = vlaneseq
        %v3915 = vshrl.u32 %v3914, 7
        %v3916 = vsub.s32 %v3913, %v3915
        %v3917 = vrot.slane %v3903, %v3916
        %v3918 = vcombine.low %v3910, %v3917
        %v3919 = vcombine.low %v2694, %v2698
        %v3920 = vcombine.low %v2702, %v2706
        %v3921 = vcombine.low %v2710, %v2714
        %v3922 = vcombine.low %v2718, %v2722
        %v3924 = vunpack.c.l.s4 1966171168
        %v3925 = vunpack.c.0.s8 %v3924
        %v3926 = vlaneseq
        %v3927 = vshrl.u32 %v3926, 7
        %v3928 = vsub.s32 %v3925, %v3927
        %v3929 = vrot.slane %v3919, %v3928
        %v3931 = vunpack.c.l.s4 1966171168
        %v3932 = vunpack.c.0.s8 %v3931
        %v3933 = vlaneseq
        %v3934 = vshrl.u32 %v3933, 7
        %v3935 = vsub.s32 %v3932, %v3934
        %v3936 = vrot.slane %v3920, %v3935
        %v3938 = vunpack.c.l.s4 1966171168
        %v3939 = vunpack.c.0.s8 %v3938
        %v3940 = vlaneseq
        %v3941 = vshrl.u32 %v3940, 7
        %v3942 = vsub.s32 %v3939, %v3941
        %v3943 = vrot.slane %v3921, %v3942
        %v3945 = vunpack.c.l.s4 1966171168
        %v3946 = vunpack.c.0.s8 %v3945
        %v3947 = vlaneseq
        %v3948 = vshrl.u32 %v3947, 7
        %v3949 = vsub.s32 %v3946, %v3948
        %v3950 = vrot.slane %v3922, %v3949
        %v3951 = vcombine.low %v3929, %v3936
        %v3952 = vcombine.low %v3943, %v3950
        %v3954 = vunpack.c.l.s4 1966171168
        %v3955 = vunpack.c.0.s8 %v3954
        %v3956 = vlaneseq
        %v3957 = vshrl.u32 %v3956, 7
        %v3958 = vsub.s32 %v3955, %v3957
        %v3959 = vrot.slane %v3951, %v3958
        %v3961 = vunpack.c.l.s4 1966171168
        %v3962 = vunpack.c.0.s8 %v3961
        %v3963 = vlaneseq
        %v3964 = vshrl.u32 %v3963, 7
        %v3965 = vsub.s32 %v3962, %v3964
        %v3966 = vrot.slane %v3952, %v3965
        %v3967 = vcombine.low %v3959, %v3966
        %v3968 = vcombine.low %v2726, %v2730
        %v3969 = vcombine.low %v2734, %v2738
        %v3970 = vcombine.low %v2742, %v2746
        %v3971 = vcombine.low %v2750, %v2754
        %v3973 = vunpack.c.l.s4 1966171168
        %v3974 = vunpack.c.0.s8 %v3973
        %v3975 = vlaneseq
        %v3976 = vshrl.u32 %v3975, 7
        %v3977 = vsub.s32 %v3974, %v3976
        %v3978 = vrot.slane %v3968, %v3977
        %v3980 = vunpack.c.l.s4 1966171168
        %v3981 = vunpack.c.0.s8 %v3980
        %v3982 = vlaneseq
        %v3983 = vshrl.u32 %v3982, 7
        %v3984 = vsub.s32 %v3981, %v3983
        %v3985 = vrot.slane %v3969, %v3984
        %v3987 = vunpack.c.l.s4 1966171168
        %v3988 = vunpack.c.0.s8 %v3987
        %v3989 = vlaneseq
        %v3990 = vshrl.u32 %v3989, 7
        %v3991 = vsub.s32 %v3988, %v3990
        %v3992 = vrot.slane %v3970, %v3991
        %v3994 = vunpack.c.l.s4 1966171168
        %v3995 = vunpack.c.0.s8 %v3994
        %v3996 = vlaneseq
        %v3997 = vshrl.u32 %v3996, 7
        %v3998 = vsub.s32 %v3995, %v3997
        %v3999 = vrot.slane %v3971, %v3998
        %v4000 = vcombine.low %v3978, %v3985
        %v4001 = vcombine.low %v3992, %v3999
        %v4003 = vunpack.c.l.s4 1966171168
        %v4004 = vunpack.c.0.s8 %v4003
        %v4005 = vlaneseq
        %v4006 = vshrl.u32 %v4005, 7
        %v4007 = vsub.s32 %v4004, %v4006
        %v4008 = vrot.slane %v4000, %v4007
        %v4010 = vunpack.c.l.s4 1966171168
        %v4011 = vunpack.c.0.s8 %v4010
        %v4012 = vlaneseq
        %v4013 = vshrl.u32 %v4012, 7
        %v4014 = vsub.s32 %v4011, %v4013
        %v4015 = vrot.slane %v4001, %v4014
        %v4016 = vcombine.low %v4008, %v4015
        %v4017 = vcombine.low %v2758, %v2762
        %v4018 = vcombine.low %v2766, %v2770
        %v4019 = vcombine.low %v2774, %v2778
        %v4020 = vcombine.low %v2782, %v2786
        %v4022 = vunpack.c.l.s4 1966171168
        %v4023 = vunpack.c.0.s8 %v4022
        %v4024 = vlaneseq
        %v4025 = vshrl.u32 %v4024, 7
        %v4026 = vsub.s32 %v4023, %v4025
        %v4027 = vrot.slane %v4017, %v4026
        %v4029 = vunpack.c.l.s4 1966171168
        %v4030 = vunpack.c.0.s8 %v4029
        %v4031 = vlaneseq
        %v4032 = vshrl.u32 %v4031, 7
        %v4033 = vsub.s32 %v4030, %v4032
        %v4034 = vrot.slane %v4018, %v4033
        %v4036 = vunpack.c.l.s4 1966171168
        %v4037 = vunpack.c.0.s8 %v4036
        %v4038 = vlaneseq
        %v4039 = vshrl.u32 %v4038, 7
        %v4040 = vsub.s32 %v4037, %v4039
        %v4041 = vrot.slane %v4019, %v4040
        %v4043 = vunpack.c.l.s4 1966171168
        %v4044 = vunpack.c.0.s8 %v4043
        %v4045 = vlaneseq
        %v4046 = vshrl.u32 %v4045, 7
        %v4047 = vsub.s32 %v4044, %v4046
        %v4048 = vrot.slane %v4020, %v4047
        %v4049 = vcombine.low %v4027, %v4034
        %v4050 = vcombine.low %v4041, %v4048
        %v4052 = vunpack.c.l.s4 1966171168
        %v4053 = vunpack.c.0.s8 %v4052
        %v4054 = vlaneseq
        %v4055 = vshrl.u32 %v4054, 7
        %v4056 = vsub.s32 %v4053, %v4055
        %v4057 = vrot.slane %v4049, %v4056
        %v4059 = vunpack.c.l.s4 1966171168
        %v4060 = vunpack.c.0.s8 %v4059
        %v4061 = vlaneseq
        %v4062 = vshrl.u32 %v4061, 7
        %v4063 = vsub.s32 %v4060, %v4062
        %v4064 = vrot.slane %v4050, %v4063
        %v4065 = vcombine.low %v4057, %v4064
        %v4066 = vcombine.low %v2790, %v2794
        %v4067 = vcombine.low %v2798, %v2802
        %v4068 = vcombine.low %v2806, %v2810
        %v4069 = vcombine.low %v2814, %v2818
        %v4071 = vunpack.c.l.s4 1966171168
        %v4072 = vunpack.c.0.s8 %v4071
        %v4073 = vlaneseq
        %v4074 = vshrl.u32 %v4073, 7
        %v4075 = vsub.s32 %v4072, %v4074
        %v4076 = vrot.slane %v4066, %v4075
        %v4078 = vunpack.c.l.s4 1966171168
        %v4079 = vunpack.c.0.s8 %v4078
        %v4080 = vlaneseq
        %v4081 = vshrl.u32 %v4080, 7
        %v4082 = vsub.s32 %v4079, %v4081
        %v4083 = vrot.slane %v4067, %v4082
        %v4085 = vunpack.c.l.s4 1966171168
        %v4086 = vunpack.c.0.s8 %v4085
        %v4087 = vlaneseq
        %v4088 = vshrl.u32 %v4087, 7
        %v4089 = vsub.s32 %v4086, %v4088
        %v4090 = vrot.slane %v4068, %v4089
        %v4092 = vunpack.c.l.s4 1966171168
        %v4093 = vunpack.c.0.s8 %v4092
        %v4094 = vlaneseq
        %v4095 = vshrl.u32 %v4094, 7
        %v4096 = vsub.s32 %v4093, %v4095
        %v4097 = vrot.slane %v4069, %v4096
        %v4098 = vcombine.low %v4076, %v4083
        %v4099 = vcombine.low %v4090, %v4097
        %v4101 = vunpack.c.l.s4 1966171168
        %v4102 = vunpack.c.0.s8 %v4101
        %v4103 = vlaneseq
        %v4104 = vshrl.u32 %v4103, 7
        %v4105 = vsub.s32 %v4102, %v4104
        %v4106 = vrot.slane %v4098, %v4105
        %v4108 = vunpack.c.l.s4 1966171168
        %v4109 = vunpack.c.0.s8 %v4108
        %v4110 = vlaneseq
        %v4111 = vshrl.u32 %v4110, 7
        %v4112 = vsub.s32 %v4109, %v4111
        %v4113 = vrot.slane %v4099, %v4112
        %v4114 = vcombine.low %v4106, %v4113
        %v4115 = vcombine.low %v2822, %v2826
        %v4116 = vcombine.low %v2830, %v2834
        %v4117 = vcombine.low %v2838, %v2842
        %v4118 = vcombine.low %v2846, %v2850
        %v4120 = vunpack.c.l.s4 1966171168
        %v4121 = vunpack.c.0.s8 %v4120
        %v4122 = vlaneseq
        %v4123 = vshrl.u32 %v4122, 7
        %v4124 = vsub.s32 %v4121, %v4123
        %v4125 = vrot.slane %v4115, %v4124
        %v4127 = vunpack.c.l.s4 1966171168
        %v4128 = vunpack.c.0.s8 %v4127
        %v4129 = vlaneseq
        %v4130 = vshrl.u32 %v4129, 7
        %v4131 = vsub.s32 %v4128, %v4130
        %v4132 = vrot.slane %v4116, %v4131
        %v4134 = vunpack.c.l.s4 1966171168
        %v4135 = vunpack.c.0.s8 %v4134
        %v4136 = vlaneseq
        %v4137 = vshrl.u32 %v4136, 7
        %v4138 = vsub.s32 %v4135, %v4137
        %v4139 = vrot.slane %v4117, %v4138
        %v4141 = vunpack.c.l.s4 1966171168
        %v4142 = vunpack.c.0.s8 %v4141
        %v4143 = vlaneseq
        %v4144 = vshrl.u32 %v4143, 7
        %v4145 = vsub.s32 %v4142, %v4144
        %v4146 = vrot.slane %v4118, %v4145
        %v4147 = vcombine.low %v4125, %v4132
        %v4148 = vcombine.low %v4139, %v4146
        %v4150 = vunpack.c.l.s4 1966171168
        %v4151 = vunpack.c.0.s8 %v4150
        %v4152 = vlaneseq
        %v4153 = vshrl.u32 %v4152, 7
        %v4154 = vsub.s32 %v4151, %v4153
        %v4155 = vrot.slane %v4147, %v4154
        %v4157 = vunpack.c.l.s4 1966171168
        %v4158 = vunpack.c.0.s8 %v4157
        %v4159 = vlaneseq
        %v4160 = vshrl.u32 %v4159, 7
        %v4161 = vsub.s32 %v4158, %v4160
        %v4162 = vrot.slane %v4148, %v4161
        %v4163 = vcombine.low %v4155, %v4162
        %v4164 = vcombine.low %v2854, %v2858
        %v4165 = vcombine.low %v2862, %v2866
        %v4166 = vcombine.low %v2870, %v2874
        %v4167 = vcombine.low %v2878, %v2882
        %v4169 = vunpack.c.l.s4 1966171168
        %v4170 = vunpack.c.0.s8 %v4169
        %v4171 = vlaneseq
        %v4172 = vshrl.u32 %v4171, 7
        %v4173 = vsub.s32 %v4170, %v4172
        %v4174 = vrot.slane %v4164, %v4173
        %v4176 = vunpack.c.l.s4 1966171168
        %v4177 = vunpack.c.0.s8 %v4176
        %v4178 = vlaneseq
        %v4179 = vshrl.u32 %v4178, 7
        %v4180 = vsub.s32 %v4177, %v4179
        %v4181 = vrot.slane %v4165, %v4180
        %v4183 = vunpack.c.l.s4 1966171168
        %v4184 = vunpack.c.0.s8 %v4183
        %v4185 = vlaneseq
        %v4186 = vshrl.u32 %v4185, 7
        %v4187 = vsub.s32 %v4184, %v4186
        %v4188 = vrot.slane %v4166, %v4187
        %v4190 = vunpack.c.l.s4 1966171168
        %v4191 = vunpack.c.0.s8 %v4190
        %v4192 = vlaneseq
        %v4193 = vshrl.u32 %v4192, 7
        %v4194 = vsub.s32 %v4191, %v4193
        %v4195 = vrot.slane %v4167, %v4194
        %v4196 = vcombine.low %v4174, %v4181
        %v4197 = vcombine.low %v4188, %v4195
        %v4199 = vunpack.c.l.s4 1966171168
        %v4200 = vunpack.c.0.s8 %v4199
        %v4201 = vlaneseq
        %v4202 = vshrl.u32 %v4201, 7
        %v4203 = vsub.s32 %v4200, %v4202
        %v4204 = vrot.slane %v4196, %v4203
        %v4206 = vunpack.c.l.s4 1966171168
        %v4207 = vunpack.c.0.s8 %v4206
        %v4208 = vlaneseq
        %v4209 = vshrl.u32 %v4208, 7
        %v4210 = vsub.s32 %v4207, %v4209
        %v4211 = vrot.slane %v4197, %v4210
        %v4212 = vcombine.low %v4204, %v4211
        %v4213 = vcombine.low %v2886, %v2890
        %v4214 = vcombine.low %v2894, %v2898
        %v4215 = vcombine.low %v2902, %v2906
        %v4216 = vcombine.low %v2910, %v2914
        %v4218 = vunpack.c.l.s4 1966171168
        %v4219 = vunpack.c.0.s8 %v4218
        %v4220 = vlaneseq
        %v4221 = vshrl.u32 %v4220, 7
        %v4222 = vsub.s32 %v4219, %v4221
        %v4223 = vrot.slane %v4213, %v4222
        %v4225 = vunpack.c.l.s4 1966171168
        %v4226 = vunpack.c.0.s8 %v4225
        %v4227 = vlaneseq
        %v4228 = vshrl.u32 %v4227, 7
        %v4229 = vsub.s32 %v4226, %v4228
        %v4230 = vrot.slane %v4214, %v4229
        %v4232 = vunpack.c.l.s4 1966171168
        %v4233 = vunpack.c.0.s8 %v4232
        %v4234 = vlaneseq
        %v4235 = vshrl.u32 %v4234, 7
        %v4236 = vsub.s32 %v4233, %v4235
        %v4237 = vrot.slane %v4215, %v4236
        %v4239 = vunpack.c.l.s4 1966171168
        %v4240 = vunpack.c.0.s8 %v4239
        %v4241 = vlaneseq
        %v4242 = vshrl.u32 %v4241, 7
        %v4243 = vsub.s32 %v4240, %v4242
        %v4244 = vrot.slane %v4216, %v4243
        %v4245 = vcombine.low %v4223, %v4230
        %v4246 = vcombine.low %v4237, %v4244
        %v4248 = vunpack.c.l.s4 1966171168
        %v4249 = vunpack.c.0.s8 %v4248
        %v4250 = vlaneseq
        %v4251 = vshrl.u32 %v4250, 7
        %v4252 = vsub.s32 %v4249, %v4251
        %v4253 = vrot.slane %v4245, %v4252
        %v4255 = vunpack.c.l.s4 1966171168
        %v4256 = vunpack.c.0.s8 %v4255
        %v4257 = vlaneseq
        %v4258 = vshrl.u32 %v4257, 7
        %v4259 = vsub.s32 %v4256, %v4258
        %v4260 = vrot.slane %v4246, %v4259
        %v4261 = vcombine.low %v4253, %v4260
        %v4262 = vcombine.low %v2918, %v2922
        %v4263 = vcombine.low %v2926, %v2930
        %v4264 = vcombine.low %v2934, %v2938
        %v4265 = vcombine.low %v2942, %v2946
        %v4267 = vunpack.c.l.s4 1966171168
        %v4268 = vunpack.c.0.s8 %v4267
        %v4269 = vlaneseq
        %v4270 = vshrl.u32 %v4269, 7
        %v4271 = vsub.s32 %v4268, %v4270
        %v4272 = vrot.slane %v4262, %v4271
        %v4274 = vunpack.c.l.s4 1966171168
        %v4275 = vunpack.c.0.s8 %v4274
        %v4276 = vlaneseq
        %v4277 = vshrl.u32 %v4276, 7
        %v4278 = vsub.s32 %v4275, %v4277
        %v4279 = vrot.slane %v4263, %v4278
        %v4281 = vunpack.c.l.s4 1966171168
        %v4282 = vunpack.c.0.s8 %v4281
        %v4283 = vlaneseq
        %v4284 = vshrl.u32 %v4283, 7
        %v4285 = vsub.s32 %v4282, %v4284
        %v4286 = vrot.slane %v4264, %v4285
        %v4288 = vunpack.c.l.s4 1966171168
        %v4289 = vunpack.c.0.s8 %v4288
        %v4290 = vlaneseq
        %v4291 = vshrl.u32 %v4290, 7
        %v4292 = vsub.s32 %v4289, %v4291
        %v4293 = vrot.slane %v4265, %v4292
        %v4294 = vcombine.low %v4272, %v4279
        %v4295 = vcombine.low %v4286, %v4293
        %v4297 = vunpack.c.l.s4 1966171168
        %v4298 = vunpack.c.0.s8 %v4297
        %v4299 = vlaneseq
        %v4300 = vshrl.u32 %v4299, 7
        %v4301 = vsub.s32 %v4298, %v4300
        %v4302 = vrot.slane %v4294, %v4301
        %v4304 = vunpack.c.l.s4 1966171168
        %v4305 = vunpack.c.0.s8 %v4304
        %v4306 = vlaneseq
        %v4307 = vshrl.u32 %v4306, 7
        %v4308 = vsub.s32 %v4305, %v4307
        %v4309 = vrot.slane %v4295, %v4308
        %v4310 = vcombine.low %v4302, %v4309
        %v4311 = vcombine.low %v2950, %v2954
        %v4312 = vcombine.low %v2958, %v2962
        %v4313 = vcombine.low %v2966, %v2970
        %v4314 = vcombine.low %v2974, %v2978
        %v4316 = vunpack.c.l.s4 1966171168
        %v4317 = vunpack.c.0.s8 %v4316
        %v4318 = vlaneseq
        %v4319 = vshrl.u32 %v4318, 7
        %v4320 = vsub.s32 %v4317, %v4319
        %v4321 = vrot.slane %v4311, %v4320
        %v4323 = vunpack.c.l.s4 1966171168
        %v4324 = vunpack.c.0.s8 %v4323
        %v4325 = vlaneseq
        %v4326 = vshrl.u32 %v4325, 7
        %v4327 = vsub.s32 %v4324, %v4326
        %v4328 = vrot.slane %v4312, %v4327
        %v4330 = vunpack.c.l.s4 1966171168
        %v4331 = vunpack.c.0.s8 %v4330
        %v4332 = vlaneseq
        %v4333 = vshrl.u32 %v4332, 7
        %v4334 = vsub.s32 %v4331, %v4333
        %v4335 = vrot.slane %v4313, %v4334
        %v4337 = vunpack.c.l.s4 1966171168
        %v4338 = vunpack.c.0.s8 %v4337
        %v4339 = vlaneseq
        %v4340 = vshrl.u32 %v4339, 7
        %v4341 = vsub.s32 %v4338, %v4340
        %v4342 = vrot.slane %v4314, %v4341
        %v4343 = vcombine.low %v4321, %v4328
        %v4344 = vcombine.low %v4335, %v4342
        %v4346 = vunpack.c.l.s4 1966171168
        %v4347 = vunpack.c.0.s8 %v4346
        %v4348 = vlaneseq
        %v4349 = vshrl.u32 %v4348, 7
        %v4350 = vsub.s32 %v4347, %v4349
        %v4351 = vrot.slane %v4343, %v4350
        %v4353 = vunpack.c.l.s4 1966171168
        %v4354 = vunpack.c.0.s8 %v4353
        %v4355 = vlaneseq
        %v4356 = vshrl.u32 %v4355, 7
        %v4357 = vsub.s32 %v4354, %v4356
        %v4358 = vrot.slane %v4344, %v4357
        %v4359 = vcombine.low %v4351, %v4358
        %v4360 = vcombine.low %v2982, %v2986
        %v4361 = vcombine.low %v2990, %v2994
        %v4362 = vcombine.low %v2998, %v3002
        %v4363 = vcombine.low %v3006, %v3010
        %v4365 = vunpack.c.l.s4 1966171168
        %v4366 = vunpack.c.0.s8 %v4365
        %v4367 = vlaneseq
        %v4368 = vshrl.u32 %v4367, 7
        %v4369 = vsub.s32 %v4366, %v4368
        %v4370 = vrot.slane %v4360, %v4369
        %v4372 = vunpack.c.l.s4 1966171168
        %v4373 = vunpack.c.0.s8 %v4372
        %v4374 = vlaneseq
        %v4375 = vshrl.u32 %v4374, 7
        %v4376 = vsub.s32 %v4373, %v4375
        %v4377 = vrot.slane %v4361, %v4376
        %v4379 = vunpack.c.l.s4 1966171168
        %v4380 = vunpack.c.0.s8 %v4379
        %v4381 = vlaneseq
        %v4382 = vshrl.u32 %v4381, 7
        %v4383 = vsub.s32 %v4380, %v4382
        %v4384 = vrot.slane %v4362, %v4383
        %v4386 = vunpack.c.l.s4 1966171168
        %v4387 = vunpack.c.0.s8 %v4386
        %v4388 = vlaneseq
        %v4389 = vshrl.u32 %v4388, 7
        %v4390 = vsub.s32 %v4387, %v4389
        %v4391 = vrot.slane %v4363, %v4390
        %v4392 = vcombine.low %v4370, %v4377
        %v4393 = vcombine.low %v4384, %v4391
        %v4395 = vunpack.c.l.s4 1966171168
        %v4396 = vunpack.c.0.s8 %v4395
        %v4397 = vlaneseq
        %v4398 = vshrl.u32 %v4397, 7
        %v4399 = vsub.s32 %v4396, %v4398
        %v4400 = vrot.slane %v4392, %v4399
        %v4402 = vunpack.c.l.s4 1966171168
        %v4403 = vunpack.c.0.s8 %v4402
        %v4404 = vlaneseq
        %v4405 = vshrl.u32 %v4404, 7
        %v4406 = vsub.s32 %v4403, %v4405
        %v4407 = vrot.slane %v4393, %v4406
        %v4408 = vcombine.low %v4400, %v4407
        %v4409 = vcombine.low %v3014, %v3018
        %v4410 = vcombine.low %v3022, %v3026
        %v4411 = vcombine.low %v3030, %v3034
        %v4412 = vcombine.low %v3038, %v3042
        %v4414 = vunpack.c.l.s4 1966171168
        %v4415 = vunpack.c.0.s8 %v4414
        %v4416 = vlaneseq
        %v4417 = vshrl.u32 %v4416, 7
        %v4418 = vsub.s32 %v4415, %v4417
        %v4419 = vrot.slane %v4409, %v4418
        %v4421 = vunpack.c.l.s4 1966171168
        %v4422 = vunpack.c.0.s8 %v4421
        %v4423 = vlaneseq
        %v4424 = vshrl.u32 %v4423, 7
        %v4425 = vsub.s32 %v4422, %v4424
        %v4426 = vrot.slane %v4410, %v4425
        %v4428 = vunpack.c.l.s4 1966171168
        %v4429 = vunpack.c.0.s8 %v4428
        %v4430 = vlaneseq
        %v4431 = vshrl.u32 %v4430, 7
        %v4432 = vsub.s32 %v4429, %v4431
        %v4433 = vrot.slane %v4411, %v4432
        %v4435 = vunpack.c.l.s4 1966171168
        %v4436 = vunpack.c.0.s8 %v4435
        %v4437 = vlaneseq
        %v4438 = vshrl.u32 %v4437, 7
        %v4439 = vsub.s32 %v4436, %v4438
        %v4440 = vrot.slane %v4412, %v4439
        %v4441 = vcombine.low %v4419, %v4426
        %v4442 = vcombine.low %v4433, %v4440
        %v4444 = vunpack.c.l.s4 1966171168
        %v4445 = vunpack.c.0.s8 %v4444
        %v4446 = vlaneseq
        %v4447 = vshrl.u32 %v4446, 7
        %v4448 = vsub.s32 %v4445, %v4447
        %v4449 = vrot.slane %v4441, %v4448
        %v4451 = vunpack.c.l.s4 1966171168
        %v4452 = vunpack.c.0.s8 %v4451
        %v4453 = vlaneseq
        %v4454 = vshrl.u32 %v4453, 7
        %v4455 = vsub.s32 %v4452, %v4454
        %v4456 = vrot.slane %v4442, %v4455
        %v4457 = vcombine.low %v4449, %v4456
        %v4458 = vcombine.low %v3046, %v3050
        %v4459 = vcombine.low %v3054, %v3058
        %v4460 = vcombine.low %v3062, %v3066
        %v4461 = vcombine.low %v3070, %v3074
        %v4463 = vunpack.c.l.s4 1966171168
        %v4464 = vunpack.c.0.s8 %v4463
        %v4465 = vlaneseq
        %v4466 = vshrl.u32 %v4465, 7
        %v4467 = vsub.s32 %v4464, %v4466
        %v4468 = vrot.slane %v4458, %v4467
        %v4470 = vunpack.c.l.s4 1966171168
        %v4471 = vunpack.c.0.s8 %v4470
        %v4472 = vlaneseq
        %v4473 = vshrl.u32 %v4472, 7
        %v4474 = vsub.s32 %v4471, %v4473
        %v4475 = vrot.slane %v4459, %v4474
        %v4477 = vunpack.c.l.s4 1966171168
        %v4478 = vunpack.c.0.s8 %v4477
        %v4479 = vlaneseq
        %v4480 = vshrl.u32 %v4479, 7
        %v4481 = vsub.s32 %v4478, %v4480
        %v4482 = vrot.slane %v4460, %v4481
        %v4484 = vunpack.c.l.s4 1966171168
        %v4485 = vunpack.c.0.s8 %v4484
        %v4486 = vlaneseq
        %v4487 = vshrl.u32 %v4486, 7
        %v4488 = vsub.s32 %v4485, %v4487
        %v4489 = vrot.slane %v4461, %v4488
        %v4490 = vcombine.low %v4468, %v4475
        %v4491 = vcombine.low %v4482, %v4489
        %v4493 = vunpack.c.l.s4 1966171168
        %v4494 = vunpack.c.0.s8 %v4493
        %v4495 = vlaneseq
        %v4496 = vshrl.u32 %v4495, 7
        %v4497 = vsub.s32 %v4494, %v4496
        %v4498 = vrot.slane %v4490, %v4497
        %v4500 = vunpack.c.l.s4 1966171168
        %v4501 = vunpack.c.0.s8 %v4500
        %v4502 = vlaneseq
        %v4503 = vshrl.u32 %v4502, 7
        %v4504 = vsub.s32 %v4501, %v4503
        %v4505 = vrot.slane %v4491, %v4504
        %v4506 = vcombine.low %v4498, %v4505
        %v4507 = vcombine.low %v3078, %v3082
        %v4508 = vcombine.low %v3086, %v3090
        %v4509 = vcombine.low %v3094, %v3098
        %v4510 = vcombine.low %v3102, %v3106
        %v4512 = vunpack.c.l.s4 1966171168
        %v4513 = vunpack.c.0.s8 %v4512
        %v4514 = vlaneseq
        %v4515 = vshrl.u32 %v4514, 7
        %v4516 = vsub.s32 %v4513, %v4515
        %v4517 = vrot.slane %v4507, %v4516
        %v4519 = vunpack.c.l.s4 1966171168
        %v4520 = vunpack.c.0.s8 %v4519
        %v4521 = vlaneseq
        %v4522 = vshrl.u32 %v4521, 7
        %v4523 = vsub.s32 %v4520, %v4522
        %v4524 = vrot.slane %v4508, %v4523
        %v4526 = vunpack.c.l.s4 1966171168
        %v4527 = vunpack.c.0.s8 %v4526
        %v4528 = vlaneseq
        %v4529 = vshrl.u32 %v4528, 7
        %v4530 = vsub.s32 %v4527, %v4529
        %v4531 = vrot.slane %v4509, %v4530
        %v4533 = vunpack.c.l.s4 1966171168
        %v4534 = vunpack.c.0.s8 %v4533
        %v4535 = vlaneseq
        %v4536 = vshrl.u32 %v4535, 7
        %v4537 = vsub.s32 %v4534, %v4536
        %v4538 = vrot.slane %v4510, %v4537
        %v4539 = vcombine.low %v4517, %v4524
        %v4540 = vcombine.low %v4531, %v4538
        %v4542 = vunpack.c.l.s4 1966171168
        %v4543 = vunpack.c.0.s8 %v4542
        %v4544 = vlaneseq
        %v4545 = vshrl.u32 %v4544, 7
        %v4546 = vsub.s32 %v4543, %v4545
        %v4547 = vrot.slane %v4539, %v4546
        %v4549 = vunpack.c.l.s4 1966171168
        %v4550 = vunpack.c.0.s8 %v4549
        %v4551 = vlaneseq
        %v4552 = vshrl.u32 %v4551, 7
        %v4553 = vsub.s32 %v4550, %v4552
        %v4554 = vrot.slane %v4540, %v4553
        %v4555 = vcombine.low %v4547, %v4554
        %v4556 = vcombine.low %v3110, %v3114
        %v4557 = vcombine.low %v3118, %v3122
        %v4558 = vcombine.low %v3126, %v3130
        %v4559 = vcombine.low %v3134, %v3138
        %v4561 = vunpack.c.l.s4 1966171168
        %v4562 = vunpack.c.0.s8 %v4561
        %v4563 = vlaneseq
        %v4564 = vshrl.u32 %v4563, 7
        %v4565 = vsub.s32 %v4562, %v4564
        %v4566 = vrot.slane %v4556, %v4565
        %v4568 = vunpack.c.l.s4 1966171168
        %v4569 = vunpack.c.0.s8 %v4568
        %v4570 = vlaneseq
        %v4571 = vshrl.u32 %v4570, 7
        %v4572 = vsub.s32 %v4569, %v4571
        %v4573 = vrot.slane %v4557, %v4572
        %v4575 = vunpack.c.l.s4 1966171168
        %v4576 = vunpack.c.0.s8 %v4575
        %v4577 = vlaneseq
        %v4578 = vshrl.u32 %v4577, 7
        %v4579 = vsub.s32 %v4576, %v4578
        %v4580 = vrot.slane %v4558, %v4579
        %v4582 = vunpack.c.l.s4 1966171168
        %v4583 = vunpack.c.0.s8 %v4582
        %v4584 = vlaneseq
        %v4585 = vshrl.u32 %v4584, 7
        %v4586 = vsub.s32 %v4583, %v4585
        %v4587 = vrot.slane %v4559, %v4586
        %v4588 = vcombine.low %v4566, %v4573
        %v4589 = vcombine.low %v4580, %v4587
        %v4591 = vunpack.c.l.s4 1966171168
        %v4592 = vunpack.c.0.s8 %v4591
        %v4593 = vlaneseq
        %v4594 = vshrl.u32 %v4593, 7
        %v4595 = vsub.s32 %v4592, %v4594
        %v4596 = vrot.slane %v4588, %v4595
        %v4598 = vunpack.c.l.s4 1966171168
        %v4599 = vunpack.c.0.s8 %v4598
        %v4600 = vlaneseq
        %v4601 = vshrl.u32 %v4600, 7
        %v4602 = vsub.s32 %v4599, %v4601
        %v4603 = vrot.slane %v4589, %v4602
        %v4604 = vcombine.low %v4596, %v4603
        %v4605 = vcombine.low %v3142, %v3146
        %v4606 = vcombine.low %v3150, %v3154
        %v4607 = vcombine.low %v3158, %v3162
        %v4608 = vcombine.low %v3166, %v3170
        %v4610 = vunpack.c.l.s4 1966171168
        %v4611 = vunpack.c.0.s8 %v4610
        %v4612 = vlaneseq
        %v4613 = vshrl.u32 %v4612, 7
        %v4614 = vsub.s32 %v4611, %v4613
        %v4615 = vrot.slane %v4605, %v4614
        %v4617 = vunpack.c.l.s4 1966171168
        %v4618 = vunpack.c.0.s8 %v4617
        %v4619 = vlaneseq
        %v4620 = vshrl.u32 %v4619, 7
        %v4621 = vsub.s32 %v4618, %v4620
        %v4622 = vrot.slane %v4606, %v4621
        %v4624 = vunpack.c.l.s4 1966171168
        %v4625 = vunpack.c.0.s8 %v4624
        %v4626 = vlaneseq
        %v4627 = vshrl.u32 %v4626, 7
        %v4628 = vsub.s32 %v4625, %v4627
        %v4629 = vrot.slane %v4607, %v4628
        %v4631 = vunpack.c.l.s4 1966171168
        %v4632 = vunpack.c.0.s8 %v4631
        %v4633 = vlaneseq
        %v4634 = vshrl.u32 %v4633, 7
        %v4635 = vsub.s32 %v4632, %v4634
        %v4636 = vrot.slane %v4608, %v4635
        %v4637 = vcombine.low %v4615, %v4622
        %v4638 = vcombine.low %v4629, %v4636
        %v4640 = vunpack.c.l.s4 1966171168
        %v4641 = vunpack.c.0.s8 %v4640
        %v4642 = vlaneseq
        %v4643 = vshrl.u32 %v4642, 7
        %v4644 = vsub.s32 %v4641, %v4643
        %v4645 = vrot.slane %v4637, %v4644
        %v4647 = vunpack.c.l.s4 1966171168
        %v4648 = vunpack.c.0.s8 %v4647
        %v4649 = vlaneseq
        %v4650 = vshrl.u32 %v4649, 7
        %v4651 = vsub.s32 %v4648, %v4650
        %v4652 = vrot.slane %v4638, %v4651
        %v4653 = vcombine.low %v4645, %v4652
        %v4654 = vcombine.low %v3174, %v3178
        %v4655 = vcombine.low %v3182, %v3186
        %v4656 = vcombine.low %v3190, %v3194
        %v4657 = vcombine.low %v3198, %v3202
        %v4659 = vunpack.c.l.s4 1966171168
        %v4660 = vunpack.c.0.s8 %v4659
        %v4661 = vlaneseq
        %v4662 = vshrl.u32 %v4661, 7
        %v4663 = vsub.s32 %v4660, %v4662
        %v4664 = vrot.slane %v4654, %v4663
        %v4666 = vunpack.c.l.s4 1966171168
        %v4667 = vunpack.c.0.s8 %v4666
        %v4668 = vlaneseq
        %v4669 = vshrl.u32 %v4668, 7
        %v4670 = vsub.s32 %v4667, %v4669
        %v4671 = vrot.slane %v4655, %v4670
        %v4673 = vunpack.c.l.s4 1966171168
        %v4674 = vunpack.c.0.s8 %v4673
        %v4675 = vlaneseq
        %v4676 = vshrl.u32 %v4675, 7
        %v4677 = vsub.s32 %v4674, %v4676
        %v4678 = vrot.slane %v4656, %v4677
        %v4680 = vunpack.c.l.s4 1966171168
        %v4681 = vunpack.c.0.s8 %v4680
        %v4682 = vlaneseq
        %v4683 = vshrl.u32 %v4682, 7
        %v4684 = vsub.s32 %v4681, %v4683
        %v4685 = vrot.slane %v4657, %v4684
        %v4686 = vcombine.low %v4664, %v4671
        %v4687 = vcombine.low %v4678, %v4685
        %v4689 = vunpack.c.l.s4 1966171168
        %v4690 = vunpack.c.0.s8 %v4689
        %v4691 = vlaneseq
        %v4692 = vshrl.u32 %v4691, 7
        %v4693 = vsub.s32 %v4690, %v4692
        %v4694 = vrot.slane %v4686, %v4693
        %v4696 = vunpack.c.l.s4 1966171168
        %v4697 = vunpack.c.0.s8 %v4696
        %v4698 = vlaneseq
        %v4699 = vshrl.u32 %v4698, 7
        %v4700 = vsub.s32 %v4697, %v4699
        %v4701 = vrot.slane %v4687, %v4700
        %v4702 = vcombine.low %v4694, %v4701
        %v4703 = vcombine.low %v3206, %v3210
        %v4704 = vcombine.low %v3214, %v3218
        %v4705 = vcombine.low %v3222, %v3226
        %v4706 = vcombine.low %v3230, %v3234
        %v4708 = vunpack.c.l.s4 1966171168
        %v4709 = vunpack.c.0.s8 %v4708
        %v4710 = vlaneseq
        %v4711 = vshrl.u32 %v4710, 7
        %v4712 = vsub.s32 %v4709, %v4711
        %v4713 = vrot.slane %v4703, %v4712
        %v4715 = vunpack.c.l.s4 1966171168
        %v4716 = vunpack.c.0.s8 %v4715
        %v4717 = vlaneseq
        %v4718 = vshrl.u32 %v4717, 7
        %v4719 = vsub.s32 %v4716, %v4718
        %v4720 = vrot.slane %v4704, %v4719
        %v4722 = vunpack.c.l.s4 1966171168
        %v4723 = vunpack.c.0.s8 %v4722
        %v4724 = vlaneseq
        %v4725 = vshrl.u32 %v4724, 7
        %v4726 = vsub.s32 %v4723, %v4725
        %v4727 = vrot.slane %v4705, %v4726
        %v4729 = vunpack.c.l.s4 1966171168
        %v4730 = vunpack.c.0.s8 %v4729
        %v4731 = vlaneseq
        %v4732 = vshrl.u32 %v4731, 7
        %v4733 = vsub.s32 %v4730, %v4732
        %v4734 = vrot.slane %v4706, %v4733
        %v4735 = vcombine.low %v4713, %v4720
        %v4736 = vcombine.low %v4727, %v4734
        %v4738 = vunpack.c.l.s4 1966171168
        %v4739 = vunpack.c.0.s8 %v4738
        %v4740 = vlaneseq
        %v4741 = vshrl.u32 %v4740, 7
        %v4742 = vsub.s32 %v4739, %v4741
        %v4743 = vrot.slane %v4735, %v4742
        %v4745 = vunpack.c.l.s4 1966171168
        %v4746 = vunpack.c.0.s8 %v4745
        %v4747 = vlaneseq
        %v4748 = vshrl.u32 %v4747, 7
        %v4749 = vsub.s32 %v4746, %v4748
        %v4750 = vrot.slane %v4736, %v4749
        %v4751 = vcombine.low %v4743, %v4750
        %v4752 = vcombine.low %v3238, %v3242
        %v4753 = vcombine.low %v3246, %v3250
        %v4754 = vcombine.low %v3254, %v3258
        %v4755 = vcombine.low %v3262, %v3266
        %v4757 = vunpack.c.l.s4 1966171168
        %v4758 = vunpack.c.0.s8 %v4757
        %v4759 = vlaneseq
        %v4760 = vshrl.u32 %v4759, 7
        %v4761 = vsub.s32 %v4758, %v4760
        %v4762 = vrot.slane %v4752, %v4761
        %v4764 = vunpack.c.l.s4 1966171168
        %v4765 = vunpack.c.0.s8 %v4764
        %v4766 = vlaneseq
        %v4767 = vshrl.u32 %v4766, 7
        %v4768 = vsub.s32 %v4765, %v4767
        %v4769 = vrot.slane %v4753, %v4768
        %v4771 = vunpack.c.l.s4 1966171168
        %v4772 = vunpack.c.0.s8 %v4771
        %v4773 = vlaneseq
        %v4774 = vshrl.u32 %v4773, 7
        %v4775 = vsub.s32 %v4772, %v4774
        %v4776 = vrot.slane %v4754, %v4775
        %v4778 = vunpack.c.l.s4 1966171168
        %v4779 = vunpack.c.0.s8 %v4778
        %v4780 = vlaneseq
        %v4781 = vshrl.u32 %v4780, 7
        %v4782 = vsub.s32 %v4779, %v4781
        %v4783 = vrot.slane %v4755, %v4782
        %v4784 = vcombine.low %v4762, %v4769
        %v4785 = vcombine.low %v4776, %v4783
        %v4787 = vunpack.c.l.s4 1966171168
        %v4788 = vunpack.c.0.s8 %v4787
        %v4789 = vlaneseq
        %v4790 = vshrl.u32 %v4789, 7
        %v4791 = vsub.s32 %v4788, %v4790
        %v4792 = vrot.slane %v4784, %v4791
        %v4794 = vunpack.c.l.s4 1966171168
        %v4795 = vunpack.c.0.s8 %v4794
        %v4796 = vlaneseq
        %v4797 = vshrl.u32 %v4796, 7
        %v4798 = vsub.s32 %v4795, %v4797
        %v4799 = vrot.slane %v4785, %v4798
        %v4800 = vcombine.low %v4792, %v4799
        %v4801 = vcombine.low %v3270, %v3274
        %v4802 = vcombine.low %v3278, %v3282
        %v4803 = vcombine.low %v3286, %v3290
        %v4804 = vcombine.low %v3294, %v3298
        %v4806 = vunpack.c.l.s4 1966171168
        %v4807 = vunpack.c.0.s8 %v4806
        %v4808 = vlaneseq
        %v4809 = vshrl.u32 %v4808, 7
        %v4810 = vsub.s32 %v4807, %v4809
        %v4811 = vrot.slane %v4801, %v4810
        %v4813 = vunpack.c.l.s4 1966171168
        %v4814 = vunpack.c.0.s8 %v4813
        %v4815 = vlaneseq
        %v4816 = vshrl.u32 %v4815, 7
        %v4817 = vsub.s32 %v4814, %v4816
        %v4818 = vrot.slane %v4802, %v4817
        %v4820 = vunpack.c.l.s4 1966171168
        %v4821 = vunpack.c.0.s8 %v4820
        %v4822 = vlaneseq
        %v4823 = vshrl.u32 %v4822, 7
        %v4824 = vsub.s32 %v4821, %v4823
        %v4825 = vrot.slane %v4803, %v4824
        %v4827 = vunpack.c.l.s4 1966171168
        %v4828 = vunpack.c.0.s8 %v4827
        %v4829 = vlaneseq
        %v4830 = vshrl.u32 %v4829, 7
        %v4831 = vsub.s32 %v4828, %v4830
        %v4832 = vrot.slane %v4804, %v4831
        %v4833 = vcombine.low %v4811, %v4818
        %v4834 = vcombine.low %v4825, %v4832
        %v4836 = vunpack.c.l.s4 1966171168
        %v4837 = vunpack.c.0.s8 %v4836
        %v4838 = vlaneseq
        %v4839 = vshrl.u32 %v4838, 7
        %v4840 = vsub.s32 %v4837, %v4839
        %v4841 = vrot.slane %v4833, %v4840
        %v4843 = vunpack.c.l.s4 1966171168
        %v4844 = vunpack.c.0.s8 %v4843
        %v4845 = vlaneseq
        %v4846 = vshrl.u32 %v4845, 7
        %v4847 = vsub.s32 %v4844, %v4846
        %v4848 = vrot.slane %v4834, %v4847
        %v4849 = vcombine.low %v4841, %v4848
        %v4850 = vcombine.low %v3302, %v3306
        %v4851 = vcombine.low %v3310, %v3314
        %v4852 = vcombine.low %v3318, %v3322
        %v4853 = vcombine.low %v3326, %v3330
        %v4855 = vunpack.c.l.s4 1966171168
        %v4856 = vunpack.c.0.s8 %v4855
        %v4857 = vlaneseq
        %v4858 = vshrl.u32 %v4857, 7
        %v4859 = vsub.s32 %v4856, %v4858
        %v4860 = vrot.slane %v4850, %v4859
        %v4862 = vunpack.c.l.s4 1966171168
        %v4863 = vunpack.c.0.s8 %v4862
        %v4864 = vlaneseq
        %v4865 = vshrl.u32 %v4864, 7
        %v4866 = vsub.s32 %v4863, %v4865
        %v4867 = vrot.slane %v4851, %v4866
        %v4869 = vunpack.c.l.s4 1966171168
        %v4870 = vunpack.c.0.s8 %v4869
        %v4871 = vlaneseq
        %v4872 = vshrl.u32 %v4871, 7
        %v4873 = vsub.s32 %v4870, %v4872
        %v4874 = vrot.slane %v4852, %v4873
        %v4876 = vunpack.c.l.s4 1966171168
        %v4877 = vunpack.c.0.s8 %v4876
        %v4878 = vlaneseq
        %v4879 = vshrl.u32 %v4878, 7
        %v4880 = vsub.s32 %v4877, %v4879
        %v4881 = vrot.slane %v4853, %v4880
        %v4882 = vcombine.low %v4860, %v4867
        %v4883 = vcombine.low %v4874, %v4881
        %v4885 = vunpack.c.l.s4 1966171168
        %v4886 = vunpack.c.0.s8 %v4885
        %v4887 = vlaneseq
        %v4888 = vshrl.u32 %v4887, 7
        %v4889 = vsub.s32 %v4886, %v4888
        %v4890 = vrot.slane %v4882, %v4889
        %v4892 = vunpack.c.l.s4 1966171168
        %v4893 = vunpack.c.0.s8 %v4892
        %v4894 = vlaneseq
        %v4895 = vshrl.u32 %v4894, 7
        %v4896 = vsub.s32 %v4893, %v4895
        %v4897 = vrot.slane %v4883, %v4896
        %v4898 = vcombine.low %v4890, %v4897
        %4899 = vset.pattern.permute.xlu0 0
        %4900 = vperm.xlu0 %4899, %v3379
        %v4901 = vpop.permute.xlu0 %4900
        %4902 = vset.pattern.permute.xlu0 0
        %4903 = vperm.xlu0 %4902, %v3428
        %v4904 = vpop.permute.xlu0 %4903
        %4905 = vset.pattern.permute.xlu0 0
        %4906 = vperm.xlu0 %4905, %v3477
        %v4907 = vpop.permute.xlu0 %4906
        %4908 = vset.pattern.permute.xlu0 0
        %4909 = vperm.xlu0 %4908, %v3526
        %v4910 = vpop.permute.xlu0 %4909
        %4911 = vset.pattern.permute.xlu0 0
        %4912 = vperm.xlu0 %4911, %v3575
        %v4913 = vpop.permute.xlu0 %4912
        %4914 = vset.pattern.permute.xlu0 0
        %4915 = vperm.xlu0 %4914, %v3624
        %v4916 = vpop.permute.xlu0 %4915
        %4917 = vset.pattern.permute.xlu0 0
        %4918 = vperm.xlu0 %4917, %v3673
        %v4919 = vpop.permute.xlu0 %4918
        %4920 = vset.pattern.permute.xlu0 0
        %4921 = vperm.xlu0 %4920, %v3722
        %v4922 = vpop.permute.xlu0 %4921
        %4923 = vset.pattern.permute.xlu0 0
        %4924 = vperm.xlu0 %4923, %v3771
        %v4925 = vpop.permute.xlu0 %4924
        %4926 = vset.pattern.permute.xlu0 0
        %4927 = vperm.xlu0 %4926, %v3820
        %v4928 = vpop.permute.xlu0 %4927
        %4929 = vset.pattern.permute.xlu0 0
        %4930 = vperm.xlu0 %4929, %v3869
        %v4931 = vpop.permute.xlu0 %4930
        %4932 = vset.pattern.permute.xlu0 0
        %4933 = vperm.xlu0 %4932, %v3918
        %v4934 = vpop.permute.xlu0 %4933
        %4935 = vset.pattern.permute.xlu0 0
        %4936 = vperm.xlu0 %4935, %v3967
        %v4937 = vpop.permute.xlu0 %4936
        %4938 = vset.pattern.permute.xlu0 0
        %4939 = vperm.xlu0 %4938, %v4016
        %v4940 = vpop.permute.xlu0 %4939
        %4941 = vset.pattern.permute.xlu0 0
        %4942 = vperm.xlu0 %4941, %v4065
        %v4943 = vpop.permute.xlu0 %4942
        %4944 = vset.pattern.permute.xlu0 0
        %4945 = vperm.xlu0 %4944, %v4114
        %v4946 = vpop.permute.xlu0 %4945
        %4947 = vset.pattern.permute.xlu0 0
        %4948 = vperm.xlu0 %4947, %v4163
        %v4949 = vpop.permute.xlu0 %4948
        %4950 = vset.pattern.permute.xlu0 0
        %4951 = vperm.xlu0 %4950, %v4212
        %v4952 = vpop.permute.xlu0 %4951
        %4953 = vset.pattern.permute.xlu0 0
        %4954 = vperm.xlu0 %4953, %v4261
        %v4955 = vpop.permute.xlu0 %4954
        %4956 = vset.pattern.permute.xlu0 0
        %4957 = vperm.xlu0 %4956, %v4310
        %v4958 = vpop.permute.xlu0 %4957
        %4959 = vset.pattern.permute.xlu0 0
        %4960 = vperm.xlu0 %4959, %v4359
        %v4961 = vpop.permute.xlu0 %4960
        %4962 = vset.pattern.permute.xlu0 0
        %4963 = vperm.xlu0 %4962, %v4408
        %v4964 = vpop.permute.xlu0 %4963
        %4965 = vset.pattern.permute.xlu0 0
        %4966 = vperm.xlu0 %4965, %v4457
        %v4967 = vpop.permute.xlu0 %4966
        %4968 = vset.pattern.permute.xlu0 0
        %4969 = vperm.xlu0 %4968, %v4506
        %v4970 = vpop.permute.xlu0 %4969
        %4971 = vset.pattern.permute.xlu0 0
        %4972 = vperm.xlu0 %4971, %v4555
        %v4973 = vpop.permute.xlu0 %4972
        %4974 = vset.pattern.permute.xlu0 0
        %4975 = vperm.xlu0 %4974, %v4604
        %v4976 = vpop.permute.xlu0 %4975
        %4977 = vset.pattern.permute.xlu0 0
        %4978 = vperm.xlu0 %4977, %v4653
        %v4979 = vpop.permute.xlu0 %4978
        %4980 = vset.pattern.permute.xlu0 0
        %4981 = vperm.xlu0 %4980, %v4702
        %v4982 = vpop.permute.xlu0 %4981
        %4983 = vset.pattern.permute.xlu0 0
        %4984 = vperm.xlu0 %4983, %v4751
        %v4985 = vpop.permute.xlu0 %4984
        %4986 = vset.pattern.permute.xlu0 0
        %4987 = vperm.xlu0 %4986, %v4800
        %v4988 = vpop.permute.xlu0 %4987
        %4989 = vset.pattern.permute.xlu0 0
        %4990 = vperm.xlu0 %4989, %v4849
        %v4991 = vpop.permute.xlu0 %4990
        %4992 = vset.pattern.permute.xlu0 0
        %4993 = vperm.xlu0 %4992, %v4898
        %v4994 = vpop.permute.xlu0 %4993
        %v4995 = vlaneseq
        %v4996 = vand.u32 %v4995, 127
        %v4997 = vlaneseq
        %v4998 = vshrl.u32 %v4997, 7
        %v4999 = vsub.s32 %v4996, %v4998
        %v5000 = vrot.slane %v4901, %v4999
        %v5001 = vadd.s32 %v4996, 4294967288
        %v5002 = vlaneseq
        %v5003 = vshrl.u32 %v5002, 7
        %v5004 = vsub.s32 %v5001, %v5003
        %v5005 = vrot.slane %v4904, %v5004
        %vm5006 = vcmask 130112
        %v5007 = vsel %vm5006, %v5005, %v5000
        %v5008 = vadd.s32 %v4996, 4294967280
        %v5009 = vlaneseq
        %v5010 = vshrl.u32 %v5009, 7
        %v5011 = vsub.s32 %v5008, %v5010
        %v5012 = vrot.slane %v4907, %v5011
        %vm5013 = vcmask 195712
        %v5014 = vsel %vm5013, %v5012, %v5007
        %v5015 = vadd.s32 %v4996, 4294967272
        %v5016 = vlaneseq
        %v5017 = vshrl.u32 %v5016, 7
        %v5018 = vsub.s32 %v5015, %v5017
        %v5019 = vrot.slane %v4910, %v5018
        %vm5020 = vcmask 261312
        %v5021 = vsel %vm5020, %v5019, %v5014
        %v5022 = vadd.s32 %v4996, 4294967264
        %v5023 = vlaneseq
        %v5024 = vshrl.u32 %v5023, 7
        %v5025 = vsub.s32 %v5022, %v5024
        %v5026 = vrot.slane %v4913, %v5025
        %vm5027 = vcmask 326912
        %v5028 = vsel %vm5027, %v5026, %v5021
        %v5029 = vadd.s32 %v4996, 4294967256
        %v5030 = vlaneseq
        %v5031 = vshrl.u32 %v5030, 7
        %v5032 = vsub.s32 %v5029, %v5031
        %v5033 = vrot.slane %v4916, %v5032
        %vm5034 = vcmask 392512
        %v5035 = vsel %vm5034, %v5033, %v5028
        %v5036 = vadd.s32 %v4996, 4294967248
        %v5037 = vlaneseq
        %v5038 = vshrl.u32 %v5037, 7
        %v5039 = vsub.s32 %v5036, %v5038
        %v5040 = vrot.slane %v4919, %v5039
        %vm5041 = vcmask 458112
        %v5042 = vsel %vm5041, %v5040, %v5035
        %v5043 = vadd.s32 %v4996, 4294967240
        %v5044 = vlaneseq
        %v5045 = vshrl.u32 %v5044, 7
        %v5046 = vsub.s32 %v5043, %v5045
        %v5047 = vrot.slane %v4922, %v5046
        %vm5048 = vcmask 523712
        %v5049 = vsel %vm5048, %v5047, %v5042
        %v5050 = vadd.s32 %v4996, 4294967232
        %v5051 = vlaneseq
        %v5052 = vshrl.u32 %v5051, 7
        %v5053 = vsub.s32 %v5050, %v5052
        %v5054 = vrot.slane %v4925, %v5053
        %vm5055 = vcmask 589312
        %v5056 = vsel %vm5055, %v5054, %v5049
        %v5057 = vadd.s32 %v4996, 4294967224
        %v5058 = vlaneseq
        %v5059 = vshrl.u32 %v5058, 7
        %v5060 = vsub.s32 %v5057, %v5059
        %v5061 = vrot.slane %v4928, %v5060
        %vm5062 = vcmask 654912
        %v5063 = vsel %vm5062, %v5061, %v5056
        %v5064 = vadd.s32 %v4996, 4294967216
        %v5065 = vlaneseq
        %v5066 = vshrl.u32 %v5065, 7
        %v5067 = vsub.s32 %v5064, %v5066
        %v5068 = vrot.slane %v4931, %v5067
        %vm5069 = vcmask 720512
        %v5070 = vsel %vm5069, %v5068, %v5063
        %v5071 = vadd.s32 %v4996, 4294967208
        %v5072 = vlaneseq
        %v5073 = vshrl.u32 %v5072, 7
        %v5074 = vsub.s32 %v5071, %v5073
        %v5075 = vrot.slane %v4934, %v5074
        %vm5076 = vcmask 786112
        %v5077 = vsel %vm5076, %v5075, %v5070
        %v5078 = vadd.s32 %v4996, 4294967200
        %v5079 = vlaneseq
        %v5080 = vshrl.u32 %v5079, 7
        %v5081 = vsub.s32 %v5078, %v5080
        %v5082 = vrot.slane %v4937, %v5081
        %vm5083 = vcmask 851712
        %v5084 = vsel %vm5083, %v5082, %v5077
        %v5085 = vadd.s32 %v4996, 4294967192
        %v5086 = vlaneseq
        %v5087 = vshrl.u32 %v5086, 7
        %v5088 = vsub.s32 %v5085, %v5087
        %v5089 = vrot.slane %v4940, %v5088
        %vm5090 = vcmask 917312
        %v5091 = vsel %vm5090, %v5089, %v5084
        %v5092 = vadd.s32 %v4996, 4294967184
        %v5093 = vlaneseq
        %v5094 = vshrl.u32 %v5093, 7
        %v5095 = vsub.s32 %v5092, %v5094
        %v5096 = vrot.slane %v4943, %v5095
        %vm5097 = vcmask 982912
        %v5098 = vsel %vm5097, %v5096, %v5091
        %v5099 = vadd.s32 %v4996, 4294967176
        %v5100 = vlaneseq
        %v5101 = vshrl.u32 %v5100, 7
        %v5102 = vsub.s32 %v5099, %v5101
        %v5103 = vrot.slane %v4946, %v5102
        %vm5104 = vcmask 1048512
        %v5105 = vsel %vm5104, %v5103, %v5098
        %v5106 = vlaneseq
        %v5107 = vshrl.u32 %v5106, 7
        %v5108 = vsub.s32 %v4996, %v5107
        %v5109 = vrot.slane %v4949, %v5108
        %v5110 = vlaneseq
        %v5111 = vshrl.u32 %v5110, 7
        %v5112 = vsub.s32 %v5001, %v5111
        %v5113 = vrot.slane %v4952, %v5112
        %v5114 = vsel %vm5006, %v5113, %v5109
        %v5115 = vlaneseq
        %v5116 = vshrl.u32 %v5115, 7
        %v5117 = vsub.s32 %v5008, %v5116
        %v5118 = vrot.slane %v4955, %v5117
        %v5119 = vsel %vm5013, %v5118, %v5114
        %v5120 = vlaneseq
        %v5121 = vshrl.u32 %v5120, 7
        %v5122 = vsub.s32 %v5015, %v5121
        %v5123 = vrot.slane %v4958, %v5122
        %v5124 = vsel %vm5020, %v5123, %v5119
        %v5125 = vlaneseq
        %v5126 = vshrl.u32 %v5125, 7
        %v5127 = vsub.s32 %v5022, %v5126
        %v5128 = vrot.slane %v4961, %v5127
        %v5129 = vsel %vm5027, %v5128, %v5124
        %v5130 = vlaneseq
        %v5131 = vshrl.u32 %v5130, 7
        %v5132 = vsub.s32 %v5029, %v5131
        %v5133 = vrot.slane %v4964, %v5132
        %v5134 = vsel %vm5034, %v5133, %v5129
        %v5135 = vlaneseq
        %v5136 = vshrl.u32 %v5135, 7
        %v5137 = vsub.s32 %v5036, %v5136
        %v5138 = vrot.slane %v4967, %v5137
        %v5139 = vsel %vm5041, %v5138, %v5134
        %v5140 = vlaneseq
        %v5141 = vshrl.u32 %v5140, 7
        %v5142 = vsub.s32 %v5043, %v5141
        %v5143 = vrot.slane %v4970, %v5142
        %v5144 = vsel %vm5048, %v5143, %v5139
        %v5145 = vlaneseq
        %v5146 = vshrl.u32 %v5145, 7
        %v5147 = vsub.s32 %v5050, %v5146
        %v5148 = vrot.slane %v4973, %v5147
        %v5149 = vsel %vm5055, %v5148, %v5144
        %v5150 = vlaneseq
        %v5151 = vshrl.u32 %v5150, 7
        %v5152 = vsub.s32 %v5057, %v5151
        %v5153 = vrot.slane %v4976, %v5152
        %v5154 = vsel %vm5062, %v5153, %v5149
        %v5155 = vlaneseq
        %v5156 = vshrl.u32 %v5155, 7
        %v5157 = vsub.s32 %v5064, %v5156
        %v5158 = vrot.slane %v4979, %v5157
        %v5159 = vsel %vm5069, %v5158, %v5154
        %v5160 = vlaneseq
        %v5161 = vshrl.u32 %v5160, 7
        %v5162 = vsub.s32 %v5071, %v5161
        %v5163 = vrot.slane %v4982, %v5162
        %v5164 = vsel %vm5076, %v5163, %v5159
        %v5165 = vlaneseq
        %v5166 = vshrl.u32 %v5165, 7
        %v5167 = vsub.s32 %v5078, %v5166
        %v5168 = vrot.slane %v4985, %v5167
        %v5169 = vsel %vm5083, %v5168, %v5164
        %v5170 = vlaneseq
        %v5171 = vshrl.u32 %v5170, 7
        %v5172 = vsub.s32 %v5085, %v5171
        %v5173 = vrot.slane %v4988, %v5172
        %v5174 = vsel %vm5090, %v5173, %v5169
        %v5175 = vlaneseq
        %v5176 = vshrl.u32 %v5175, 7
        %v5177 = vsub.s32 %v5092, %v5176
        %v5178 = vrot.slane %v4991, %v5177
        %v5179 = vsel %vm5097, %v5178, %v5174
        %v5180 = vlaneseq
        %v5181 = vshrl.u32 %v5180, 7
        %v5182 = vsub.s32 %v5099, %v5181
        %v5183 = vrot.slane %v4994, %v5182
        %v5184 = vsel %vm5104, %v5183, %v5179
        %v5185 = vcombine.low %v5105, %v5184
        %v5187 = vunpack.c.l.s4 1966171168
        %v5188 = vunpack.c.0.s8 %v5187
        %v5189 = vlaneseq
        %v5190 = vshrl.u32 %v5189, 7
        %v5191 = vsub.s32 %v5188, %v5190
        %v5192 = vrot.slane %v5185, %v5191
        %v5194 = vunpack.c.l.s4 1966171168
        %v5195 = vunpack.c.0.s8 %v5194
        %v5196 = vlaneseq
        %v5197 = vshrl.u32 %v5196, 7
        %v5198 = vsub.s32 %v5195, %v5197
        %v5199 = vrot.slane %v5192, %v5198
        %v5201 = vlaneseq
        %vm5202 = vcmp.ge.s32.totalorder %v5201, 0
        %vm5203 = vcmp.lt.s32.totalorder %v5201, 256
        %vm5204 = vmand %vm5202, %vm5203
        %5205 = vst.msk [vmem:[%s534] sm:$0x3] %vm5204, %v5199
        %s5206 = sand.u32 %s321, 1
        %s5207 = scalar_lea.sflag [#allocation5], %s5206
        %s5208 = sand.u32 %s321, 1
        %s5209 = smul.addr %s5208, 2
        %s5210 = scalar_lea.vmem [#allocation14], %s5209
        // Predicated region
        $region97: #{tpu_custom_call.1} parent=71 // pred_check
          %p5211 = pneg %p331
        $region98: #{tpu_custom_call.1} parent=71 // pred_check_branch
          %5213 = sbr.rel (%p5211) target = $region100
        $region99: #{tpu_custom_call.1} parent=71 // pred_region
          %s5214 = smul.u32 2, %s35
          %s5216 = ssub.s32 32, 32
          %5217 = vsyncadd %s5207, %s5216
          %s5218 = smul.addr %s5214, 16
          %s5219 = scalar_lea.hbm %s13, %s5218
          %s5221 = sshll.u32 %s5210, 4
          %s5222 = int_to_ptr.vmem [resolvable:$true] %s5221
          %5224 = dma.vmem_to_hbm [thread:$0]  %s5222, 32, %s5219, %s5207
        $region100: #{tpu_custom_call.1} parent=71 // pred_fallthru
          _
      $region72: #{tpu_custom_call.1} parent=5 // pred_fallthru
        _
      %p5225 = scmp.le.s32.totalorder 2, %s30
      // Predicated region
      $region101: #{tpu_custom_call.1} parent=5 // pred_check
        %p5226 = pneg %p5225
      $region102: #{tpu_custom_call.1} parent=5 // pred_check_branch
        %5228 = sbr.rel (%p5226) target = $region104
      $region103: #{tpu_custom_call.1} parent=5 // pred_region
        %s5229 = ssub.s32 %s30, 2
        // Predicated region
        $region105: #{tpu_custom_call.1} parent=103 // pred_check
          %p5230 = pneg %p337
        $region106: #{tpu_custom_call.1} parent=103 // pred_check_branch
          %5232 = sbr.rel (%p5230) target = $region108
        $region107: #{tpu_custom_call.1} parent=103 // pred_region
          %s5233 = sand.u32 %s322, 1
          %s5234 = scalar_lea.sflag [#allocation5], %s5233
          %s5235 = sand.u32 %s322, 1
          %s5236 = smul.addr %s5235, 2
          %s5237 = scalar_lea.vmem [#allocation14], %s5236
          %5238 = dma.done %s5234, 32
        $region108: #{tpu_custom_call.1} parent=103 // pred_fallthru
          _
      $region104: #{tpu_custom_call.1} parent=5 // pred_fallthru
        _
    $region6: #{tpu_custom_call.1} parent=1 // loop_footer
      %s34 = sadd.s32 1, %s30
    $region7: #{tpu_custom_call.1} parent=1 // loop_footer_branch
      %29 = sbr.rel target = $region3
    $region8: #{tpu_custom_call.1} parent=1 // loop_exit
      _
    %5239 = vsyncpa [#allocation4], 1
    %s5240 = scalar_lea.sflag [#allocation4], 1
    %5241 = vsyncpa %s5240, 1
    %5242 = vsyncpa [#allocation7], 1
    %5243 = vsyncpa [#allocation10], 1
    %5244 = vsyncpa [#allocation13], 1
    %5245 = vsyncpa [#allocation5], 1
    %s5246 = scalar_lea.sflag [#allocation5], 1
    %5247 = vsyncpa %s5246, 1

</llo_original>
